<compile_context>
chip_gen: v7x
topology: tpu7x:2x2x1
jax: 0.10.0
libtpu: 0.0.40
codegen_flags: <defaults>
</compile_context>

<pallas_src>
import jax
import jax.numpy as jnp
from jax.experimental import pallas as pl
from jax.experimental.pallas import tpu as pltpu

m = 64 ** 2        # input feature dim (matches the PyTorch module)
HIDDEN = 256       # width of fc1..fc4


def _round_up(x, mult):
    return (x + mult - 1) // mult * mult


# ----------------------------- Pallas kernel ------------------------------ #
def _trunk_kernel(x_ref,
                  w1_ref, b1_ref, w2_ref, b2_ref,
                  w3_ref, b3_ref, w4_ref, b4_ref,
                  o_ref):
    """Fully fused 4-layer MLP (ReLU after every layer, incl. the last).

    Weights arrive in their storage dtype (bf16 by default); every dot
    accumulates in f32 on the MXU, and the bias-add / ReLU run in f32 on the
    VPU, so the only precision loss is bf16 operand rounding.
    """
    # TODO(synk): if a future use case makes layer 1 compute-dominant, split
    # its K=4096 onto a trailing 'arbitrary' grid axis with an f32 VMEM
    # accumulator to overlap the W1 chunk DMA with MXU work.
    h = x_ref[...]
    for w_ref, b_ref in ((w1_ref, b1_ref), (w2_ref, b2_ref),
                         (w3_ref, b3_ref), (w4_ref, b4_ref)):
        z = jnp.dot(h.astype(w_ref.dtype), w_ref[...],
                    preferred_element_type=jnp.float32)
        h = jnp.maximum(z + b_ref[...], 0.0)          # f32 bias + ReLU
    o_ref[...] = h.astype(o_ref.dtype)


# ------------------------------- wrapper ----------------------------------- #
def _choose_tiling(B):
    """Return (tm, padded_B).

    B <= 256: one grid step with block == full array (legal even when B is not
    a multiple of 8), so no host-side pad / slice at all.
    Larger B: fixed tiles, padded up, guaranteeing >=2 'parallel' grid steps
    (both v7x TensorCores) while tiles stay well inside every chip's VMEM.
    """
    if B <= 256:
        return B, B
    tm = 256 if B <= 1024 else 512
    return tm, _round_up(B, tm)


def _resident_spec(shape):
    """Grid-invariant (constant index_map) block: fetched exactly once, so a
    single VMEM buffer suffices - Buffered(1) halves resident-weight VMEM."""
    return pl.BlockSpec(shape, lambda i: (0, 0),
                        pipeline_mode=pl.Buffered(buffer_count=1))


def trunk_forward(x, prep):
    """x: (B, m).  prep: tuple from prepare_params() (bf16 W^T, f32 (1,H) b)."""
    w1, b1, w2, b2, w3, b3, w4, b4 = prep
    B = x.shape[0]
    K = w1.shape[0]                 # = m
    H = w1.shape[1]                 # = HIDDEN
    cdt = w1.dtype                  # MXU operand dtype (bf16 by default)

    tm, Mp = _choose_tiling(B)
    x_p = x.astype(cdt)
    if Mp != B:                     # padded rows produce relu(b) junk, sliced off below
        x_p = jnp.pad(x_p, ((0, Mp - B), (0, 0)))
    grid = (Mp // tm,)

    # VMEM budget derived from the actual buffers (+4 MiB headroom).
    w_bytes = ((K * H + 3 * H * H) * w1.dtype.itemsize
               + 4 * H * b1.dtype.itemsize)            # single-buffered residents
    buf_bytes = (w_bytes
                 + 2 * tm * K * x_p.dtype.itemsize     # double-buffered x tiles
                 + 2 * tm * H * 4)                     # double-buffered f32 out tiles
    vmem_limit = min(_round_up(buf_bytes + (4 << 20), 1 << 20), 64 << 20)

    cost = pl.CostEstimate(
        flops=2 * Mp * (K * H + 3 * H * H),
        transcendentals=0,
        bytes_accessed=Mp * K * x_p.dtype.itemsize + w_bytes + Mp * H * 4,
    )

    out = pl.pallas_call(
        _trunk_kernel,
        out_shape=jax.ShapeDtypeStruct((Mp, H), jnp.float32),
        grid_spec=pltpu.PrefetchScalarGridSpec(
            num_scalar_prefetch=0,
            grid=grid,
            in_specs=[
                pl.BlockSpec((tm, K), lambda i: (i, 0)),   # x tile (pipelined)
                _resident_spec((K, H)),                    # W1 (resident)
                _resident_spec((1, H)),                    # b1
                _resident_spec((H, H)),                    # W2
                _resident_spec((1, H)),                    # b2
                _resident_spec((H, H)),                    # W3
                _resident_spec((1, H)),                    # b3
                _resident_spec((H, H)),                    # W4
                _resident_spec((1, H)),                    # b4
            ],
            out_specs=pl.BlockSpec((tm, H), lambda i: (i, 0)),
        ),
        compiler_params=pltpu.CompilerParams(
            dimension_semantics=("parallel",),
            vmem_limit_bytes=vmem_limit),
        cost_estimate=cost,
    )(x_p, w1, b1, w2, b2, w3, b3, w4, b4)
    return out if Mp == B else out[:B]


# ----------------------------- params / prep ------------------------------- #
def init_params(key):
    """PyTorch nn.Linear default init: U(-1/sqrt(fan_in), 1/sqrt(fan_in))."""
    params = {}
    shapes = [("fc1", (HIDDEN, m)), ("fc2", (HIDDEN, HIDDEN)),
              ("fc3", (HIDDEN, HIDDEN)), ("fc4", (HIDDEN, HIDDEN))]
    keys = jax.random.split(key, 2 * len(shapes))
    for idx, (name, shp) in enumerate(shapes):
        bound = 1.0 / jnp.sqrt(shp[1])
        W = jax.random.uniform(keys[2 * idx], shp, jnp.float32, -bound, bound)
        b = jax.random.uniform(keys[2 * idx + 1], (shp[0],), jnp.float32,
                               -bound, bound)
        params[name] = (W, b)
    return params


def prepare_params(params, compute_dtype=jnp.bfloat16):
    """One-time prep: (out,in)->(in,out) weight transpose, weights cast to the
    MXU operand dtype (bf16 halves the HBM weight stream and runs the MXU at
    full rate); biases stay f32 as (1, H) rows so bias-add/ReLU are f32."""
    prep = []
    for name in ("fc1", "fc2", "fc3", "fc4"):
        W, b = params[name]
        prep.append(jnp.asarray(W.T, compute_dtype))
        prep.append(b.reshape(1, -1).astype(jnp.float32))
    return tuple(prep)


# ------------------------------ references --------------------------------- #
def reference_forward(x, params):
    """Pure-JAX f32 reference matching the PyTorch forward."""
    h = x
    for name in ("fc1", "fc2", "fc3", "fc4"):
        W, b = params[name]
        h = jax.nn.relu(h @ W.T + b)
    return h


def reference_forward_prepared(x, prep):
    """Pure-JAX reference using the SAME operand precision as the kernel
    (bf16 operands, f32 accumulation / bias / ReLU)."""
    h = x
    for i in range(4):
        w, b = prep[2 * i], prep[2 * i + 1]
        z = jnp.dot(h.astype(w.dtype), w, preferred_element_type=jnp.float32)
        h = jnp.maximum(z + b, 0.0)
    return h


if __name__ == "__main__":
    key = jax.random.PRNGKey(0)
    k_x, k_p = jax.random.split(key)
    batch = 2
    x = jax.random.normal(k_x, (batch, m), dtype=jnp.float32)    # (2, 4096)
    params = init_params(k_p)
    prep = prepare_params(params)                                # bf16 weights

    fwd = jax.jit(trunk_forward)
    out = jax.block_until_ready(fwd(x, prep))
    assert out.shape == (batch, HIDDEN)

    # Tight check vs. a reference with identical operand precision.
    ref_matched = reference_forward_prepared(x, prep)
    assert jnp.allclose(out, ref_matched, rtol=1e-3, atol=1e-3), (
        "mismatch vs. matched-precision (bf16-operand) reference")

    # Check vs. the full-f32 PyTorch-semantics reference at bf16 tolerance.
    ref_f32 = reference_forward(x, params)
    assert jnp.allclose(out, ref_f32, rtol=2e-2, atol=2e-2), (
        "mismatch vs. f32 reference beyond bf16 operand tolerance")

    print("KERNEL_OK")
</pallas_src>

<mosaic_0001>
module attributes {stable_mosaic.version = 11 : i64} {
  func.func @_trunk_kernel(%arg0: i32, %arg1: memref<2x4096xbf16, #tpu.memory_space<vmem>>, %arg2: memref<4096x256xbf16, #tpu.memory_space<vmem>>, %arg3: memref<1x256xf32, #tpu.memory_space<vmem>>, %arg4: memref<256x256xbf16, #tpu.memory_space<vmem>>, %arg5: memref<1x256xf32, #tpu.memory_space<vmem>>, %arg6: memref<256x256xbf16, #tpu.memory_space<vmem>>, %arg7: memref<1x256xf32, #tpu.memory_space<vmem>>, %arg8: memref<256x256xbf16, #tpu.memory_space<vmem>>, %arg9: memref<1x256xf32, #tpu.memory_space<vmem>>, %arg10: memref<2x256xf32, #tpu.memory_space<vmem>>) attributes {dimension_semantics = [#tpu.dimension_semantics<parallel>], iteration_bounds = array<i64: 1>, scalar_prefetch = 0 : i64, scratch_operands = 0 : i64, tpu.core_type = #tpu.core_type<tc>, window_params = [{transform_indices = @transform_0, window_bounds = array<i64: 2, 4096>}, {pipeline_mode = #tpu.pipeline_mode<synchronous>, transform_indices = @transform_1, window_bounds = array<i64: 4096, 256>}, {pipeline_mode = #tpu.pipeline_mode<synchronous>, transform_indices = @transform_2, window_bounds = array<i64: 1, 256>}, {pipeline_mode = #tpu.pipeline_mode<synchronous>, transform_indices = @transform_3, window_bounds = array<i64: 256, 256>}, {pipeline_mode = #tpu.pipeline_mode<synchronous>, transform_indices = @transform_4, window_bounds = array<i64: 1, 256>}, {pipeline_mode = #tpu.pipeline_mode<synchronous>, transform_indices = @transform_5, window_bounds = array<i64: 256, 256>}, {pipeline_mode = #tpu.pipeline_mode<synchronous>, transform_indices = @transform_6, window_bounds = array<i64: 1, 256>}, {pipeline_mode = #tpu.pipeline_mode<synchronous>, transform_indices = @transform_7, window_bounds = array<i64: 256, 256>}, {pipeline_mode = #tpu.pipeline_mode<synchronous>, transform_indices = @transform_8, window_bounds = array<i64: 1, 256>}, {transform_indices = @transform_9, window_bounds = array<i64: 2, 256>}]} {
    %c0 = arith.constant 0 : index
    %c0_0 = arith.constant 0 : index
    %0 = vector.load %arg1[%c0, %c0_0] : memref<2x4096xbf16, #tpu.memory_space<vmem>>, vector<2x4096xbf16>
    %c0_1 = arith.constant 0 : index
    %c0_2 = arith.constant 0 : index
    %1 = vector.load %arg2[%c0_1, %c0_2] : memref<4096x256xbf16, #tpu.memory_space<vmem>>, vector<4096x256xbf16>
    %cst = arith.constant dense<0.000000e+00> : vector<2x256xf32>
    %2 = tpu.matmul %0, %1, %cst {dimension_numbers = #tpu.dot_dimension_numbers<[1], [0], [0], [1], [0, 0, 1, 1], [], []>} : vector<2x4096xbf16>, vector<4096x256xbf16>, vector<2x256xf32> -> vector<2x256xf32>
    %c0_3 = arith.constant 0 : index
    %c0_4 = arith.constant 0 : index
    %3 = vector.load %arg3[%c0_3, %c0_4] : memref<1x256xf32, #tpu.memory_space<vmem>>, vector<1x256xf32>
    %4 = vector.broadcast %3 : vector<1x256xf32> to vector<2x256xf32>
    %5 = arith.addf %2, %4 : vector<2x256xf32>
    %cst_5 = arith.constant 0.000000e+00 : f32
    %6 = vector.broadcast %cst_5 : f32 to vector<2x256xf32>
    %7 = arith.maximumf %5, %6 : vector<2x256xf32>
    %8 = arith.truncf %7 : vector<2x256xf32> to vector<2x256xbf16>
    %c0_6 = arith.constant 0 : index
    %c0_7 = arith.constant 0 : index
    %9 = vector.load %arg4[%c0_6, %c0_7] : memref<256x256xbf16, #tpu.memory_space<vmem>>, vector<256x256xbf16>
    %cst_8 = arith.constant dense<0.000000e+00> : vector<2x256xf32>
    %10 = tpu.matmul %8, %9, %cst_8 {dimension_numbers = #tpu.dot_dimension_numbers<[1], [0], [0], [1], [0, 0, 1, 1], [], []>} : vector<2x256xbf16>, vector<256x256xbf16>, vector<2x256xf32> -> vector<2x256xf32>
    %c0_9 = arith.constant 0 : index
    %c0_10 = arith.constant 0 : index
    %11 = vector.load %arg5[%c0_9, %c0_10] : memref<1x256xf32, #tpu.memory_space<vmem>>, vector<1x256xf32>
    %12 = vector.broadcast %11 : vector<1x256xf32> to vector<2x256xf32>
    %13 = arith.addf %10, %12 : vector<2x256xf32>
    %cst_11 = arith.constant 0.000000e+00 : f32
    %14 = vector.broadcast %cst_11 : f32 to vector<2x256xf32>
    %15 = arith.maximumf %13, %14 : vector<2x256xf32>
    %16 = arith.truncf %15 : vector<2x256xf32> to vector<2x256xbf16>
    %c0_12 = arith.constant 0 : index
    %c0_13 = arith.constant 0 : index
    %17 = vector.load %arg6[%c0_12, %c0_13] : memref<256x256xbf16, #tpu.memory_space<vmem>>, vector<256x256xbf16>
    %cst_14 = arith.constant dense<0.000000e+00> : vector<2x256xf32>
    %18 = tpu.matmul %16, %17, %cst_14 {dimension_numbers = #tpu.dot_dimension_numbers<[1], [0], [0], [1], [0, 0, 1, 1], [], []>} : vector<2x256xbf16>, vector<256x256xbf16>, vector<2x256xf32> -> vector<2x256xf32>
    %c0_15 = arith.constant 0 : index
    %c0_16 = arith.constant 0 : index
    %19 = vector.load %arg7[%c0_15, %c0_16] : memref<1x256xf32, #tpu.memory_space<vmem>>, vector<1x256xf32>
    %20 = vector.broadcast %19 : vector<1x256xf32> to vector<2x256xf32>
    %21 = arith.addf %18, %20 : vector<2x256xf32>
    %cst_17 = arith.constant 0.000000e+00 : f32
    %22 = vector.broadcast %cst_17 : f32 to vector<2x256xf32>
    %23 = arith.maximumf %21, %22 : vector<2x256xf32>
    %24 = arith.truncf %23 : vector<2x256xf32> to vector<2x256xbf16>
    %c0_18 = arith.constant 0 : index
    %c0_19 = arith.constant 0 : index
    %25 = vector.load %arg8[%c0_18, %c0_19] : memref<256x256xbf16, #tpu.memory_space<vmem>>, vector<256x256xbf16>
    %cst_20 = arith.constant dense<0.000000e+00> : vector<2x256xf32>
    %26 = tpu.matmul %24, %25, %cst_20 {dimension_numbers = #tpu.dot_dimension_numbers<[1], [0], [0], [1], [0, 0, 1, 1], [], []>} : vector<2x256xbf16>, vector<256x256xbf16>, vector<2x256xf32> -> vector<2x256xf32>
    %c0_21 = arith.constant 0 : index
    %c0_22 = arith.constant 0 : index
    %27 = vector.load %arg9[%c0_21, %c0_22] : memref<1x256xf32, #tpu.memory_space<vmem>>, vector<1x256xf32>
    %28 = vector.broadcast %27 : vector<1x256xf32> to vector<2x256xf32>
    %29 = arith.addf %26, %28 : vector<2x256xf32>
    %cst_23 = arith.constant 0.000000e+00 : f32
    %30 = vector.broadcast %cst_23 : f32 to vector<2x256xf32>
    %31 = arith.maximumf %29, %30 : vector<2x256xf32>
    %c0_24 = arith.constant 0 : index
    %c0_25 = arith.constant 0 : index
    %32 = vector.load %arg10[%c0_24, %c0_25] : memref<2x256xf32, #tpu.memory_space<vmem>>, vector<2x256xf32>
    tpu.vector_store %arg10[%c0_24, %c0_25], %31 {strides = array<i32>} : memref<2x256xf32, #tpu.memory_space<vmem>>, vector<2x256xf32>,
    return
  }
  func.func @transform_0(%arg0: i32) -> (i32, i32) {
    %c0_i32 = arith.constant 0 : i32
    %c0_i32_0 = arith.constant 0 : i32
    return %arg0, %c0_i32 : i32, i32
  }
  func.func @transform_1(%arg0: i32) -> (i32, i32) {
    %c0_i32 = arith.constant 0 : i32
    %c0_i32_0 = arith.constant 0 : i32
    %c0_i32_1 = arith.constant 0 : i32
    return %c0_i32, %c0_i32_0 : i32, i32
  }
  func.func @transform_2(%arg0: i32) -> (i32, i32) {
    %c0_i32 = arith.constant 0 : i32
    %c0_i32_0 = arith.constant 0 : i32
    %c0_i32_1 = arith.constant 0 : i32
    return %c0_i32, %c0_i32_0 : i32, i32
  }
  func.func @transform_3(%arg0: i32) -> (i32, i32) {
    %c0_i32 = arith.constant 0 : i32
    %c0_i32_0 = arith.constant 0 : i32
    %c0_i32_1 = arith.constant 0 : i32
    return %c0_i32, %c0_i32_0 : i32, i32
  }
  func.func @transform_4(%arg0: i32) -> (i32, i32) {
    %c0_i32 = arith.constant 0 : i32
    %c0_i32_0 = arith.constant 0 : i32
    %c0_i32_1 = arith.constant 0 : i32
    return %c0_i32, %c0_i32_0 : i32, i32
  }
  func.func @transform_5(%arg0: i32) -> (i32, i32) {
    %c0_i32 = arith.constant 0 : i32
    %c0_i32_0 = arith.constant 0 : i32
    %c0_i32_1 = arith.constant 0 : i32
    return %c0_i32, %c0_i32_0 : i32, i32
  }
  func.func @transform_6(%arg0: i32) -> (i32, i32) {
    %c0_i32 = arith.constant 0 : i32
    %c0_i32_0 = arith.constant 0 : i32
    %c0_i32_1 = arith.constant 0 : i32
    return %c0_i32, %c0_i32_0 : i32, i32
  }
  func.func @transform_7(%arg0: i32) -> (i32, i32) {
    %c0_i32 = arith.constant 0 : i32
    %c0_i32_0 = arith.constant 0 : i32
    %c0_i32_1 = arith.constant 0 : i32
    return %c0_i32, %c0_i32_0 : i32, i32
  }
  func.func @transform_8(%arg0: i32) -> (i32, i32) {
    %c0_i32 = arith.constant 0 : i32
    %c0_i32_0 = arith.constant 0 : i32
    %c0_i32_1 = arith.constant 0 : i32
    return %c0_i32, %c0_i32_0 : i32, i32
  }
  func.func @transform_9(%arg0: i32) -> (i32, i32) {
    %c0_i32 = arith.constant 0 : i32
    %c0_i32_0 = arith.constant 0 : i32
    return %arg0, %c0_i32 : i32, i32
  }
}

</mosaic_0001>

<llo_original>
// kernel: trunk_forward.1
$region0: #{trunk_forward.1}
  #allocation0 [shape = 'u32[]', space=smem, size = 0x4, offset = 0x4, fixed_abs, tag = 'smem constant byte address 0x4 - core index']
  #allocation1 [shape = 'u32[144,128]{1,0:T(1,128)}', space=vmem, size = 0x12000, scoped, tag = 'internal scratch']
  %s0 = inlined_call_operand.vmem [shape: bf16[2,4096], index: 0, kind: input, shape index: {}]
  %s1 = inlined_call_operand.hbm [shape: bf16[4096,256], index: 1, kind: input, shape index: {}]
  %s2 = inlined_call_operand.hbm [shape: f32[1,256], index: 2, kind: input, shape index: {}]
  %s3 = inlined_call_operand.hbm [shape: bf16[256,256], index: 3, kind: input, shape index: {}]
  %s4 = inlined_call_operand.hbm [shape: f32[1,256], index: 4, kind: input, shape index: {}]
  %s5 = inlined_call_operand.hbm [shape: bf16[256,256], index: 5, kind: input, shape index: {}]
  %s6 = inlined_call_operand.hbm [shape: f32[1,256], index: 6, kind: input, shape index: {}]
  %s7 = inlined_call_operand.hbm [shape: bf16[256,256], index: 7, kind: input, shape index: {}]
  %s8 = inlined_call_operand.hbm [shape: f32[1,256], index: 8, kind: input, shape index: {}]
  %s9 = inlined_call_operand.hbm [shape: f32[2,256], index: 9, kind: output, shape index: {}]
  %s10 = sld [smem:[#allocation0]]
  $region78: #{trunk_forward.1} parent=0
    _
  %s12 = ssub.s32 1, %s10
  %s13 = scalar_select 0, %s12, %s10
  $region1: #{trunk_forward.1} parent=0
    #allocation2 [shape = 'u8[2097152]{0}', space=vmem, size = 0x200000, scoped, tag = 'input window, operand 1, single buffered']
    #allocation3 [shape = 's32[1]{0}', space=sflag, size = 0x4, scoped, tag = 'scoped memory for trunk_forward.1']
    #allocation4 [shape = 's32[1]{0}', space=sflag, size = 0x4, scoped, tag = 'scoped memory for trunk_forward.1']
    #allocation5 [shape = 'u8[1024]{0}', space=vmem, size = 0x400, scoped, tag = 'input window, operand 2, single buffered']
    #allocation6 [shape = 's32[1]{0}', space=sflag, size = 0x4, scoped, tag = 'scoped memory for trunk_forward.1']
    #allocation7 [shape = 'u8[131072]{0}', space=vmem, size = 0x20000, scoped, tag = 'input window, operand 3, single buffered']
    #allocation8 [shape = 'u8[1024]{0}', space=vmem, size = 0x400, scoped, tag = 'input window, operand 4, single buffered']
    #allocation9 [shape = 's32[1]{0}', space=sflag, size = 0x4, scoped, tag = 'scoped memory for trunk_forward.1']
    #allocation10 [shape = 'u8[131072]{0}', space=vmem, size = 0x20000, scoped, tag = 'input window, operand 5, single buffered']
    #allocation11 [shape = 'u8[1024]{0}', space=vmem, size = 0x400, scoped, tag = 'input window, operand 6, single buffered']
    #allocation12 [shape = 's32[1]{0}', space=sflag, size = 0x4, scoped, tag = 'scoped memory for trunk_forward.1']
    #allocation13 [shape = 'u8[131072]{0}', space=vmem, size = 0x20000, scoped, tag = 'input window, operand 7, single buffered']
    #allocation14 [shape = 'u8[1024]{0}', space=vmem, size = 0x400, scoped, tag = 'input window, operand 8, single buffered']
    #allocation15 [shape = 's32[1]{0}', space=sflag, size = 0x4, scoped, tag = 'scoped memory for trunk_forward.1']
    #allocation16 [shape = 'u8[2048]{0}', space=vmem, size = 0x800, scoped, tag = 'output window, operand 0, single buffered']
    %14 = vsyncpa [#allocation3], 0
    %15 = vsyncpa [#allocation6], 0
    %16 = vsyncpa [#allocation9], 0
    %17 = vsyncpa [#allocation12], 0
    %18 = vsyncpa [#allocation15], 0
    %19 = vsyncpa [#allocation4], 0
    // Predicated region
    $region2: #{trunk_forward.1} parent=1 // pred_check
      _
    $region3: #{trunk_forward.1} parent=1 // pred_check_branch
      %21 = sbr.rel (0) target = $region5
    $region4: #{trunk_forward.1} parent=1 // pred_region
      _
    $region5: #{trunk_forward.1} parent=1 // pred_fallthru
      _
    // Predicated region
    $region6: #{trunk_forward.1} parent=1 // pred_check
      _
    $region7: #{trunk_forward.1} parent=1 // pred_check_branch
      %23 = sbr.rel (0) target = $region9
    $region8: #{trunk_forward.1} parent=1 // pred_region
      %s25 = ssub.s32 65536, 65536
      %26 = vsyncadd [#allocation3], %s25
      %s27 = sshll.u32 [#allocation2], 4
      %s28 = int_to_ptr.vmem [resolvable:$true] %s27
      %33 = dma.hbm_to_vmem [thread:$0]  %s1, 65536, %s28, [#allocation3], 128, 128, 8
    $region9: #{trunk_forward.1} parent=1 // pred_fallthru
      _
    // Predicated region
    $region10: #{trunk_forward.1} parent=1 // pred_check
      _
    $region11: #{trunk_forward.1} parent=1 // pred_check_branch
      %35 = sbr.rel (0) target = $region13
    $region12: #{trunk_forward.1} parent=1 // pred_region
      %s37 = ssub.s32 32, 32
      %38 = vsyncadd [#allocation6], %s37
      %s40 = sshll.u32 [#allocation5], 4
      %s41 = int_to_ptr.vmem [resolvable:$true] %s40
      %43 = dma.hbm_to_vmem [thread:$0]  %s2, 32, %s41, [#allocation6]
    $region13: #{trunk_forward.1} parent=1 // pred_fallthru
      _
    // Predicated region
    $region14: #{trunk_forward.1} parent=1 // pred_check
      _
    $region15: #{trunk_forward.1} parent=1 // pred_check_branch
      %45 = sbr.rel (0) target = $region17
    $region16: #{trunk_forward.1} parent=1 // pred_region
      %s47 = ssub.s32 4096, 4096
      %48 = vsyncadd [#allocation6], %s47
      %s49 = sshll.u32 [#allocation7], 4
      %s50 = int_to_ptr.vmem [resolvable:$true] %s49
      %55 = dma.hbm_to_vmem [thread:$0]  %s3, 4096, %s50, [#allocation6], 128, 128, 8
    $region17: #{trunk_forward.1} parent=1 // pred_fallthru
      _
    // Predicated region
    $region18: #{trunk_forward.1} parent=1 // pred_check
      _
    $region19: #{trunk_forward.1} parent=1 // pred_check_branch
      %57 = sbr.rel (0) target = $region21
    $region20: #{trunk_forward.1} parent=1 // pred_region
      %s59 = ssub.s32 32, 32
      %60 = vsyncadd [#allocation9], %s59
      %s62 = sshll.u32 [#allocation8], 4
      %s63 = int_to_ptr.vmem [resolvable:$true] %s62
      %65 = dma.hbm_to_vmem [thread:$0]  %s4, 32, %s63, [#allocation9]
    $region21: #{trunk_forward.1} parent=1 // pred_fallthru
      _
    // Predicated region
    $region22: #{trunk_forward.1} parent=1 // pred_check
      _
    $region23: #{trunk_forward.1} parent=1 // pred_check_branch
      %67 = sbr.rel (0) target = $region25
    $region24: #{trunk_forward.1} parent=1 // pred_region
      %s69 = ssub.s32 4096, 4096
      %70 = vsyncadd [#allocation9], %s69
      %s71 = sshll.u32 [#allocation10], 4
      %s72 = int_to_ptr.vmem [resolvable:$true] %s71
      %77 = dma.hbm_to_vmem [thread:$0]  %s5, 4096, %s72, [#allocation9], 128, 128, 8
    $region25: #{trunk_forward.1} parent=1 // pred_fallthru
      _
    // Predicated region
    $region26: #{trunk_forward.1} parent=1 // pred_check
      _
    $region27: #{trunk_forward.1} parent=1 // pred_check_branch
      %79 = sbr.rel (0) target = $region29
    $region28: #{trunk_forward.1} parent=1 // pred_region
      %s81 = ssub.s32 32, 32
      %82 = vsyncadd [#allocation12], %s81
      %s84 = sshll.u32 [#allocation11], 4
      %s85 = int_to_ptr.vmem [resolvable:$true] %s84
      %87 = dma.hbm_to_vmem [thread:$0]  %s6, 32, %s85, [#allocation12]
    $region29: #{trunk_forward.1} parent=1 // pred_fallthru
      _
    // Predicated region
    $region30: #{trunk_forward.1} parent=1 // pred_check
      _
    $region31: #{trunk_forward.1} parent=1 // pred_check_branch
      %89 = sbr.rel (0) target = $region33
    $region32: #{trunk_forward.1} parent=1 // pred_region
      %s91 = ssub.s32 4096, 4096
      %92 = vsyncadd [#allocation12], %s91
      %s93 = sshll.u32 [#allocation13], 4
      %s94 = int_to_ptr.vmem [resolvable:$true] %s93
      %99 = dma.hbm_to_vmem [thread:$0]  %s7, 4096, %s94, [#allocation12], 128, 128, 8
    $region33: #{trunk_forward.1} parent=1 // pred_fallthru
      _
    // Predicated region
    $region34: #{trunk_forward.1} parent=1 // pred_check
      _
    $region35: #{trunk_forward.1} parent=1 // pred_check_branch
      %101 = sbr.rel (0) target = $region37
    $region36: #{trunk_forward.1} parent=1 // pred_region
      %s103 = ssub.s32 32, 32
      %104 = vsyncadd [#allocation15], %s103
      %s106 = sshll.u32 [#allocation14], 4
      %s107 = int_to_ptr.vmem [resolvable:$true] %s106
      %109 = dma.hbm_to_vmem [thread:$0]  %s8, 32, %s107, [#allocation15]
    $region37: #{trunk_forward.1} parent=1 // pred_fallthru
      _
    // Predicated region
    $region38: #{trunk_forward.1} parent=1 // pred_check
      _
    $region39: #{trunk_forward.1} parent=1 // pred_check_branch
      %111 = sbr.rel (0) target = $region41
    $region40: #{trunk_forward.1} parent=1 // pred_region
      %112 = dma.done [#allocation3], 65536
    $region41: #{trunk_forward.1} parent=1 // pred_fallthru
      _
    // Predicated region
    $region42: #{trunk_forward.1} parent=1 // pred_check
      _
    $region43: #{trunk_forward.1} parent=1 // pred_check_branch
      %114 = sbr.rel (0) target = $region45
    $region44: #{trunk_forward.1} parent=1 // pred_region
      %115 = dma.done [#allocation6], 32
    $region45: #{trunk_forward.1} parent=1 // pred_fallthru
      _
    // Predicated region
    $region46: #{trunk_forward.1} parent=1 // pred_check
      _
    $region47: #{trunk_forward.1} parent=1 // pred_check_branch
      %117 = sbr.rel (0) target = $region49
    $region48: #{trunk_forward.1} parent=1 // pred_region
      %118 = dma.done [#allocation6], 4096
    $region49: #{trunk_forward.1} parent=1 // pred_fallthru
      _
    // Predicated region
    $region50: #{trunk_forward.1} parent=1 // pred_check
      _
    $region51: #{trunk_forward.1} parent=1 // pred_check_branch
      %120 = sbr.rel (0) target = $region53
    $region52: #{trunk_forward.1} parent=1 // pred_region
      %121 = dma.done [#allocation9], 32
    $region53: #{trunk_forward.1} parent=1 // pred_fallthru
      _
    // Predicated region
    $region54: #{trunk_forward.1} parent=1 // pred_check
      _
    $region55: #{trunk_forward.1} parent=1 // pred_check_branch
      %123 = sbr.rel (0) target = $region57
    $region56: #{trunk_forward.1} parent=1 // pred_region
      %124 = dma.done [#allocation9], 4096
    $region57: #{trunk_forward.1} parent=1 // pred_fallthru
      _
    // Predicated region
    $region58: #{trunk_forward.1} parent=1 // pred_check
      _
    $region59: #{trunk_forward.1} parent=1 // pred_check_branch
      %126 = sbr.rel (0) target = $region61
    $region60: #{trunk_forward.1} parent=1 // pred_region
      %127 = dma.done [#allocation12], 32
    $region61: #{trunk_forward.1} parent=1 // pred_fallthru
      _
    // Predicated region
    $region62: #{trunk_forward.1} parent=1 // pred_check
      _
    $region63: #{trunk_forward.1} parent=1 // pred_check_branch
      %129 = sbr.rel (0) target = $region65
    $region64: #{trunk_forward.1} parent=1 // pred_region
      %130 = dma.done [#allocation12], 4096
    $region65: #{trunk_forward.1} parent=1 // pred_fallthru
      _
    // Predicated region
    $region66: #{trunk_forward.1} parent=1 // pred_check
      _
    $region67: #{trunk_forward.1} parent=1 // pred_check_branch
      %132 = sbr.rel (0) target = $region69
    $region68: #{trunk_forward.1} parent=1 // pred_region
      %133 = dma.done [#allocation15], 32
    $region69: #{trunk_forward.1} parent=1 // pred_fallthru
      _
    %v134 = vld [vmem:[%s0] sm:$0xff]
    %v135 = vld [vmem:[%s0 + $0x8] sm:$0xff]
    %v136 = vld [vmem:[%s0 + $0x10] sm:$0xff]
    %v137 = vld [vmem:[%s0 + $0x18] sm:$0xff]
    %v138 = vld [vmem:[#allocation2] sm:$0xff]
    %v139 = vld [vmem:[#allocation2 + $0x8] sm:$0xff]
    %v140 = vld [vmem:[#allocation2 + $0x10] sm:$0xff]
    %v141 = vld [vmem:[#allocation2 + $0x18] sm:$0xff]
    %v142 = vld [vmem:[#allocation2 + $0x20] sm:$0xff]
    %v143 = vld [vmem:[#allocation2 + $0x28] sm:$0xff]
    %v144 = vld [vmem:[#allocation2 + $0x30] sm:$0xff]
    %v145 = vld [vmem:[#allocation2 + $0x38] sm:$0xff]
    %v146 = vld [vmem:[#allocation2 + $0x40] sm:$0xff]
    %v147 = vld [vmem:[#allocation2 + $0x48] sm:$0xff]
    %v148 = vld [vmem:[#allocation2 + $0x50] sm:$0xff]
    %v149 = vld [vmem:[#allocation2 + $0x58] sm:$0xff]
    %v150 = vld [vmem:[#allocation2 + $0x60] sm:$0xff]
    %v151 = vld [vmem:[#allocation2 + $0x68] sm:$0xff]
    %v152 = vld [vmem:[#allocation2 + $0x70] sm:$0xff]
    %v153 = vld [vmem:[#allocation2 + $0x78] sm:$0xff]
    %v154 = vld [vmem:[#allocation2 + $0x80] sm:$0xff]
    %v155 = vld [vmem:[#allocation2 + $0x88] sm:$0xff]
    %v156 = vld [vmem:[#allocation2 + $0x90] sm:$0xff]
    %v157 = vld [vmem:[#allocation2 + $0x98] sm:$0xff]
    %v158 = vld [vmem:[#allocation2 + $0xa0] sm:$0xff]
    %v159 = vld [vmem:[#allocation2 + $0xa8] sm:$0xff]
    %v160 = vld [vmem:[#allocation2 + $0xb0] sm:$0xff]
    %v161 = vld [vmem:[#allocation2 + $0xb8] sm:$0xff]
    %v162 = vld [vmem:[#allocation2 + $0xc0] sm:$0xff]
    %v163 = vld [vmem:[#allocation2 + $0xc8] sm:$0xff]
    %v164 = vld [vmem:[#allocation2 + $0xd0] sm:$0xff]
    %v165 = vld [vmem:[#allocation2 + $0xd8] sm:$0xff]
    %v166 = vld [vmem:[#allocation2 + $0xe0] sm:$0xff]
    %v167 = vld [vmem:[#allocation2 + $0xe8] sm:$0xff]
    %v168 = vld [vmem:[#allocation2 + $0xf0] sm:$0xff]
    %v169 = vld [vmem:[#allocation2 + $0xf8] sm:$0xff]
    %v170 = vld [vmem:[#allocation2 + $0x100] sm:$0xff]
    %v171 = vld [vmem:[#allocation2 + $0x108] sm:$0xff]
    %v172 = vld [vmem:[#allocation2 + $0x110] sm:$0xff]
    %v173 = vld [vmem:[#allocation2 + $0x118] sm:$0xff]
    %v174 = vld [vmem:[#allocation2 + $0x120] sm:$0xff]
    %v175 = vld [vmem:[#allocation2 + $0x128] sm:$0xff]
    %v176 = vld [vmem:[#allocation2 + $0x130] sm:$0xff]
    %v177 = vld [vmem:[#allocation2 + $0x138] sm:$0xff]
    %v178 = vld [vmem:[#allocation2 + $0x140] sm:$0xff]
    %v179 = vld [vmem:[#allocation2 + $0x148] sm:$0xff]
    %v180 = vld [vmem:[#allocation2 + $0x150] sm:$0xff]
    %v181 = vld [vmem:[#allocation2 + $0x158] sm:$0xff]
    %v182 = vld [vmem:[#allocation2 + $0x160] sm:$0xff]
    %v183 = vld [vmem:[#allocation2 + $0x168] sm:$0xff]
    %v184 = vld [vmem:[#allocation2 + $0x170] sm:$0xff]
    %v185 = vld [vmem:[#allocation2 + $0x178] sm:$0xff]
    %v186 = vld [vmem:[#allocation2 + $0x180] sm:$0xff]
    %v187 = vld [vmem:[#allocation2 + $0x188] sm:$0xff]
    %v188 = vld [vmem:[#allocation2 + $0x190] sm:$0xff]
    %v189 = vld [vmem:[#allocation2 + $0x198] sm:$0xff]
    %v190 = vld [vmem:[#allocation2 + $0x1a0] sm:$0xff]
    %v191 = vld [vmem:[#allocation2 + $0x1a8] sm:$0xff]
    %v192 = vld [vmem:[#allocation2 + $0x1b0] sm:$0xff]
    %v193 = vld [vmem:[#allocation2 + $0x1b8] sm:$0xff]
    %v194 = vld [vmem:[#allocation2 + $0x1c0] sm:$0xff]
    %v195 = vld [vmem:[#allocation2 + $0x1c8] sm:$0xff]
    %v196 = vld [vmem:[#allocation2 + $0x1d0] sm:$0xff]
    %v197 = vld [vmem:[#allocation2 + $0x1d8] sm:$0xff]
    %v198 = vld [vmem:[#allocation2 + $0x1e0] sm:$0xff]
    %v199 = vld [vmem:[#allocation2 + $0x1e8] sm:$0xff]
    %v200 = vld [vmem:[#allocation2 + $0x1f0] sm:$0xff]
    %v201 = vld [vmem:[#allocation2 + $0x1f8] sm:$0xff]
    %v202 = vld [vmem:[#allocation2 + $0x200] sm:$0xff]
    %v203 = vld [vmem:[#allocation2 + $0x208] sm:$0xff]
    %v204 = vld [vmem:[#allocation2 + $0x210] sm:$0xff]
    %v205 = vld [vmem:[#allocation2 + $0x218] sm:$0xff]
    %v206 = vld [vmem:[#allocation2 + $0x220] sm:$0xff]
    %v207 = vld [vmem:[#allocation2 + $0x228] sm:$0xff]
    %v208 = vld [vmem:[#allocation2 + $0x230] sm:$0xff]
    %v209 = vld [vmem:[#allocation2 + $0x238] sm:$0xff]
    %v210 = vld [vmem:[#allocation2 + $0x240] sm:$0xff]
    %v211 = vld [vmem:[#allocation2 + $0x248] sm:$0xff]
    %v212 = vld [vmem:[#allocation2 + $0x250] sm:$0xff]
    %v213 = vld [vmem:[#allocation2 + $0x258] sm:$0xff]
    %v214 = vld [vmem:[#allocation2 + $0x260] sm:$0xff]
    %v215 = vld [vmem:[#allocation2 + $0x268] sm:$0xff]
    %v216 = vld [vmem:[#allocation2 + $0x270] sm:$0xff]
    %v217 = vld [vmem:[#allocation2 + $0x278] sm:$0xff]
    %v218 = vld [vmem:[#allocation2 + $0x280] sm:$0xff]
    %v219 = vld [vmem:[#allocation2 + $0x288] sm:$0xff]
    %v220 = vld [vmem:[#allocation2 + $0x290] sm:$0xff]
    %v221 = vld [vmem:[#allocation2 + $0x298] sm:$0xff]
    %v222 = vld [vmem:[#allocation2 + $0x2a0] sm:$0xff]
    %v223 = vld [vmem:[#allocation2 + $0x2a8] sm:$0xff]
    %v224 = vld [vmem:[#allocation2 + $0x2b0] sm:$0xff]
    %v225 = vld [vmem:[#allocation2 + $0x2b8] sm:$0xff]
    %v226 = vld [vmem:[#allocation2 + $0x2c0] sm:$0xff]
    %v227 = vld [vmem:[#allocation2 + $0x2c8] sm:$0xff]
    %v228 = vld [vmem:[#allocation2 + $0x2d0] sm:$0xff]
    %v229 = vld [vmem:[#allocation2 + $0x2d8] sm:$0xff]
    %v230 = vld [vmem:[#allocation2 + $0x2e0] sm:$0xff]
    %v231 = vld [vmem:[#allocation2 + $0x2e8] sm:$0xff]
    %v232 = vld [vmem:[#allocation2 + $0x2f0] sm:$0xff]
    %v233 = vld [vmem:[#allocation2 + $0x2f8] sm:$0xff]
    %v234 = vld [vmem:[#allocation2 + $0x300] sm:$0xff]
    %v235 = vld [vmem:[#allocation2 + $0x308] sm:$0xff]
    %v236 = vld [vmem:[#allocation2 + $0x310] sm:$0xff]
    %v237 = vld [vmem:[#allocation2 + $0x318] sm:$0xff]
    %v238 = vld [vmem:[#allocation2 + $0x320] sm:$0xff]
    %v239 = vld [vmem:[#allocation2 + $0x328] sm:$0xff]
    %v240 = vld [vmem:[#allocation2 + $0x330] sm:$0xff]
    %v241 = vld [vmem:[#allocation2 + $0x338] sm:$0xff]
    %v242 = vld [vmem:[#allocation2 + $0x340] sm:$0xff]
    %v243 = vld [vmem:[#allocation2 + $0x348] sm:$0xff]
    %v244 = vld [vmem:[#allocation2 + $0x350] sm:$0xff]
    %v245 = vld [vmem:[#allocation2 + $0x358] sm:$0xff]
    %v246 = vld [vmem:[#allocation2 + $0x360] sm:$0xff]
    %v247 = vld [vmem:[#allocation2 + $0x368] sm:$0xff]
    %v248 = vld [vmem:[#allocation2 + $0x370] sm:$0xff]
    %v249 = vld [vmem:[#allocation2 + $0x378] sm:$0xff]
    %v250 = vld [vmem:[#allocation2 + $0x380] sm:$0xff]
    %v251 = vld [vmem:[#allocation2 + $0x388] sm:$0xff]
    %v252 = vld [vmem:[#allocation2 + $0x390] sm:$0xff]
    %v253 = vld [vmem:[#allocation2 + $0x398] sm:$0xff]
    %v254 = vld [vmem:[#allocation2 + $0x3a0] sm:$0xff]
    %v255 = vld [vmem:[#allocation2 + $0x3a8] sm:$0xff]
    %v256 = vld [vmem:[#allocation2 + $0x3b0] sm:$0xff]
    %v257 = vld [vmem:[#allocation2 + $0x3b8] sm:$0xff]
    %v258 = vld [vmem:[#allocation2 + $0x3c0] sm:$0xff]
    %v259 = vld [vmem:[#allocation2 + $0x3c8] sm:$0xff]
    %v260 = vld [vmem:[#allocation2 + $0x3d0] sm:$0xff]
    %v261 = vld [vmem:[#allocation2 + $0x3d8] sm:$0xff]
    %v262 = vld [vmem:[#allocation2 + $0x3e0] sm:$0xff]
    %v263 = vld [vmem:[#allocation2 + $0x3e8] sm:$0xff]
    %v264 = vld [vmem:[#allocation2 + $0x3f0] sm:$0xff]
    %v265 = vld [vmem:[#allocation2 + $0x3f8] sm:$0xff]
    %v266 = vld [vmem:[#allocation2 + $0x400] sm:$0xff]
    %v267 = vld [vmem:[#allocation2 + $0x408] sm:$0xff]
    %v268 = vld [vmem:[#allocation2 + $0x410] sm:$0xff]
    %v269 = vld [vmem:[#allocation2 + $0x418] sm:$0xff]
    %v270 = vld [vmem:[#allocation2 + $0x420] sm:$0xff]
    %v271 = vld [vmem:[#allocation2 + $0x428] sm:$0xff]
    %v272 = vld [vmem:[#allocation2 + $0x430] sm:$0xff]
    %v273 = vld [vmem:[#allocation2 + $0x438] sm:$0xff]
    %v274 = vld [vmem:[#allocation2 + $0x440] sm:$0xff]
    %v275 = vld [vmem:[#allocation2 + $0x448] sm:$0xff]
    %v276 = vld [vmem:[#allocation2 + $0x450] sm:$0xff]
    %v277 = vld [vmem:[#allocation2 + $0x458] sm:$0xff]
    %v278 = vld [vmem:[#allocation2 + $0x460] sm:$0xff]
    %v279 = vld [vmem:[#allocation2 + $0x468] sm:$0xff]
    %v280 = vld [vmem:[#allocation2 + $0x470] sm:$0xff]
    %v281 = vld [vmem:[#allocation2 + $0x478] sm:$0xff]
    %v282 = vld [vmem:[#allocation2 + $0x480] sm:$0xff]
    %v283 = vld [vmem:[#allocation2 + $0x488] sm:$0xff]
    %v284 = vld [vmem:[#allocation2 + $0x490] sm:$0xff]
    %v285 = vld [vmem:[#allocation2 + $0x498] sm:$0xff]
    %v286 = vld [vmem:[#allocation2 + $0x4a0] sm:$0xff]
    %v287 = vld [vmem:[#allocation2 + $0x4a8] sm:$0xff]
    %v288 = vld [vmem:[#allocation2 + $0x4b0] sm:$0xff]
    %v289 = vld [vmem:[#allocation2 + $0x4b8] sm:$0xff]
    %v290 = vld [vmem:[#allocation2 + $0x4c0] sm:$0xff]
    %v291 = vld [vmem:[#allocation2 + $0x4c8] sm:$0xff]
    %v292 = vld [vmem:[#allocation2 + $0x4d0] sm:$0xff]
    %v293 = vld [vmem:[#allocation2 + $0x4d8] sm:$0xff]
    %v294 = vld [vmem:[#allocation2 + $0x4e0] sm:$0xff]
    %v295 = vld [vmem:[#allocation2 + $0x4e8] sm:$0xff]
    %v296 = vld [vmem:[#allocation2 + $0x4f0] sm:$0xff]
    %v297 = vld [vmem:[#allocation2 + $0x4f8] sm:$0xff]
    %v298 = vld [vmem:[#allocation2 + $0x500] sm:$0xff]
    %v299 = vld [vmem:[#allocation2 + $0x508] sm:$0xff]
    %v300 = vld [vmem:[#allocation2 + $0x510] sm:$0xff]
    %v301 = vld [vmem:[#allocation2 + $0x518] sm:$0xff]
    %v302 = vld [vmem:[#allocation2 + $0x520] sm:$0xff]
    %v303 = vld [vmem:[#allocation2 + $0x528] sm:$0xff]
    %v304 = vld [vmem:[#allocation2 + $0x530] sm:$0xff]
    %v305 = vld [vmem:[#allocation2 + $0x538] sm:$0xff]
    %v306 = vld [vmem:[#allocation2 + $0x540] sm:$0xff]
    %v307 = vld [vmem:[#allocation2 + $0x548] sm:$0xff]
    %v308 = vld [vmem:[#allocation2 + $0x550] sm:$0xff]
    %v309 = vld [vmem:[#allocation2 + $0x558] sm:$0xff]
    %v310 = vld [vmem:[#allocation2 + $0x560] sm:$0xff]
    %v311 = vld [vmem:[#allocation2 + $0x568] sm:$0xff]
    %v312 = vld [vmem:[#allocation2 + $0x570] sm:$0xff]
    %v313 = vld [vmem:[#allocation2 + $0x578] sm:$0xff]
    %v314 = vld [vmem:[#allocation2 + $0x580] sm:$0xff]
    %v315 = vld [vmem:[#allocation2 + $0x588] sm:$0xff]
    %v316 = vld [vmem:[#allocation2 + $0x590] sm:$0xff]
    %v317 = vld [vmem:[#allocation2 + $0x598] sm:$0xff]
    %v318 = vld [vmem:[#allocation2 + $0x5a0] sm:$0xff]
    %v319 = vld [vmem:[#allocation2 + $0x5a8] sm:$0xff]
    %v320 = vld [vmem:[#allocation2 + $0x5b0] sm:$0xff]
    %v321 = vld [vmem:[#allocation2 + $0x5b8] sm:$0xff]
    %v322 = vld [vmem:[#allocation2 + $0x5c0] sm:$0xff]
    %v323 = vld [vmem:[#allocation2 + $0x5c8] sm:$0xff]
    %v324 = vld [vmem:[#allocation2 + $0x5d0] sm:$0xff]
    %v325 = vld [vmem:[#allocation2 + $0x5d8] sm:$0xff]
    %v326 = vld [vmem:[#allocation2 + $0x5e0] sm:$0xff]
    %v327 = vld [vmem:[#allocation2 + $0x5e8] sm:$0xff]
    %v328 = vld [vmem:[#allocation2 + $0x5f0] sm:$0xff]
    %v329 = vld [vmem:[#allocation2 + $0x5f8] sm:$0xff]
    %v330 = vld [vmem:[#allocation2 + $0x600] sm:$0xff]
    %v331 = vld [vmem:[#allocation2 + $0x608] sm:$0xff]
    %v332 = vld [vmem:[#allocation2 + $0x610] sm:$0xff]
    %v333 = vld [vmem:[#allocation2 + $0x618] sm:$0xff]
    %v334 = vld [vmem:[#allocation2 + $0x620] sm:$0xff]
    %v335 = vld [vmem:[#allocation2 + $0x628] sm:$0xff]
    %v336 = vld [vmem:[#allocation2 + $0x630] sm:$0xff]
    %v337 = vld [vmem:[#allocation2 + $0x638] sm:$0xff]
    %v338 = vld [vmem:[#allocation2 + $0x640] sm:$0xff]
    %v339 = vld [vmem:[#allocation2 + $0x648] sm:$0xff]
    %v340 = vld [vmem:[#allocation2 + $0x650] sm:$0xff]
    %v341 = vld [vmem:[#allocation2 + $0x658] sm:$0xff]
    %v342 = vld [vmem:[#allocation2 + $0x660] sm:$0xff]
    %v343 = vld [vmem:[#allocation2 + $0x668] sm:$0xff]
    %v344 = vld [vmem:[#allocation2 + $0x670] sm:$0xff]
    %v345 = vld [vmem:[#allocation2 + $0x678] sm:$0xff]
    %v346 = vld [vmem:[#allocation2 + $0x680] sm:$0xff]
    %v347 = vld [vmem:[#allocation2 + $0x688] sm:$0xff]
    %v348 = vld [vmem:[#allocation2 + $0x690] sm:$0xff]
    %v349 = vld [vmem:[#allocation2 + $0x698] sm:$0xff]
    %v350 = vld [vmem:[#allocation2 + $0x6a0] sm:$0xff]
    %v351 = vld [vmem:[#allocation2 + $0x6a8] sm:$0xff]
    %v352 = vld [vmem:[#allocation2 + $0x6b0] sm:$0xff]
    %v353 = vld [vmem:[#allocation2 + $0x6b8] sm:$0xff]
    %v354 = vld [vmem:[#allocation2 + $0x6c0] sm:$0xff]
    %v355 = vld [vmem:[#allocation2 + $0x6c8] sm:$0xff]
    %v356 = vld [vmem:[#allocation2 + $0x6d0] sm:$0xff]
    %v357 = vld [vmem:[#allocation2 + $0x6d8] sm:$0xff]
    %v358 = vld [vmem:[#allocation2 + $0x6e0] sm:$0xff]
    %v359 = vld [vmem:[#allocation2 + $0x6e8] sm:$0xff]
    %v360 = vld [vmem:[#allocation2 + $0x6f0] sm:$0xff]
    %v361 = vld [vmem:[#allocation2 + $0x6f8] sm:$0xff]
    %v362 = vld [vmem:[#allocation2 + $0x700] sm:$0xff]
    %v363 = vld [vmem:[#allocation2 + $0x708] sm:$0xff]
    %v364 = vld [vmem:[#allocation2 + $0x710] sm:$0xff]
    %v365 = vld [vmem:[#allocation2 + $0x718] sm:$0xff]
    %v366 = vld [vmem:[#allocation2 + $0x720] sm:$0xff]
    %v367 = vld [vmem:[#allocation2 + $0x728] sm:$0xff]
    %v368 = vld [vmem:[#allocation2 + $0x730] sm:$0xff]
    %v369 = vld [vmem:[#allocation2 + $0x738] sm:$0xff]
    %v370 = vld [vmem:[#allocation2 + $0x740] sm:$0xff]
    %v371 = vld [vmem:[#allocation2 + $0x748] sm:$0xff]
    %v372 = vld [vmem:[#allocation2 + $0x750] sm:$0xff]
    %v373 = vld [vmem:[#allocation2 + $0x758] sm:$0xff]
    %v374 = vld [vmem:[#allocation2 + $0x760] sm:$0xff]
    %v375 = vld [vmem:[#allocation2 + $0x768] sm:$0xff]
    %v376 = vld [vmem:[#allocation2 + $0x770] sm:$0xff]
    %v377 = vld [vmem:[#allocation2 + $0x778] sm:$0xff]
    %v378 = vld [vmem:[#allocation2 + $0x780] sm:$0xff]
    %v379 = vld [vmem:[#allocation2 + $0x788] sm:$0xff]
    %v380 = vld [vmem:[#allocation2 + $0x790] sm:$0xff]
    %v381 = vld [vmem:[#allocation2 + $0x798] sm:$0xff]
    %v382 = vld [vmem:[#allocation2 + $0x7a0] sm:$0xff]
    %v383 = vld [vmem:[#allocation2 + $0x7a8] sm:$0xff]
    %v384 = vld [vmem:[#allocation2 + $0x7b0] sm:$0xff]
    %v385 = vld [vmem:[#allocation2 + $0x7b8] sm:$0xff]
    %v386 = vld [vmem:[#allocation2 + $0x7c0] sm:$0xff]
    %v387 = vld [vmem:[#allocation2 + $0x7c8] sm:$0xff]
    %v388 = vld [vmem:[#allocation2 + $0x7d0] sm:$0xff]
    %v389 = vld [vmem:[#allocation2 + $0x7d8] sm:$0xff]
    %v390 = vld [vmem:[#allocation2 + $0x7e0] sm:$0xff]
    %v391 = vld [vmem:[#allocation2 + $0x7e8] sm:$0xff]
    %v392 = vld [vmem:[#allocation2 + $0x7f0] sm:$0xff]
    %v393 = vld [vmem:[#allocation2 + $0x7f8] sm:$0xff]
    %v394 = vld [vmem:[#allocation2 + $0x800] sm:$0xff]
    %v395 = vld [vmem:[#allocation2 + $0x808] sm:$0xff]
    %v396 = vld [vmem:[#allocation2 + $0x810] sm:$0xff]
    %v397 = vld [vmem:[#allocation2 + $0x818] sm:$0xff]
    %v398 = vld [vmem:[#allocation2 + $0x820] sm:$0xff]
    %v399 = vld [vmem:[#allocation2 + $0x828] sm:$0xff]
    %v400 = vld [vmem:[#allocation2 + $0x830] sm:$0xff]
    %v401 = vld [vmem:[#allocation2 + $0x838] sm:$0xff]
    %v402 = vld [vmem:[#allocation2 + $0x840] sm:$0xff]
    %v403 = vld [vmem:[#allocation2 + $0x848] sm:$0xff]
    %v404 = vld [vmem:[#allocation2 + $0x850] sm:$0xff]
    %v405 = vld [vmem:[#allocation2 + $0x858] sm:$0xff]
    %v406 = vld [vmem:[#allocation2 + $0x860] sm:$0xff]
    %v407 = vld [vmem:[#allocation2 + $0x868] sm:$0xff]
    %v408 = vld [vmem:[#allocation2 + $0x870] sm:$0xff]
    %v409 = vld [vmem:[#allocation2 + $0x878] sm:$0xff]
    %v410 = vld [vmem:[#allocation2 + $0x880] sm:$0xff]
    %v411 = vld [vmem:[#allocation2 + $0x888] sm:$0xff]
    %v412 = vld [vmem:[#allocation2 + $0x890] sm:$0xff]
    %v413 = vld [vmem:[#allocation2 + $0x898] sm:$0xff]
    %v414 = vld [vmem:[#allocation2 + $0x8a0] sm:$0xff]
    %v415 = vld [vmem:[#allocation2 + $0x8a8] sm:$0xff]
    %v416 = vld [vmem:[#allocation2 + $0x8b0] sm:$0xff]
    %v417 = vld [vmem:[#allocation2 + $0x8b8] sm:$0xff]
    %v418 = vld [vmem:[#allocation2 + $0x8c0] sm:$0xff]
    %v419 = vld [vmem:[#allocation2 + $0x8c8] sm:$0xff]
    %v420 = vld [vmem:[#allocation2 + $0x8d0] sm:$0xff]
    %v421 = vld [vmem:[#allocation2 + $0x8d8] sm:$0xff]
    %v422 = vld [vmem:[#allocation2 + $0x8e0] sm:$0xff]
    %v423 = vld [vmem:[#allocation2 + $0x8e8] sm:$0xff]
    %v424 = vld [vmem:[#allocation2 + $0x8f0] sm:$0xff]
    %v425 = vld [vmem:[#allocation2 + $0x8f8] sm:$0xff]
    %v426 = vld [vmem:[#allocation2 + $0x900] sm:$0xff]
    %v427 = vld [vmem:[#allocation2 + $0x908] sm:$0xff]
    %v428 = vld [vmem:[#allocation2 + $0x910] sm:$0xff]
    %v429 = vld [vmem:[#allocation2 + $0x918] sm:$0xff]
    %v430 = vld [vmem:[#allocation2 + $0x920] sm:$0xff]
    %v431 = vld [vmem:[#allocation2 + $0x928] sm:$0xff]
    %v432 = vld [vmem:[#allocation2 + $0x930] sm:$0xff]
    %v433 = vld [vmem:[#allocation2 + $0x938] sm:$0xff]
    %v434 = vld [vmem:[#allocation2 + $0x940] sm:$0xff]
    %v435 = vld [vmem:[#allocation2 + $0x948] sm:$0xff]
    %v436 = vld [vmem:[#allocation2 + $0x950] sm:$0xff]
    %v437 = vld [vmem:[#allocation2 + $0x958] sm:$0xff]
    %v438 = vld [vmem:[#allocation2 + $0x960] sm:$0xff]
    %v439 = vld [vmem:[#allocation2 + $0x968] sm:$0xff]
    %v440 = vld [vmem:[#allocation2 + $0x970] sm:$0xff]
    %v441 = vld [vmem:[#allocation2 + $0x978] sm:$0xff]
    %v442 = vld [vmem:[#allocation2 + $0x980] sm:$0xff]
    %v443 = vld [vmem:[#allocation2 + $0x988] sm:$0xff]
    %v444 = vld [vmem:[#allocation2 + $0x990] sm:$0xff]
    %v445 = vld [vmem:[#allocation2 + $0x998] sm:$0xff]
    %v446 = vld [vmem:[#allocation2 + $0x9a0] sm:$0xff]
    %v447 = vld [vmem:[#allocation2 + $0x9a8] sm:$0xff]
    %v448 = vld [vmem:[#allocation2 + $0x9b0] sm:$0xff]
    %v449 = vld [vmem:[#allocation2 + $0x9b8] sm:$0xff]
    %v450 = vld [vmem:[#allocation2 + $0x9c0] sm:$0xff]
    %v451 = vld [vmem:[#allocation2 + $0x9c8] sm:$0xff]
    %v452 = vld [vmem:[#allocation2 + $0x9d0] sm:$0xff]
    %v453 = vld [vmem:[#allocation2 + $0x9d8] sm:$0xff]
    %v454 = vld [vmem:[#allocation2 + $0x9e0] sm:$0xff]
    %v455 = vld [vmem:[#allocation2 + $0x9e8] sm:$0xff]
    %v456 = vld [vmem:[#allocation2 + $0x9f0] sm:$0xff]
    %v457 = vld [vmem:[#allocation2 + $0x9f8] sm:$0xff]
    %v458 = vld [vmem:[#allocation2 + $0xa00] sm:$0xff]
    %v459 = vld [vmem:[#allocation2 + $0xa08] sm:$0xff]
    %v460 = vld [vmem:[#allocation2 + $0xa10] sm:$0xff]
    %v461 = vld [vmem:[#allocation2 + $0xa18] sm:$0xff]
    %v462 = vld [vmem:[#allocation2 + $0xa20] sm:$0xff]
    %v463 = vld [vmem:[#allocation2 + $0xa28] sm:$0xff]
    %v464 = vld [vmem:[#allocation2 + $0xa30] sm:$0xff]
    %v465 = vld [vmem:[#allocation2 + $0xa38] sm:$0xff]
    %v466 = vld [vmem:[#allocation2 + $0xa40] sm:$0xff]
    %v467 = vld [vmem:[#allocation2 + $0xa48] sm:$0xff]
    %v468 = vld [vmem:[#allocation2 + $0xa50] sm:$0xff]
    %v469 = vld [vmem:[#allocation2 + $0xa58] sm:$0xff]
    %v470 = vld [vmem:[#allocation2 + $0xa60] sm:$0xff]
    %v471 = vld [vmem:[#allocation2 + $0xa68] sm:$0xff]
    %v472 = vld [vmem:[#allocation2 + $0xa70] sm:$0xff]
    %v473 = vld [vmem:[#allocation2 + $0xa78] sm:$0xff]
    %v474 = vld [vmem:[#allocation2 + $0xa80] sm:$0xff]
    %v475 = vld [vmem:[#allocation2 + $0xa88] sm:$0xff]
    %v476 = vld [vmem:[#allocation2 + $0xa90] sm:$0xff]
    %v477 = vld [vmem:[#allocation2 + $0xa98] sm:$0xff]
    %v478 = vld [vmem:[#allocation2 + $0xaa0] sm:$0xff]
    %v479 = vld [vmem:[#allocation2 + $0xaa8] sm:$0xff]
    %v480 = vld [vmem:[#allocation2 + $0xab0] sm:$0xff]
    %v481 = vld [vmem:[#allocation2 + $0xab8] sm:$0xff]
    %v482 = vld [vmem:[#allocation2 + $0xac0] sm:$0xff]
    %v483 = vld [vmem:[#allocation2 + $0xac8] sm:$0xff]
    %v484 = vld [vmem:[#allocation2 + $0xad0] sm:$0xff]
    %v485 = vld [vmem:[#allocation2 + $0xad8] sm:$0xff]
    %v486 = vld [vmem:[#allocation2 + $0xae0] sm:$0xff]
    %v487 = vld [vmem:[#allocation2 + $0xae8] sm:$0xff]
    %v488 = vld [vmem:[#allocation2 + $0xaf0] sm:$0xff]
    %v489 = vld [vmem:[#allocation2 + $0xaf8] sm:$0xff]
    %v490 = vld [vmem:[#allocation2 + $0xb00] sm:$0xff]
    %v491 = vld [vmem:[#allocation2 + $0xb08] sm:$0xff]
    %v492 = vld [vmem:[#allocation2 + $0xb10] sm:$0xff]
    %v493 = vld [vmem:[#allocation2 + $0xb18] sm:$0xff]
    %v494 = vld [vmem:[#allocation2 + $0xb20] sm:$0xff]
    %v495 = vld [vmem:[#allocation2 + $0xb28] sm:$0xff]
    %v496 = vld [vmem:[#allocation2 + $0xb30] sm:$0xff]
    %v497 = vld [vmem:[#allocation2 + $0xb38] sm:$0xff]
    %v498 = vld [vmem:[#allocation2 + $0xb40] sm:$0xff]
    %v499 = vld [vmem:[#allocation2 + $0xb48] sm:$0xff]
    %v500 = vld [vmem:[#allocation2 + $0xb50] sm:$0xff]
    %v501 = vld [vmem:[#allocation2 + $0xb58] sm:$0xff]
    %v502 = vld [vmem:[#allocation2 + $0xb60] sm:$0xff]
    %v503 = vld [vmem:[#allocation2 + $0xb68] sm:$0xff]
    %v504 = vld [vmem:[#allocation2 + $0xb70] sm:$0xff]
    %v505 = vld [vmem:[#allocation2 + $0xb78] sm:$0xff]
    %v506 = vld [vmem:[#allocation2 + $0xb80] sm:$0xff]
    %v507 = vld [vmem:[#allocation2 + $0xb88] sm:$0xff]
    %v508 = vld [vmem:[#allocation2 + $0xb90] sm:$0xff]
    %v509 = vld [vmem:[#allocation2 + $0xb98] sm:$0xff]
    %v510 = vld [vmem:[#allocation2 + $0xba0] sm:$0xff]
    %v511 = vld [vmem:[#allocation2 + $0xba8] sm:$0xff]
    %v512 = vld [vmem:[#allocation2 + $0xbb0] sm:$0xff]
    %v513 = vld [vmem:[#allocation2 + $0xbb8] sm:$0xff]
    %v514 = vld [vmem:[#allocation2 + $0xbc0] sm:$0xff]
    %v515 = vld [vmem:[#allocation2 + $0xbc8] sm:$0xff]
    %v516 = vld [vmem:[#allocation2 + $0xbd0] sm:$0xff]
    %v517 = vld [vmem:[#allocation2 + $0xbd8] sm:$0xff]
    %v518 = vld [vmem:[#allocation2 + $0xbe0] sm:$0xff]
    %v519 = vld [vmem:[#allocation2 + $0xbe8] sm:$0xff]
    %v520 = vld [vmem:[#allocation2 + $0xbf0] sm:$0xff]
    %v521 = vld [vmem:[#allocation2 + $0xbf8] sm:$0xff]
    %v522 = vld [vmem:[#allocation2 + $0xc00] sm:$0xff]
    %v523 = vld [vmem:[#allocation2 + $0xc08] sm:$0xff]
    %v524 = vld [vmem:[#allocation2 + $0xc10] sm:$0xff]
    %v525 = vld [vmem:[#allocation2 + $0xc18] sm:$0xff]
    %v526 = vld [vmem:[#allocation2 + $0xc20] sm:$0xff]
    %v527 = vld [vmem:[#allocation2 + $0xc28] sm:$0xff]
    %v528 = vld [vmem:[#allocation2 + $0xc30] sm:$0xff]
    %v529 = vld [vmem:[#allocation2 + $0xc38] sm:$0xff]
    %v530 = vld [vmem:[#allocation2 + $0xc40] sm:$0xff]
    %v531 = vld [vmem:[#allocation2 + $0xc48] sm:$0xff]
    %v532 = vld [vmem:[#allocation2 + $0xc50] sm:$0xff]
    %v533 = vld [vmem:[#allocation2 + $0xc58] sm:$0xff]
    %v534 = vld [vmem:[#allocation2 + $0xc60] sm:$0xff]
    %v535 = vld [vmem:[#allocation2 + $0xc68] sm:$0xff]
    %v536 = vld [vmem:[#allocation2 + $0xc70] sm:$0xff]
    %v537 = vld [vmem:[#allocation2 + $0xc78] sm:$0xff]
    %v538 = vld [vmem:[#allocation2 + $0xc80] sm:$0xff]
    %v539 = vld [vmem:[#allocation2 + $0xc88] sm:$0xff]
    %v540 = vld [vmem:[#allocation2 + $0xc90] sm:$0xff]
    %v541 = vld [vmem:[#allocation2 + $0xc98] sm:$0xff]
    %v542 = vld [vmem:[#allocation2 + $0xca0] sm:$0xff]
    %v543 = vld [vmem:[#allocation2 + $0xca8] sm:$0xff]
    %v544 = vld [vmem:[#allocation2 + $0xcb0] sm:$0xff]
    %v545 = vld [vmem:[#allocation2 + $0xcb8] sm:$0xff]
    %v546 = vld [vmem:[#allocation2 + $0xcc0] sm:$0xff]
    %v547 = vld [vmem:[#allocation2 + $0xcc8] sm:$0xff]
    %v548 = vld [vmem:[#allocation2 + $0xcd0] sm:$0xff]
    %v549 = vld [vmem:[#allocation2 + $0xcd8] sm:$0xff]
    %v550 = vld [vmem:[#allocation2 + $0xce0] sm:$0xff]
    %v551 = vld [vmem:[#allocation2 + $0xce8] sm:$0xff]
    %v552 = vld [vmem:[#allocation2 + $0xcf0] sm:$0xff]
    %v553 = vld [vmem:[#allocation2 + $0xcf8] sm:$0xff]
    %v554 = vld [vmem:[#allocation2 + $0xd00] sm:$0xff]
    %v555 = vld [vmem:[#allocation2 + $0xd08] sm:$0xff]
    %v556 = vld [vmem:[#allocation2 + $0xd10] sm:$0xff]
    %v557 = vld [vmem:[#allocation2 + $0xd18] sm:$0xff]
    %v558 = vld [vmem:[#allocation2 + $0xd20] sm:$0xff]
    %v559 = vld [vmem:[#allocation2 + $0xd28] sm:$0xff]
    %v560 = vld [vmem:[#allocation2 + $0xd30] sm:$0xff]
    %v561 = vld [vmem:[#allocation2 + $0xd38] sm:$0xff]
    %v562 = vld [vmem:[#allocation2 + $0xd40] sm:$0xff]
    %v563 = vld [vmem:[#allocation2 + $0xd48] sm:$0xff]
    %v564 = vld [vmem:[#allocation2 + $0xd50] sm:$0xff]
    %v565 = vld [vmem:[#allocation2 + $0xd58] sm:$0xff]
    %v566 = vld [vmem:[#allocation2 + $0xd60] sm:$0xff]
    %v567 = vld [vmem:[#allocation2 + $0xd68] sm:$0xff]
    %v568 = vld [vmem:[#allocation2 + $0xd70] sm:$0xff]
    %v569 = vld [vmem:[#allocation2 + $0xd78] sm:$0xff]
    %v570 = vld [vmem:[#allocation2 + $0xd80] sm:$0xff]
    %v571 = vld [vmem:[#allocation2 + $0xd88] sm:$0xff]
    %v572 = vld [vmem:[#allocation2 + $0xd90] sm:$0xff]
    %v573 = vld [vmem:[#allocation2 + $0xd98] sm:$0xff]
    %v574 = vld [vmem:[#allocation2 + $0xda0] sm:$0xff]
    %v575 = vld [vmem:[#allocation2 + $0xda8] sm:$0xff]
    %v576 = vld [vmem:[#allocation2 + $0xdb0] sm:$0xff]
    %v577 = vld [vmem:[#allocation2 + $0xdb8] sm:$0xff]
    %v578 = vld [vmem:[#allocation2 + $0xdc0] sm:$0xff]
    %v579 = vld [vmem:[#allocation2 + $0xdc8] sm:$0xff]
    %v580 = vld [vmem:[#allocation2 + $0xdd0] sm:$0xff]
    %v581 = vld [vmem:[#allocation2 + $0xdd8] sm:$0xff]
    %v582 = vld [vmem:[#allocation2 + $0xde0] sm:$0xff]
    %v583 = vld [vmem:[#allocation2 + $0xde8] sm:$0xff]
    %v584 = vld [vmem:[#allocation2 + $0xdf0] sm:$0xff]
    %v585 = vld [vmem:[#allocation2 + $0xdf8] sm:$0xff]
    %v586 = vld [vmem:[#allocation2 + $0xe00] sm:$0xff]
    %v587 = vld [vmem:[#allocation2 + $0xe08] sm:$0xff]
    %v588 = vld [vmem:[#allocation2 + $0xe10] sm:$0xff]
    %v589 = vld [vmem:[#allocation2 + $0xe18] sm:$0xff]
    %v590 = vld [vmem:[#allocation2 + $0xe20] sm:$0xff]
    %v591 = vld [vmem:[#allocation2 + $0xe28] sm:$0xff]
    %v592 = vld [vmem:[#allocation2 + $0xe30] sm:$0xff]
    %v593 = vld [vmem:[#allocation2 + $0xe38] sm:$0xff]
    %v594 = vld [vmem:[#allocation2 + $0xe40] sm:$0xff]
    %v595 = vld [vmem:[#allocation2 + $0xe48] sm:$0xff]
    %v596 = vld [vmem:[#allocation2 + $0xe50] sm:$0xff]
    %v597 = vld [vmem:[#allocation2 + $0xe58] sm:$0xff]
    %v598 = vld [vmem:[#allocation2 + $0xe60] sm:$0xff]
    %v599 = vld [vmem:[#allocation2 + $0xe68] sm:$0xff]
    %v600 = vld [vmem:[#allocation2 + $0xe70] sm:$0xff]
    %v601 = vld [vmem:[#allocation2 + $0xe78] sm:$0xff]
    %v602 = vld [vmem:[#allocation2 + $0xe80] sm:$0xff]
    %v603 = vld [vmem:[#allocation2 + $0xe88] sm:$0xff]
    %v604 = vld [vmem:[#allocation2 + $0xe90] sm:$0xff]
    %v605 = vld [vmem:[#allocation2 + $0xe98] sm:$0xff]
    %v606 = vld [vmem:[#allocation2 + $0xea0] sm:$0xff]
    %v607 = vld [vmem:[#allocation2 + $0xea8] sm:$0xff]
    %v608 = vld [vmem:[#allocation2 + $0xeb0] sm:$0xff]
    %v609 = vld [vmem:[#allocation2 + $0xeb8] sm:$0xff]
    %v610 = vld [vmem:[#allocation2 + $0xec0] sm:$0xff]
    %v611 = vld [vmem:[#allocation2 + $0xec8] sm:$0xff]
    %v612 = vld [vmem:[#allocation2 + $0xed0] sm:$0xff]
    %v613 = vld [vmem:[#allocation2 + $0xed8] sm:$0xff]
    %v614 = vld [vmem:[#allocation2 + $0xee0] sm:$0xff]
    %v615 = vld [vmem:[#allocation2 + $0xee8] sm:$0xff]
    %v616 = vld [vmem:[#allocation2 + $0xef0] sm:$0xff]
    %v617 = vld [vmem:[#allocation2 + $0xef8] sm:$0xff]
    %v618 = vld [vmem:[#allocation2 + $0xf00] sm:$0xff]
    %v619 = vld [vmem:[#allocation2 + $0xf08] sm:$0xff]
    %v620 = vld [vmem:[#allocation2 + $0xf10] sm:$0xff]
    %v621 = vld [vmem:[#allocation2 + $0xf18] sm:$0xff]
    %v622 = vld [vmem:[#allocation2 + $0xf20] sm:$0xff]
    %v623 = vld [vmem:[#allocation2 + $0xf28] sm:$0xff]
    %v624 = vld [vmem:[#allocation2 + $0xf30] sm:$0xff]
    %v625 = vld [vmem:[#allocation2 + $0xf38] sm:$0xff]
    %v626 = vld [vmem:[#allocation2 + $0xf40] sm:$0xff]
    %v627 = vld [vmem:[#allocation2 + $0xf48] sm:$0xff]
    %v628 = vld [vmem:[#allocation2 + $0xf50] sm:$0xff]
    %v629 = vld [vmem:[#allocation2 + $0xf58] sm:$0xff]
    %v630 = vld [vmem:[#allocation2 + $0xf60] sm:$0xff]
    %v631 = vld [vmem:[#allocation2 + $0xf68] sm:$0xff]
    %v632 = vld [vmem:[#allocation2 + $0xf70] sm:$0xff]
    %v633 = vld [vmem:[#allocation2 + $0xf78] sm:$0xff]
    %v634 = vld [vmem:[#allocation2 + $0xf80] sm:$0xff]
    %v635 = vld [vmem:[#allocation2 + $0xf88] sm:$0xff]
    %v636 = vld [vmem:[#allocation2 + $0xf90] sm:$0xff]
    %v637 = vld [vmem:[#allocation2 + $0xf98] sm:$0xff]
    %v638 = vld [vmem:[#allocation2 + $0xfa0] sm:$0xff]
    %v639 = vld [vmem:[#allocation2 + $0xfa8] sm:$0xff]
    %v640 = vld [vmem:[#allocation2 + $0xfb0] sm:$0xff]
    %v641 = vld [vmem:[#allocation2 + $0xfb8] sm:$0xff]
    %v642 = vld [vmem:[#allocation2 + $0xfc0] sm:$0xff]
    %v643 = vld [vmem:[#allocation2 + $0xfc8] sm:$0xff]
    %v644 = vld [vmem:[#allocation2 + $0xfd0] sm:$0xff]
    %v645 = vld [vmem:[#allocation2 + $0xfd8] sm:$0xff]
    %v646 = vld [vmem:[#allocation2 + $0xfe0] sm:$0xff]
    %v647 = vld [vmem:[#allocation2 + $0xfe8] sm:$0xff]
    %v648 = vld [vmem:[#allocation2 + $0xff0] sm:$0xff]
    %v649 = vld [vmem:[#allocation2 + $0xff8] sm:$0xff]
    %v650 = vld [vmem:[#allocation5] sm:$0x3]
    %v652 = vlaneseq
    %v653 = vshrl.u32 %v652, 7
    %v654 = vsub.s32 0, %v653
    %v655 = vrot.slane %v650, %v654
    %v656 = vlaneseq
    %v657 = vshrl.u32 %v656, 7
    %v658 = vsub.s32 1, %v657
    %v659 = vrot.slane %v650, %v658
    %v666 = vcombine.high %v134, %v134
    %v668 = vunpack.c.l.s4 1966171168
    %v669 = vunpack.c.0.s8 %v668
    %v670 = vlaneseq
    %v671 = vshrl.u32 %v670, 7
    %v672 = vsub.s32 %v669, %v671
    %v673 = vrot.slane %v134, %v672
    %v675 = vunpack.c.l.s4 1966171168
    %v676 = vunpack.c.0.s8 %v675
    %v677 = vlaneseq
    %v678 = vshrl.u32 %v677, 7
    %v679 = vsub.s32 %v676, %v678
    %v680 = vrot.slane %v666, %v679
    %v681 = vcombine.high %v673, %v673
    %v682 = vcombine.high %v680, %v680
    %v684 = vunpack.c.l.s4 1966171168
    %v685 = vunpack.c.0.s8 %v684
    %v686 = vlaneseq
    %v687 = vshrl.u32 %v686, 7
    %v688 = vsub.s32 %v685, %v687
    %v689 = vrot.slane %v673, %v688
    %v691 = vunpack.c.l.s4 1966171168
    %v692 = vunpack.c.0.s8 %v691
    %v693 = vlaneseq
    %v694 = vshrl.u32 %v693, 7
    %v695 = vsub.s32 %v692, %v694
    %v696 = vrot.slane %v680, %v695
    %v698 = vunpack.c.l.s4 1966171168
    %v699 = vunpack.c.0.s8 %v698
    %v700 = vlaneseq
    %v701 = vshrl.u32 %v700, 7
    %v702 = vsub.s32 %v699, %v701
    %v703 = vrot.slane %v681, %v702
    %v705 = vunpack.c.l.s4 1966171168
    %v706 = vunpack.c.0.s8 %v705
    %v707 = vlaneseq
    %v708 = vshrl.u32 %v707, 7
    %v709 = vsub.s32 %v706, %v708
    %v710 = vrot.slane %v682, %v709
    %v711 = vcombine.high %v689, %v689
    %v712 = vcombine.high %v696, %v696
    %v713 = vcombine.high %v703, %v703
    %v714 = vcombine.high %v710, %v710
    %v715 = vcombine.high %v135, %v135
    %v717 = vunpack.c.l.s4 1966171168
    %v718 = vunpack.c.0.s8 %v717
    %v719 = vlaneseq
    %v720 = vshrl.u32 %v719, 7
    %v721 = vsub.s32 %v718, %v720
    %v722 = vrot.slane %v135, %v721
    %v724 = vunpack.c.l.s4 1966171168
    %v725 = vunpack.c.0.s8 %v724
    %v726 = vlaneseq
    %v727 = vshrl.u32 %v726, 7
    %v728 = vsub.s32 %v725, %v727
    %v729 = vrot.slane %v715, %v728
    %v730 = vcombine.high %v722, %v722
    %v731 = vcombine.high %v729, %v729
    %v733 = vunpack.c.l.s4 1966171168
    %v734 = vunpack.c.0.s8 %v733
    %v735 = vlaneseq
    %v736 = vshrl.u32 %v735, 7
    %v737 = vsub.s32 %v734, %v736
    %v738 = vrot.slane %v722, %v737
    %v740 = vunpack.c.l.s4 1966171168
    %v741 = vunpack.c.0.s8 %v740
    %v742 = vlaneseq
    %v743 = vshrl.u32 %v742, 7
    %v744 = vsub.s32 %v741, %v743
    %v745 = vrot.slane %v729, %v744
    %v747 = vunpack.c.l.s4 1966171168
    %v748 = vunpack.c.0.s8 %v747
    %v749 = vlaneseq
    %v750 = vshrl.u32 %v749, 7
    %v751 = vsub.s32 %v748, %v750
    %v752 = vrot.slane %v730, %v751
    %v754 = vunpack.c.l.s4 1966171168
    %v755 = vunpack.c.0.s8 %v754
    %v756 = vlaneseq
    %v757 = vshrl.u32 %v756, 7
    %v758 = vsub.s32 %v755, %v757
    %v759 = vrot.slane %v731, %v758
    %v760 = vcombine.high %v738, %v738
    %v761 = vcombine.high %v745, %v745
    %v762 = vcombine.high %v752, %v752
    %v763 = vcombine.high %v759, %v759
    %v764 = vcombine.high %v136, %v136
    %v766 = vunpack.c.l.s4 1966171168
    %v767 = vunpack.c.0.s8 %v766
    %v768 = vlaneseq
    %v769 = vshrl.u32 %v768, 7
    %v770 = vsub.s32 %v767, %v769
    %v771 = vrot.slane %v136, %v770
    %v773 = vunpack.c.l.s4 1966171168
    %v774 = vunpack.c.0.s8 %v773
    %v775 = vlaneseq
    %v776 = vshrl.u32 %v775, 7
    %v777 = vsub.s32 %v774, %v776
    %v778 = vrot.slane %v764, %v777
    %v779 = vcombine.high %v771, %v771
    %v780 = vcombine.high %v778, %v778
    %v782 = vunpack.c.l.s4 1966171168
    %v783 = vunpack.c.0.s8 %v782
    %v784 = vlaneseq
    %v785 = vshrl.u32 %v784, 7
    %v786 = vsub.s32 %v783, %v785
    %v787 = vrot.slane %v771, %v786
    %v789 = vunpack.c.l.s4 1966171168
    %v790 = vunpack.c.0.s8 %v789
    %v791 = vlaneseq
    %v792 = vshrl.u32 %v791, 7
    %v793 = vsub.s32 %v790, %v792
    %v794 = vrot.slane %v778, %v793
    %v796 = vunpack.c.l.s4 1966171168
    %v797 = vunpack.c.0.s8 %v796
    %v798 = vlaneseq
    %v799 = vshrl.u32 %v798, 7
    %v800 = vsub.s32 %v797, %v799
    %v801 = vrot.slane %v779, %v800
    %v803 = vunpack.c.l.s4 1966171168
    %v804 = vunpack.c.0.s8 %v803
    %v805 = vlaneseq
    %v806 = vshrl.u32 %v805, 7
    %v807 = vsub.s32 %v804, %v806
    %v808 = vrot.slane %v780, %v807
    %v809 = vcombine.high %v787, %v787
    %v810 = vcombine.high %v794, %v794
    %v811 = vcombine.high %v801, %v801
    %v812 = vcombine.high %v808, %v808
    %v813 = vcombine.high %v137, %v137
    %v815 = vunpack.c.l.s4 1966171168
    %v816 = vunpack.c.0.s8 %v815
    %v817 = vlaneseq
    %v818 = vshrl.u32 %v817, 7
    %v819 = vsub.s32 %v816, %v818
    %v820 = vrot.slane %v137, %v819
    %v822 = vunpack.c.l.s4 1966171168
    %v823 = vunpack.c.0.s8 %v822
    %v824 = vlaneseq
    %v825 = vshrl.u32 %v824, 7
    %v826 = vsub.s32 %v823, %v825
    %v827 = vrot.slane %v813, %v826
    %v828 = vcombine.high %v820, %v820
    %v829 = vcombine.high %v827, %v827
    %v831 = vunpack.c.l.s4 1966171168
    %v832 = vunpack.c.0.s8 %v831
    %v833 = vlaneseq
    %v834 = vshrl.u32 %v833, 7
    %v835 = vsub.s32 %v832, %v834
    %v836 = vrot.slane %v820, %v835
    %v838 = vunpack.c.l.s4 1966171168
    %v839 = vunpack.c.0.s8 %v838
    %v840 = vlaneseq
    %v841 = vshrl.u32 %v840, 7
    %v842 = vsub.s32 %v839, %v841
    %v843 = vrot.slane %v827, %v842
    %v845 = vunpack.c.l.s4 1966171168
    %v846 = vunpack.c.0.s8 %v845
    %v847 = vlaneseq
    %v848 = vshrl.u32 %v847, 7
    %v849 = vsub.s32 %v846, %v848
    %v850 = vrot.slane %v828, %v849
    %v852 = vunpack.c.l.s4 1966171168
    %v853 = vunpack.c.0.s8 %v852
    %v854 = vlaneseq
    %v855 = vshrl.u32 %v854, 7
    %v856 = vsub.s32 %v853, %v855
    %v857 = vrot.slane %v829, %v856
    %v858 = vcombine.high %v836, %v836
    %v859 = vcombine.high %v843, %v843
    %v860 = vcombine.high %v850, %v850
    %v861 = vcombine.high %v857, %v857
    %v1406 = vunpack.c.l.b16 %v138
    %v1407 = vunpack.c.h.b16 %v138
    %v1408 = vunpack.c.l.b16 %v139
    %v1409 = vunpack.c.h.b16 %v139
    %v1410 = vunpack.c.l.b16 %v140
    %v1411 = vunpack.c.h.b16 %v140
    %v1412 = vunpack.c.l.b16 %v141
    %v1413 = vunpack.c.h.b16 %v141
    %v1414 = vunpack.c.l.b16 %v142
    %v1415 = vunpack.c.h.b16 %v142
    %v1416 = vunpack.c.l.b16 %v143
    %v1417 = vunpack.c.h.b16 %v143
    %v1418 = vunpack.c.l.b16 %v144
    %v1419 = vunpack.c.h.b16 %v144
    %v1420 = vunpack.c.l.b16 %v145
    %v1421 = vunpack.c.h.b16 %v145
    %v1422 = vunpack.c.l.b16 %v146
    %v1423 = vunpack.c.h.b16 %v146
    %v1424 = vunpack.c.l.b16 %v147
    %v1425 = vunpack.c.h.b16 %v147
    %v1426 = vunpack.c.l.b16 %v148
    %v1427 = vunpack.c.h.b16 %v148
    %v1428 = vunpack.c.l.b16 %v149
    %v1429 = vunpack.c.h.b16 %v149
    %v1430 = vunpack.c.l.b16 %v150
    %v1431 = vunpack.c.h.b16 %v150
    %v1432 = vunpack.c.l.b16 %v151
    %v1433 = vunpack.c.h.b16 %v151
    %v1434 = vunpack.c.l.b16 %v152
    %v1435 = vunpack.c.h.b16 %v152
    %v1436 = vunpack.c.l.b16 %v153
    %v1437 = vunpack.c.h.b16 %v153
    %v1438 = vunpack.c.l.b16 %v154
    %v1439 = vunpack.c.h.b16 %v154
    %v1440 = vunpack.c.l.b16 %v155
    %v1441 = vunpack.c.h.b16 %v155
    %v1442 = vunpack.c.l.b16 %v156
    %v1443 = vunpack.c.h.b16 %v156
    %v1444 = vunpack.c.l.b16 %v157
    %v1445 = vunpack.c.h.b16 %v157
    %v1446 = vunpack.c.l.b16 %v158
    %v1447 = vunpack.c.h.b16 %v158
    %v1448 = vunpack.c.l.b16 %v159
    %v1449 = vunpack.c.h.b16 %v159
    %v1450 = vunpack.c.l.b16 %v160
    %v1451 = vunpack.c.h.b16 %v160
    %v1452 = vunpack.c.l.b16 %v161
    %v1453 = vunpack.c.h.b16 %v161
    %v1454 = vunpack.c.l.b16 %v162
    %v1455 = vunpack.c.h.b16 %v162
    %v1456 = vunpack.c.l.b16 %v163
    %v1457 = vunpack.c.h.b16 %v163
    %v1458 = vunpack.c.l.b16 %v164
    %v1459 = vunpack.c.h.b16 %v164
    %v1460 = vunpack.c.l.b16 %v165
    %v1461 = vunpack.c.h.b16 %v165
    %v1462 = vunpack.c.l.b16 %v166
    %v1463 = vunpack.c.h.b16 %v166
    %v1464 = vunpack.c.l.b16 %v167
    %v1465 = vunpack.c.h.b16 %v167
    %v1466 = vunpack.c.l.b16 %v168
    %v1467 = vunpack.c.h.b16 %v168
    %v1468 = vunpack.c.l.b16 %v169
    %v1469 = vunpack.c.h.b16 %v169
    %v1470 = vunpack.c.l.b16 %v170
    %v1471 = vunpack.c.h.b16 %v170
    %v1472 = vunpack.c.l.b16 %v171
    %v1473 = vunpack.c.h.b16 %v171
    %v1474 = vunpack.c.l.b16 %v172
    %v1475 = vunpack.c.h.b16 %v172
    %v1476 = vunpack.c.l.b16 %v173
    %v1477 = vunpack.c.h.b16 %v173
    %v1478 = vunpack.c.l.b16 %v174
    %v1479 = vunpack.c.h.b16 %v174
    %v1480 = vunpack.c.l.b16 %v175
    %v1481 = vunpack.c.h.b16 %v175
    %v1482 = vunpack.c.l.b16 %v176
    %v1483 = vunpack.c.h.b16 %v176
    %v1484 = vunpack.c.l.b16 %v177
    %v1485 = vunpack.c.h.b16 %v177
    %v1486 = vunpack.c.l.b16 %v178
    %v1487 = vunpack.c.h.b16 %v178
    %v1488 = vunpack.c.l.b16 %v179
    %v1489 = vunpack.c.h.b16 %v179
    %v1490 = vunpack.c.l.b16 %v180
    %v1491 = vunpack.c.h.b16 %v180
    %v1492 = vunpack.c.l.b16 %v181
    %v1493 = vunpack.c.h.b16 %v181
    %v1494 = vunpack.c.l.b16 %v182
    %v1495 = vunpack.c.h.b16 %v182
    %v1496 = vunpack.c.l.b16 %v183
    %v1497 = vunpack.c.h.b16 %v183
    %v1498 = vunpack.c.l.b16 %v184
    %v1499 = vunpack.c.h.b16 %v184
    %v1500 = vunpack.c.l.b16 %v185
    %v1501 = vunpack.c.h.b16 %v185
    %v1502 = vunpack.c.l.b16 %v186
    %v1503 = vunpack.c.h.b16 %v186
    %v1504 = vunpack.c.l.b16 %v187
    %v1505 = vunpack.c.h.b16 %v187
    %v1506 = vunpack.c.l.b16 %v188
    %v1507 = vunpack.c.h.b16 %v188
    %v1508 = vunpack.c.l.b16 %v189
    %v1509 = vunpack.c.h.b16 %v189
    %v1510 = vunpack.c.l.b16 %v190
    %v1511 = vunpack.c.h.b16 %v190
    %v1512 = vunpack.c.l.b16 %v191
    %v1513 = vunpack.c.h.b16 %v191
    %v1514 = vunpack.c.l.b16 %v192
    %v1515 = vunpack.c.h.b16 %v192
    %v1516 = vunpack.c.l.b16 %v193
    %v1517 = vunpack.c.h.b16 %v193
    %v1518 = vunpack.c.l.b16 %v194
    %v1519 = vunpack.c.h.b16 %v194
    %v1520 = vunpack.c.l.b16 %v195
    %v1521 = vunpack.c.h.b16 %v195
    %v1522 = vunpack.c.l.b16 %v196
    %v1523 = vunpack.c.h.b16 %v196
    %v1524 = vunpack.c.l.b16 %v197
    %v1525 = vunpack.c.h.b16 %v197
    %v1526 = vunpack.c.l.b16 %v198
    %v1527 = vunpack.c.h.b16 %v198
    %v1528 = vunpack.c.l.b16 %v199
    %v1529 = vunpack.c.h.b16 %v199
    %v1530 = vunpack.c.l.b16 %v200
    %v1531 = vunpack.c.h.b16 %v200
    %v1532 = vunpack.c.l.b16 %v201
    %v1533 = vunpack.c.h.b16 %v201
    %v1534 = vunpack.c.l.b16 %v202
    %v1535 = vunpack.c.h.b16 %v202
    %v1536 = vunpack.c.l.b16 %v203
    %v1537 = vunpack.c.h.b16 %v203
    %v1538 = vunpack.c.l.b16 %v204
    %v1539 = vunpack.c.h.b16 %v204
    %v1540 = vunpack.c.l.b16 %v205
    %v1541 = vunpack.c.h.b16 %v205
    %v1542 = vunpack.c.l.b16 %v206
    %v1543 = vunpack.c.h.b16 %v206
    %v1544 = vunpack.c.l.b16 %v207
    %v1545 = vunpack.c.h.b16 %v207
    %v1546 = vunpack.c.l.b16 %v208
    %v1547 = vunpack.c.h.b16 %v208
    %v1548 = vunpack.c.l.b16 %v209
    %v1549 = vunpack.c.h.b16 %v209
    %v1550 = vunpack.c.l.b16 %v210
    %v1551 = vunpack.c.h.b16 %v210
    %v1552 = vunpack.c.l.b16 %v211
    %v1553 = vunpack.c.h.b16 %v211
    %v1554 = vunpack.c.l.b16 %v212
    %v1555 = vunpack.c.h.b16 %v212
    %v1556 = vunpack.c.l.b16 %v213
    %v1557 = vunpack.c.h.b16 %v213
    %v1558 = vunpack.c.l.b16 %v214
    %v1559 = vunpack.c.h.b16 %v214
    %v1560 = vunpack.c.l.b16 %v215
    %v1561 = vunpack.c.h.b16 %v215
    %v1562 = vunpack.c.l.b16 %v216
    %v1563 = vunpack.c.h.b16 %v216
    %v1564 = vunpack.c.l.b16 %v217
    %v1565 = vunpack.c.h.b16 %v217
    %v1566 = vunpack.c.l.b16 %v218
    %v1567 = vunpack.c.h.b16 %v218
    %v1568 = vunpack.c.l.b16 %v219
    %v1569 = vunpack.c.h.b16 %v219
    %v1570 = vunpack.c.l.b16 %v220
    %v1571 = vunpack.c.h.b16 %v220
    %v1572 = vunpack.c.l.b16 %v221
    %v1573 = vunpack.c.h.b16 %v221
    %v1574 = vunpack.c.l.b16 %v222
    %v1575 = vunpack.c.h.b16 %v222
    %v1576 = vunpack.c.l.b16 %v223
    %v1577 = vunpack.c.h.b16 %v223
    %v1578 = vunpack.c.l.b16 %v224
    %v1579 = vunpack.c.h.b16 %v224
    %v1580 = vunpack.c.l.b16 %v225
    %v1581 = vunpack.c.h.b16 %v225
    %v1582 = vunpack.c.l.b16 %v226
    %v1583 = vunpack.c.h.b16 %v226
    %v1584 = vunpack.c.l.b16 %v227
    %v1585 = vunpack.c.h.b16 %v227
    %v1586 = vunpack.c.l.b16 %v228
    %v1587 = vunpack.c.h.b16 %v228
    %v1588 = vunpack.c.l.b16 %v229
    %v1589 = vunpack.c.h.b16 %v229
    %v1590 = vunpack.c.l.b16 %v230
    %v1591 = vunpack.c.h.b16 %v230
    %v1592 = vunpack.c.l.b16 %v231
    %v1593 = vunpack.c.h.b16 %v231
    %v1594 = vunpack.c.l.b16 %v232
    %v1595 = vunpack.c.h.b16 %v232
    %v1596 = vunpack.c.l.b16 %v233
    %v1597 = vunpack.c.h.b16 %v233
    %v1598 = vunpack.c.l.b16 %v234
    %v1599 = vunpack.c.h.b16 %v234
    %v1600 = vunpack.c.l.b16 %v235
    %v1601 = vunpack.c.h.b16 %v235
    %v1602 = vunpack.c.l.b16 %v236
    %v1603 = vunpack.c.h.b16 %v236
    %v1604 = vunpack.c.l.b16 %v237
    %v1605 = vunpack.c.h.b16 %v237
    %v1606 = vunpack.c.l.b16 %v238
    %v1607 = vunpack.c.h.b16 %v238
    %v1608 = vunpack.c.l.b16 %v239
    %v1609 = vunpack.c.h.b16 %v239
    %v1610 = vunpack.c.l.b16 %v240
    %v1611 = vunpack.c.h.b16 %v240
    %v1612 = vunpack.c.l.b16 %v241
    %v1613 = vunpack.c.h.b16 %v241
    %v1614 = vunpack.c.l.b16 %v242
    %v1615 = vunpack.c.h.b16 %v242
    %v1616 = vunpack.c.l.b16 %v243
    %v1617 = vunpack.c.h.b16 %v243
    %v1618 = vunpack.c.l.b16 %v244
    %v1619 = vunpack.c.h.b16 %v244
    %v1620 = vunpack.c.l.b16 %v245
    %v1621 = vunpack.c.h.b16 %v245
    %v1622 = vunpack.c.l.b16 %v246
    %v1623 = vunpack.c.h.b16 %v246
    %v1624 = vunpack.c.l.b16 %v247
    %v1625 = vunpack.c.h.b16 %v247
    %v1626 = vunpack.c.l.b16 %v248
    %v1627 = vunpack.c.h.b16 %v248
    %v1628 = vunpack.c.l.b16 %v249
    %v1629 = vunpack.c.h.b16 %v249
    %v1630 = vunpack.c.l.b16 %v250
    %v1631 = vunpack.c.h.b16 %v250
    %v1632 = vunpack.c.l.b16 %v251
    %v1633 = vunpack.c.h.b16 %v251
    %v1634 = vunpack.c.l.b16 %v252
    %v1635 = vunpack.c.h.b16 %v252
    %v1636 = vunpack.c.l.b16 %v253
    %v1637 = vunpack.c.h.b16 %v253
    %v1638 = vunpack.c.l.b16 %v254
    %v1639 = vunpack.c.h.b16 %v254
    %v1640 = vunpack.c.l.b16 %v255
    %v1641 = vunpack.c.h.b16 %v255
    %v1642 = vunpack.c.l.b16 %v256
    %v1643 = vunpack.c.h.b16 %v256
    %v1644 = vunpack.c.l.b16 %v257
    %v1645 = vunpack.c.h.b16 %v257
    %v1646 = vunpack.c.l.b16 %v258
    %v1647 = vunpack.c.h.b16 %v258
    %v1648 = vunpack.c.l.b16 %v259
    %v1649 = vunpack.c.h.b16 %v259
    %v1650 = vunpack.c.l.b16 %v260
    %v1651 = vunpack.c.h.b16 %v260
    %v1652 = vunpack.c.l.b16 %v261
    %v1653 = vunpack.c.h.b16 %v261
    %v1654 = vunpack.c.l.b16 %v262
    %v1655 = vunpack.c.h.b16 %v262
    %v1656 = vunpack.c.l.b16 %v263
    %v1657 = vunpack.c.h.b16 %v263
    %v1658 = vunpack.c.l.b16 %v264
    %v1659 = vunpack.c.h.b16 %v264
    %v1660 = vunpack.c.l.b16 %v265
    %v1661 = vunpack.c.h.b16 %v265
    %v1662 = vunpack.c.l.b16 %v266
    %v1663 = vunpack.c.h.b16 %v266
    %v1664 = vunpack.c.l.b16 %v267
    %v1665 = vunpack.c.h.b16 %v267
    %v1666 = vunpack.c.l.b16 %v268
    %v1667 = vunpack.c.h.b16 %v268
    %v1668 = vunpack.c.l.b16 %v269
    %v1669 = vunpack.c.h.b16 %v269
    %v1670 = vunpack.c.l.b16 %v270
    %v1671 = vunpack.c.h.b16 %v270
    %v1672 = vunpack.c.l.b16 %v271
    %v1673 = vunpack.c.h.b16 %v271
    %v1674 = vunpack.c.l.b16 %v272
    %v1675 = vunpack.c.h.b16 %v272
    %v1676 = vunpack.c.l.b16 %v273
    %v1677 = vunpack.c.h.b16 %v273
    %v1678 = vunpack.c.l.b16 %v274
    %v1679 = vunpack.c.h.b16 %v274
    %v1680 = vunpack.c.l.b16 %v275
    %v1681 = vunpack.c.h.b16 %v275
    %v1682 = vunpack.c.l.b16 %v276
    %v1683 = vunpack.c.h.b16 %v276
    %v1684 = vunpack.c.l.b16 %v277
    %v1685 = vunpack.c.h.b16 %v277
    %v1686 = vunpack.c.l.b16 %v278
    %v1687 = vunpack.c.h.b16 %v278
    %v1688 = vunpack.c.l.b16 %v279
    %v1689 = vunpack.c.h.b16 %v279
    %v1690 = vunpack.c.l.b16 %v280
    %v1691 = vunpack.c.h.b16 %v280
    %v1692 = vunpack.c.l.b16 %v281
    %v1693 = vunpack.c.h.b16 %v281
    %v1694 = vunpack.c.l.b16 %v282
    %v1695 = vunpack.c.h.b16 %v282
    %v1696 = vunpack.c.l.b16 %v283
    %v1697 = vunpack.c.h.b16 %v283
    %v1698 = vunpack.c.l.b16 %v284
    %v1699 = vunpack.c.h.b16 %v284
    %v1700 = vunpack.c.l.b16 %v285
    %v1701 = vunpack.c.h.b16 %v285
    %v1702 = vunpack.c.l.b16 %v286
    %v1703 = vunpack.c.h.b16 %v286
    %v1704 = vunpack.c.l.b16 %v287
    %v1705 = vunpack.c.h.b16 %v287
    %v1706 = vunpack.c.l.b16 %v288
    %v1707 = vunpack.c.h.b16 %v288
    %v1708 = vunpack.c.l.b16 %v289
    %v1709 = vunpack.c.h.b16 %v289
    %v1710 = vunpack.c.l.b16 %v290
    %v1711 = vunpack.c.h.b16 %v290
    %v1712 = vunpack.c.l.b16 %v291
    %v1713 = vunpack.c.h.b16 %v291
    %v1714 = vunpack.c.l.b16 %v292
    %v1715 = vunpack.c.h.b16 %v292
    %v1716 = vunpack.c.l.b16 %v293
    %v1717 = vunpack.c.h.b16 %v293
    %v1718 = vunpack.c.l.b16 %v294
    %v1719 = vunpack.c.h.b16 %v294
    %v1720 = vunpack.c.l.b16 %v295
    %v1721 = vunpack.c.h.b16 %v295
    %v1722 = vunpack.c.l.b16 %v296
    %v1723 = vunpack.c.h.b16 %v296
    %v1724 = vunpack.c.l.b16 %v297
    %v1725 = vunpack.c.h.b16 %v297
    %v1726 = vunpack.c.l.b16 %v298
    %v1727 = vunpack.c.h.b16 %v298
    %v1728 = vunpack.c.l.b16 %v299
    %v1729 = vunpack.c.h.b16 %v299
    %v1730 = vunpack.c.l.b16 %v300
    %v1731 = vunpack.c.h.b16 %v300
    %v1732 = vunpack.c.l.b16 %v301
    %v1733 = vunpack.c.h.b16 %v301
    %v1734 = vunpack.c.l.b16 %v302
    %v1735 = vunpack.c.h.b16 %v302
    %v1736 = vunpack.c.l.b16 %v303
    %v1737 = vunpack.c.h.b16 %v303
    %v1738 = vunpack.c.l.b16 %v304
    %v1739 = vunpack.c.h.b16 %v304
    %v1740 = vunpack.c.l.b16 %v305
    %v1741 = vunpack.c.h.b16 %v305
    %v1742 = vunpack.c.l.b16 %v306
    %v1743 = vunpack.c.h.b16 %v306
    %v1744 = vunpack.c.l.b16 %v307
    %v1745 = vunpack.c.h.b16 %v307
    %v1746 = vunpack.c.l.b16 %v308
    %v1747 = vunpack.c.h.b16 %v308
    %v1748 = vunpack.c.l.b16 %v309
    %v1749 = vunpack.c.h.b16 %v309
    %v1750 = vunpack.c.l.b16 %v310
    %v1751 = vunpack.c.h.b16 %v310
    %v1752 = vunpack.c.l.b16 %v311
    %v1753 = vunpack.c.h.b16 %v311
    %v1754 = vunpack.c.l.b16 %v312
    %v1755 = vunpack.c.h.b16 %v312
    %v1756 = vunpack.c.l.b16 %v313
    %v1757 = vunpack.c.h.b16 %v313
    %v1758 = vunpack.c.l.b16 %v314
    %v1759 = vunpack.c.h.b16 %v314
    %v1760 = vunpack.c.l.b16 %v315
    %v1761 = vunpack.c.h.b16 %v315
    %v1762 = vunpack.c.l.b16 %v316
    %v1763 = vunpack.c.h.b16 %v316
    %v1764 = vunpack.c.l.b16 %v317
    %v1765 = vunpack.c.h.b16 %v317
    %v1766 = vunpack.c.l.b16 %v318
    %v1767 = vunpack.c.h.b16 %v318
    %v1768 = vunpack.c.l.b16 %v319
    %v1769 = vunpack.c.h.b16 %v319
    %v1770 = vunpack.c.l.b16 %v320
    %v1771 = vunpack.c.h.b16 %v320
    %v1772 = vunpack.c.l.b16 %v321
    %v1773 = vunpack.c.h.b16 %v321
    %v1774 = vunpack.c.l.b16 %v322
    %v1775 = vunpack.c.h.b16 %v322
    %v1776 = vunpack.c.l.b16 %v323
    %v1777 = vunpack.c.h.b16 %v323
    %v1778 = vunpack.c.l.b16 %v324
    %v1779 = vunpack.c.h.b16 %v324
    %v1780 = vunpack.c.l.b16 %v325
    %v1781 = vunpack.c.h.b16 %v325
    %v1782 = vunpack.c.l.b16 %v326
    %v1783 = vunpack.c.h.b16 %v326
    %v1784 = vunpack.c.l.b16 %v327
    %v1785 = vunpack.c.h.b16 %v327
    %v1786 = vunpack.c.l.b16 %v328
    %v1787 = vunpack.c.h.b16 %v328
    %v1788 = vunpack.c.l.b16 %v329
    %v1789 = vunpack.c.h.b16 %v329
    %v1790 = vunpack.c.l.b16 %v330
    %v1791 = vunpack.c.h.b16 %v330
    %v1792 = vunpack.c.l.b16 %v331
    %v1793 = vunpack.c.h.b16 %v331
    %v1794 = vunpack.c.l.b16 %v332
    %v1795 = vunpack.c.h.b16 %v332
    %v1796 = vunpack.c.l.b16 %v333
    %v1797 = vunpack.c.h.b16 %v333
    %v1798 = vunpack.c.l.b16 %v334
    %v1799 = vunpack.c.h.b16 %v334
    %v1800 = vunpack.c.l.b16 %v335
    %v1801 = vunpack.c.h.b16 %v335
    %v1802 = vunpack.c.l.b16 %v336
    %v1803 = vunpack.c.h.b16 %v336
    %v1804 = vunpack.c.l.b16 %v337
    %v1805 = vunpack.c.h.b16 %v337
    %v1806 = vunpack.c.l.b16 %v338
    %v1807 = vunpack.c.h.b16 %v338
    %v1808 = vunpack.c.l.b16 %v339
    %v1809 = vunpack.c.h.b16 %v339
    %v1810 = vunpack.c.l.b16 %v340
    %v1811 = vunpack.c.h.b16 %v340
    %v1812 = vunpack.c.l.b16 %v341
    %v1813 = vunpack.c.h.b16 %v341
    %v1814 = vunpack.c.l.b16 %v342
    %v1815 = vunpack.c.h.b16 %v342
    %v1816 = vunpack.c.l.b16 %v343
    %v1817 = vunpack.c.h.b16 %v343
    %v1818 = vunpack.c.l.b16 %v344
    %v1819 = vunpack.c.h.b16 %v344
    %v1820 = vunpack.c.l.b16 %v345
    %v1821 = vunpack.c.h.b16 %v345
    %v1822 = vunpack.c.l.b16 %v346
    %v1823 = vunpack.c.h.b16 %v346
    %v1824 = vunpack.c.l.b16 %v347
    %v1825 = vunpack.c.h.b16 %v347
    %v1826 = vunpack.c.l.b16 %v348
    %v1827 = vunpack.c.h.b16 %v348
    %v1828 = vunpack.c.l.b16 %v349
    %v1829 = vunpack.c.h.b16 %v349
    %v1830 = vunpack.c.l.b16 %v350
    %v1831 = vunpack.c.h.b16 %v350
    %v1832 = vunpack.c.l.b16 %v351
    %v1833 = vunpack.c.h.b16 %v351
    %v1834 = vunpack.c.l.b16 %v352
    %v1835 = vunpack.c.h.b16 %v352
    %v1836 = vunpack.c.l.b16 %v353
    %v1837 = vunpack.c.h.b16 %v353
    %v1838 = vunpack.c.l.b16 %v354
    %v1839 = vunpack.c.h.b16 %v354
    %v1840 = vunpack.c.l.b16 %v355
    %v1841 = vunpack.c.h.b16 %v355
    %v1842 = vunpack.c.l.b16 %v356
    %v1843 = vunpack.c.h.b16 %v356
    %v1844 = vunpack.c.l.b16 %v357
    %v1845 = vunpack.c.h.b16 %v357
    %v1846 = vunpack.c.l.b16 %v358
    %v1847 = vunpack.c.h.b16 %v358
    %v1848 = vunpack.c.l.b16 %v359
    %v1849 = vunpack.c.h.b16 %v359
    %v1850 = vunpack.c.l.b16 %v360
    %v1851 = vunpack.c.h.b16 %v360
    %v1852 = vunpack.c.l.b16 %v361
    %v1853 = vunpack.c.h.b16 %v361
    %v1854 = vunpack.c.l.b16 %v362
    %v1855 = vunpack.c.h.b16 %v362
    %v1856 = vunpack.c.l.b16 %v363
    %v1857 = vunpack.c.h.b16 %v363
    %v1858 = vunpack.c.l.b16 %v364
    %v1859 = vunpack.c.h.b16 %v364
    %v1860 = vunpack.c.l.b16 %v365
    %v1861 = vunpack.c.h.b16 %v365
    %v1862 = vunpack.c.l.b16 %v366
    %v1863 = vunpack.c.h.b16 %v366
    %v1864 = vunpack.c.l.b16 %v367
    %v1865 = vunpack.c.h.b16 %v367
    %v1866 = vunpack.c.l.b16 %v368
    %v1867 = vunpack.c.h.b16 %v368
    %v1868 = vunpack.c.l.b16 %v369
    %v1869 = vunpack.c.h.b16 %v369
    %v1870 = vunpack.c.l.b16 %v370
    %v1871 = vunpack.c.h.b16 %v370
    %v1872 = vunpack.c.l.b16 %v371
    %v1873 = vunpack.c.h.b16 %v371
    %v1874 = vunpack.c.l.b16 %v372
    %v1875 = vunpack.c.h.b16 %v372
    %v1876 = vunpack.c.l.b16 %v373
    %v1877 = vunpack.c.h.b16 %v373
    %v1878 = vunpack.c.l.b16 %v374
    %v1879 = vunpack.c.h.b16 %v374
    %v1880 = vunpack.c.l.b16 %v375
    %v1881 = vunpack.c.h.b16 %v375
    %v1882 = vunpack.c.l.b16 %v376
    %v1883 = vunpack.c.h.b16 %v376
    %v1884 = vunpack.c.l.b16 %v377
    %v1885 = vunpack.c.h.b16 %v377
    %v1886 = vunpack.c.l.b16 %v378
    %v1887 = vunpack.c.h.b16 %v378
    %v1888 = vunpack.c.l.b16 %v379
    %v1889 = vunpack.c.h.b16 %v379
    %v1890 = vunpack.c.l.b16 %v380
    %v1891 = vunpack.c.h.b16 %v380
    %v1892 = vunpack.c.l.b16 %v381
    %v1893 = vunpack.c.h.b16 %v381
    %v1894 = vunpack.c.l.b16 %v382
    %v1895 = vunpack.c.h.b16 %v382
    %v1896 = vunpack.c.l.b16 %v383
    %v1897 = vunpack.c.h.b16 %v383
    %v1898 = vunpack.c.l.b16 %v384
    %v1899 = vunpack.c.h.b16 %v384
    %v1900 = vunpack.c.l.b16 %v385
    %v1901 = vunpack.c.h.b16 %v385
    %v1902 = vunpack.c.l.b16 %v386
    %v1903 = vunpack.c.h.b16 %v386
    %v1904 = vunpack.c.l.b16 %v387
    %v1905 = vunpack.c.h.b16 %v387
    %v1906 = vunpack.c.l.b16 %v388
    %v1907 = vunpack.c.h.b16 %v388
    %v1908 = vunpack.c.l.b16 %v389
    %v1909 = vunpack.c.h.b16 %v389
    %v1910 = vunpack.c.l.b16 %v390
    %v1911 = vunpack.c.h.b16 %v390
    %v1912 = vunpack.c.l.b16 %v391
    %v1913 = vunpack.c.h.b16 %v391
    %v1914 = vunpack.c.l.b16 %v392
    %v1915 = vunpack.c.h.b16 %v392
    %v1916 = vunpack.c.l.b16 %v393
    %v1917 = vunpack.c.h.b16 %v393
    %v1918 = vunpack.c.l.b16 %v394
    %v1919 = vunpack.c.h.b16 %v394
    %v1920 = vunpack.c.l.b16 %v395
    %v1921 = vunpack.c.h.b16 %v395
    %v1922 = vunpack.c.l.b16 %v396
    %v1923 = vunpack.c.h.b16 %v396
    %v1924 = vunpack.c.l.b16 %v397
    %v1925 = vunpack.c.h.b16 %v397
    %v1926 = vunpack.c.l.b16 %v398
    %v1927 = vunpack.c.h.b16 %v398
    %v1928 = vunpack.c.l.b16 %v399
    %v1929 = vunpack.c.h.b16 %v399
    %v1930 = vunpack.c.l.b16 %v400
    %v1931 = vunpack.c.h.b16 %v400
    %v1932 = vunpack.c.l.b16 %v401
    %v1933 = vunpack.c.h.b16 %v401
    %v1934 = vunpack.c.l.b16 %v402
    %v1935 = vunpack.c.h.b16 %v402
    %v1936 = vunpack.c.l.b16 %v403
    %v1937 = vunpack.c.h.b16 %v403
    %v1938 = vunpack.c.l.b16 %v404
    %v1939 = vunpack.c.h.b16 %v404
    %v1940 = vunpack.c.l.b16 %v405
    %v1941 = vunpack.c.h.b16 %v405
    %v1942 = vunpack.c.l.b16 %v406
    %v1943 = vunpack.c.h.b16 %v406
    %v1944 = vunpack.c.l.b16 %v407
    %v1945 = vunpack.c.h.b16 %v407
    %v1946 = vunpack.c.l.b16 %v408
    %v1947 = vunpack.c.h.b16 %v408
    %v1948 = vunpack.c.l.b16 %v409
    %v1949 = vunpack.c.h.b16 %v409
    %v1950 = vunpack.c.l.b16 %v410
    %v1951 = vunpack.c.h.b16 %v410
    %v1952 = vunpack.c.l.b16 %v411
    %v1953 = vunpack.c.h.b16 %v411
    %v1954 = vunpack.c.l.b16 %v412
    %v1955 = vunpack.c.h.b16 %v412
    %v1956 = vunpack.c.l.b16 %v413
    %v1957 = vunpack.c.h.b16 %v413
    %v1958 = vunpack.c.l.b16 %v414
    %v1959 = vunpack.c.h.b16 %v414
    %v1960 = vunpack.c.l.b16 %v415
    %v1961 = vunpack.c.h.b16 %v415
    %v1962 = vunpack.c.l.b16 %v416
    %v1963 = vunpack.c.h.b16 %v416
    %v1964 = vunpack.c.l.b16 %v417
    %v1965 = vunpack.c.h.b16 %v417
    %v1966 = vunpack.c.l.b16 %v418
    %v1967 = vunpack.c.h.b16 %v418
    %v1968 = vunpack.c.l.b16 %v419
    %v1969 = vunpack.c.h.b16 %v419
    %v1970 = vunpack.c.l.b16 %v420
    %v1971 = vunpack.c.h.b16 %v420
    %v1972 = vunpack.c.l.b16 %v421
    %v1973 = vunpack.c.h.b16 %v421
    %v1974 = vunpack.c.l.b16 %v422
    %v1975 = vunpack.c.h.b16 %v422
    %v1976 = vunpack.c.l.b16 %v423
    %v1977 = vunpack.c.h.b16 %v423
    %v1978 = vunpack.c.l.b16 %v424
    %v1979 = vunpack.c.h.b16 %v424
    %v1980 = vunpack.c.l.b16 %v425
    %v1981 = vunpack.c.h.b16 %v425
    %v1982 = vunpack.c.l.b16 %v426
    %v1983 = vunpack.c.h.b16 %v426
    %v1984 = vunpack.c.l.b16 %v427
    %v1985 = vunpack.c.h.b16 %v427
    %v1986 = vunpack.c.l.b16 %v428
    %v1987 = vunpack.c.h.b16 %v428
    %v1988 = vunpack.c.l.b16 %v429
    %v1989 = vunpack.c.h.b16 %v429
    %v1990 = vunpack.c.l.b16 %v430
    %v1991 = vunpack.c.h.b16 %v430
    %v1992 = vunpack.c.l.b16 %v431
    %v1993 = vunpack.c.h.b16 %v431
    %v1994 = vunpack.c.l.b16 %v432
    %v1995 = vunpack.c.h.b16 %v432
    %v1996 = vunpack.c.l.b16 %v433
    %v1997 = vunpack.c.h.b16 %v433
    %v1998 = vunpack.c.l.b16 %v434
    %v1999 = vunpack.c.h.b16 %v434
    %v2000 = vunpack.c.l.b16 %v435
    %v2001 = vunpack.c.h.b16 %v435
    %v2002 = vunpack.c.l.b16 %v436
    %v2003 = vunpack.c.h.b16 %v436
    %v2004 = vunpack.c.l.b16 %v437
    %v2005 = vunpack.c.h.b16 %v437
    %v2006 = vunpack.c.l.b16 %v438
    %v2007 = vunpack.c.h.b16 %v438
    %v2008 = vunpack.c.l.b16 %v439
    %v2009 = vunpack.c.h.b16 %v439
    %v2010 = vunpack.c.l.b16 %v440
    %v2011 = vunpack.c.h.b16 %v440
    %v2012 = vunpack.c.l.b16 %v441
    %v2013 = vunpack.c.h.b16 %v441
    %v2014 = vunpack.c.l.b16 %v442
    %v2015 = vunpack.c.h.b16 %v442
    %v2016 = vunpack.c.l.b16 %v443
    %v2017 = vunpack.c.h.b16 %v443
    %v2018 = vunpack.c.l.b16 %v444
    %v2019 = vunpack.c.h.b16 %v444
    %v2020 = vunpack.c.l.b16 %v445
    %v2021 = vunpack.c.h.b16 %v445
    %v2022 = vunpack.c.l.b16 %v446
    %v2023 = vunpack.c.h.b16 %v446
    %v2024 = vunpack.c.l.b16 %v447
    %v2025 = vunpack.c.h.b16 %v447
    %v2026 = vunpack.c.l.b16 %v448
    %v2027 = vunpack.c.h.b16 %v448
    %v2028 = vunpack.c.l.b16 %v449
    %v2029 = vunpack.c.h.b16 %v449
    %v2030 = vunpack.c.l.b16 %v450
    %v2031 = vunpack.c.h.b16 %v450
    %v2032 = vunpack.c.l.b16 %v451
    %v2033 = vunpack.c.h.b16 %v451
    %v2034 = vunpack.c.l.b16 %v452
    %v2035 = vunpack.c.h.b16 %v452
    %v2036 = vunpack.c.l.b16 %v453
    %v2037 = vunpack.c.h.b16 %v453
    %v2038 = vunpack.c.l.b16 %v454
    %v2039 = vunpack.c.h.b16 %v454
    %v2040 = vunpack.c.l.b16 %v455
    %v2041 = vunpack.c.h.b16 %v455
    %v2042 = vunpack.c.l.b16 %v456
    %v2043 = vunpack.c.h.b16 %v456
    %v2044 = vunpack.c.l.b16 %v457
    %v2045 = vunpack.c.h.b16 %v457
    %v2046 = vunpack.c.l.b16 %v458
    %v2047 = vunpack.c.h.b16 %v458
    %v2048 = vunpack.c.l.b16 %v459
    %v2049 = vunpack.c.h.b16 %v459
    %v2050 = vunpack.c.l.b16 %v460
    %v2051 = vunpack.c.h.b16 %v460
    %v2052 = vunpack.c.l.b16 %v461
    %v2053 = vunpack.c.h.b16 %v461
    %v2054 = vunpack.c.l.b16 %v462
    %v2055 = vunpack.c.h.b16 %v462
    %v2056 = vunpack.c.l.b16 %v463
    %v2057 = vunpack.c.h.b16 %v463
    %v2058 = vunpack.c.l.b16 %v464
    %v2059 = vunpack.c.h.b16 %v464
    %v2060 = vunpack.c.l.b16 %v465
    %v2061 = vunpack.c.h.b16 %v465
    %v2062 = vunpack.c.l.b16 %v466
    %v2063 = vunpack.c.h.b16 %v466
    %v2064 = vunpack.c.l.b16 %v467
    %v2065 = vunpack.c.h.b16 %v467
    %v2066 = vunpack.c.l.b16 %v468
    %v2067 = vunpack.c.h.b16 %v468
    %v2068 = vunpack.c.l.b16 %v469
    %v2069 = vunpack.c.h.b16 %v469
    %v2070 = vunpack.c.l.b16 %v470
    %v2071 = vunpack.c.h.b16 %v470
    %v2072 = vunpack.c.l.b16 %v471
    %v2073 = vunpack.c.h.b16 %v471
    %v2074 = vunpack.c.l.b16 %v472
    %v2075 = vunpack.c.h.b16 %v472
    %v2076 = vunpack.c.l.b16 %v473
    %v2077 = vunpack.c.h.b16 %v473
    %v2078 = vunpack.c.l.b16 %v474
    %v2079 = vunpack.c.h.b16 %v474
    %v2080 = vunpack.c.l.b16 %v475
    %v2081 = vunpack.c.h.b16 %v475
    %v2082 = vunpack.c.l.b16 %v476
    %v2083 = vunpack.c.h.b16 %v476
    %v2084 = vunpack.c.l.b16 %v477
    %v2085 = vunpack.c.h.b16 %v477
    %v2086 = vunpack.c.l.b16 %v478
    %v2087 = vunpack.c.h.b16 %v478
    %v2088 = vunpack.c.l.b16 %v479
    %v2089 = vunpack.c.h.b16 %v479
    %v2090 = vunpack.c.l.b16 %v480
    %v2091 = vunpack.c.h.b16 %v480
    %v2092 = vunpack.c.l.b16 %v481
    %v2093 = vunpack.c.h.b16 %v481
    %v2094 = vunpack.c.l.b16 %v482
    %v2095 = vunpack.c.h.b16 %v482
    %v2096 = vunpack.c.l.b16 %v483
    %v2097 = vunpack.c.h.b16 %v483
    %v2098 = vunpack.c.l.b16 %v484
    %v2099 = vunpack.c.h.b16 %v484
    %v2100 = vunpack.c.l.b16 %v485
    %v2101 = vunpack.c.h.b16 %v485
    %v2102 = vunpack.c.l.b16 %v486
    %v2103 = vunpack.c.h.b16 %v486
    %v2104 = vunpack.c.l.b16 %v487
    %v2105 = vunpack.c.h.b16 %v487
    %v2106 = vunpack.c.l.b16 %v488
    %v2107 = vunpack.c.h.b16 %v488
    %v2108 = vunpack.c.l.b16 %v489
    %v2109 = vunpack.c.h.b16 %v489
    %v2110 = vunpack.c.l.b16 %v490
    %v2111 = vunpack.c.h.b16 %v490
    %v2112 = vunpack.c.l.b16 %v491
    %v2113 = vunpack.c.h.b16 %v491
    %v2114 = vunpack.c.l.b16 %v492
    %v2115 = vunpack.c.h.b16 %v492
    %v2116 = vunpack.c.l.b16 %v493
    %v2117 = vunpack.c.h.b16 %v493
    %v2118 = vunpack.c.l.b16 %v494
    %v2119 = vunpack.c.h.b16 %v494
    %v2120 = vunpack.c.l.b16 %v495
    %v2121 = vunpack.c.h.b16 %v495
    %v2122 = vunpack.c.l.b16 %v496
    %v2123 = vunpack.c.h.b16 %v496
    %v2124 = vunpack.c.l.b16 %v497
    %v2125 = vunpack.c.h.b16 %v497
    %v2126 = vunpack.c.l.b16 %v498
    %v2127 = vunpack.c.h.b16 %v498
    %v2128 = vunpack.c.l.b16 %v499
    %v2129 = vunpack.c.h.b16 %v499
    %v2130 = vunpack.c.l.b16 %v500
    %v2131 = vunpack.c.h.b16 %v500
    %v2132 = vunpack.c.l.b16 %v501
    %v2133 = vunpack.c.h.b16 %v501
    %v2134 = vunpack.c.l.b16 %v502
    %v2135 = vunpack.c.h.b16 %v502
    %v2136 = vunpack.c.l.b16 %v503
    %v2137 = vunpack.c.h.b16 %v503
    %v2138 = vunpack.c.l.b16 %v504
    %v2139 = vunpack.c.h.b16 %v504
    %v2140 = vunpack.c.l.b16 %v505
    %v2141 = vunpack.c.h.b16 %v505
    %v2142 = vunpack.c.l.b16 %v506
    %v2143 = vunpack.c.h.b16 %v506
    %v2144 = vunpack.c.l.b16 %v507
    %v2145 = vunpack.c.h.b16 %v507
    %v2146 = vunpack.c.l.b16 %v508
    %v2147 = vunpack.c.h.b16 %v508
    %v2148 = vunpack.c.l.b16 %v509
    %v2149 = vunpack.c.h.b16 %v509
    %v2150 = vunpack.c.l.b16 %v510
    %v2151 = vunpack.c.h.b16 %v510
    %v2152 = vunpack.c.l.b16 %v511
    %v2153 = vunpack.c.h.b16 %v511
    %v2154 = vunpack.c.l.b16 %v512
    %v2155 = vunpack.c.h.b16 %v512
    %v2156 = vunpack.c.l.b16 %v513
    %v2157 = vunpack.c.h.b16 %v513
    %v2158 = vunpack.c.l.b16 %v514
    %v2159 = vunpack.c.h.b16 %v514
    %v2160 = vunpack.c.l.b16 %v515
    %v2161 = vunpack.c.h.b16 %v515
    %v2162 = vunpack.c.l.b16 %v516
    %v2163 = vunpack.c.h.b16 %v516
    %v2164 = vunpack.c.l.b16 %v517
    %v2165 = vunpack.c.h.b16 %v517
    %v2166 = vunpack.c.l.b16 %v518
    %v2167 = vunpack.c.h.b16 %v518
    %v2168 = vunpack.c.l.b16 %v519
    %v2169 = vunpack.c.h.b16 %v519
    %v2170 = vunpack.c.l.b16 %v520
    %v2171 = vunpack.c.h.b16 %v520
    %v2172 = vunpack.c.l.b16 %v521
    %v2173 = vunpack.c.h.b16 %v521
    %v2174 = vunpack.c.l.b16 %v522
    %v2175 = vunpack.c.h.b16 %v522
    %v2176 = vunpack.c.l.b16 %v523
    %v2177 = vunpack.c.h.b16 %v523
    %v2178 = vunpack.c.l.b16 %v524
    %v2179 = vunpack.c.h.b16 %v524
    %v2180 = vunpack.c.l.b16 %v525
    %v2181 = vunpack.c.h.b16 %v525
    %v2182 = vunpack.c.l.b16 %v526
    %v2183 = vunpack.c.h.b16 %v526
    %v2184 = vunpack.c.l.b16 %v527
    %v2185 = vunpack.c.h.b16 %v527
    %v2186 = vunpack.c.l.b16 %v528
    %v2187 = vunpack.c.h.b16 %v528
    %v2188 = vunpack.c.l.b16 %v529
    %v2189 = vunpack.c.h.b16 %v529
    %v2190 = vunpack.c.l.b16 %v530
    %v2191 = vunpack.c.h.b16 %v530
    %v2192 = vunpack.c.l.b16 %v531
    %v2193 = vunpack.c.h.b16 %v531
    %v2194 = vunpack.c.l.b16 %v532
    %v2195 = vunpack.c.h.b16 %v532
    %v2196 = vunpack.c.l.b16 %v533
    %v2197 = vunpack.c.h.b16 %v533
    %v2198 = vunpack.c.l.b16 %v534
    %v2199 = vunpack.c.h.b16 %v534
    %v2200 = vunpack.c.l.b16 %v535
    %v2201 = vunpack.c.h.b16 %v535
    %v2202 = vunpack.c.l.b16 %v536
    %v2203 = vunpack.c.h.b16 %v536
    %v2204 = vunpack.c.l.b16 %v537
    %v2205 = vunpack.c.h.b16 %v537
    %v2206 = vunpack.c.l.b16 %v538
    %v2207 = vunpack.c.h.b16 %v538
    %v2208 = vunpack.c.l.b16 %v539
    %v2209 = vunpack.c.h.b16 %v539
    %v2210 = vunpack.c.l.b16 %v540
    %v2211 = vunpack.c.h.b16 %v540
    %v2212 = vunpack.c.l.b16 %v541
    %v2213 = vunpack.c.h.b16 %v541
    %v2214 = vunpack.c.l.b16 %v542
    %v2215 = vunpack.c.h.b16 %v542
    %v2216 = vunpack.c.l.b16 %v543
    %v2217 = vunpack.c.h.b16 %v543
    %v2218 = vunpack.c.l.b16 %v544
    %v2219 = vunpack.c.h.b16 %v544
    %v2220 = vunpack.c.l.b16 %v545
    %v2221 = vunpack.c.h.b16 %v545
    %v2222 = vunpack.c.l.b16 %v546
    %v2223 = vunpack.c.h.b16 %v546
    %v2224 = vunpack.c.l.b16 %v547
    %v2225 = vunpack.c.h.b16 %v547
    %v2226 = vunpack.c.l.b16 %v548
    %v2227 = vunpack.c.h.b16 %v548
    %v2228 = vunpack.c.l.b16 %v549
    %v2229 = vunpack.c.h.b16 %v549
    %v2230 = vunpack.c.l.b16 %v550
    %v2231 = vunpack.c.h.b16 %v550
    %v2232 = vunpack.c.l.b16 %v551
    %v2233 = vunpack.c.h.b16 %v551
    %v2234 = vunpack.c.l.b16 %v552
    %v2235 = vunpack.c.h.b16 %v552
    %v2236 = vunpack.c.l.b16 %v553
    %v2237 = vunpack.c.h.b16 %v553
    %v2238 = vunpack.c.l.b16 %v554
    %v2239 = vunpack.c.h.b16 %v554
    %v2240 = vunpack.c.l.b16 %v555
    %v2241 = vunpack.c.h.b16 %v555
    %v2242 = vunpack.c.l.b16 %v556
    %v2243 = vunpack.c.h.b16 %v556
    %v2244 = vunpack.c.l.b16 %v557
    %v2245 = vunpack.c.h.b16 %v557
    %v2246 = vunpack.c.l.b16 %v558
    %v2247 = vunpack.c.h.b16 %v558
    %v2248 = vunpack.c.l.b16 %v559
    %v2249 = vunpack.c.h.b16 %v559
    %v2250 = vunpack.c.l.b16 %v560
    %v2251 = vunpack.c.h.b16 %v560
    %v2252 = vunpack.c.l.b16 %v561
    %v2253 = vunpack.c.h.b16 %v561
    %v2254 = vunpack.c.l.b16 %v562
    %v2255 = vunpack.c.h.b16 %v562
    %v2256 = vunpack.c.l.b16 %v563
    %v2257 = vunpack.c.h.b16 %v563
    %v2258 = vunpack.c.l.b16 %v564
    %v2259 = vunpack.c.h.b16 %v564
    %v2260 = vunpack.c.l.b16 %v565
    %v2261 = vunpack.c.h.b16 %v565
    %v2262 = vunpack.c.l.b16 %v566
    %v2263 = vunpack.c.h.b16 %v566
    %v2264 = vunpack.c.l.b16 %v567
    %v2265 = vunpack.c.h.b16 %v567
    %v2266 = vunpack.c.l.b16 %v568
    %v2267 = vunpack.c.h.b16 %v568
    %v2268 = vunpack.c.l.b16 %v569
    %v2269 = vunpack.c.h.b16 %v569
    %v2270 = vunpack.c.l.b16 %v570
    %v2271 = vunpack.c.h.b16 %v570
    %v2272 = vunpack.c.l.b16 %v571
    %v2273 = vunpack.c.h.b16 %v571
    %v2274 = vunpack.c.l.b16 %v572
    %v2275 = vunpack.c.h.b16 %v572
    %v2276 = vunpack.c.l.b16 %v573
    %v2277 = vunpack.c.h.b16 %v573
    %v2278 = vunpack.c.l.b16 %v574
    %v2279 = vunpack.c.h.b16 %v574
    %v2280 = vunpack.c.l.b16 %v575
    %v2281 = vunpack.c.h.b16 %v575
    %v2282 = vunpack.c.l.b16 %v576
    %v2283 = vunpack.c.h.b16 %v576
    %v2284 = vunpack.c.l.b16 %v577
    %v2285 = vunpack.c.h.b16 %v577
    %v2286 = vunpack.c.l.b16 %v578
    %v2287 = vunpack.c.h.b16 %v578
    %v2288 = vunpack.c.l.b16 %v579
    %v2289 = vunpack.c.h.b16 %v579
    %v2290 = vunpack.c.l.b16 %v580
    %v2291 = vunpack.c.h.b16 %v580
    %v2292 = vunpack.c.l.b16 %v581
    %v2293 = vunpack.c.h.b16 %v581
    %v2294 = vunpack.c.l.b16 %v582
    %v2295 = vunpack.c.h.b16 %v582
    %v2296 = vunpack.c.l.b16 %v583
    %v2297 = vunpack.c.h.b16 %v583
    %v2298 = vunpack.c.l.b16 %v584
    %v2299 = vunpack.c.h.b16 %v584
    %v2300 = vunpack.c.l.b16 %v585
    %v2301 = vunpack.c.h.b16 %v585
    %v2302 = vunpack.c.l.b16 %v586
    %v2303 = vunpack.c.h.b16 %v586
    %v2304 = vunpack.c.l.b16 %v587
    %v2305 = vunpack.c.h.b16 %v587
    %v2306 = vunpack.c.l.b16 %v588
    %v2307 = vunpack.c.h.b16 %v588
    %v2308 = vunpack.c.l.b16 %v589
    %v2309 = vunpack.c.h.b16 %v589
    %v2310 = vunpack.c.l.b16 %v590
    %v2311 = vunpack.c.h.b16 %v590
    %v2312 = vunpack.c.l.b16 %v591
    %v2313 = vunpack.c.h.b16 %v591
    %v2314 = vunpack.c.l.b16 %v592
    %v2315 = vunpack.c.h.b16 %v592
    %v2316 = vunpack.c.l.b16 %v593
    %v2317 = vunpack.c.h.b16 %v593
    %v2318 = vunpack.c.l.b16 %v594
    %v2319 = vunpack.c.h.b16 %v594
    %v2320 = vunpack.c.l.b16 %v595
    %v2321 = vunpack.c.h.b16 %v595
    %v2322 = vunpack.c.l.b16 %v596
    %v2323 = vunpack.c.h.b16 %v596
    %v2324 = vunpack.c.l.b16 %v597
    %v2325 = vunpack.c.h.b16 %v597
    %v2326 = vunpack.c.l.b16 %v598
    %v2327 = vunpack.c.h.b16 %v598
    %v2328 = vunpack.c.l.b16 %v599
    %v2329 = vunpack.c.h.b16 %v599
    %v2330 = vunpack.c.l.b16 %v600
    %v2331 = vunpack.c.h.b16 %v600
    %v2332 = vunpack.c.l.b16 %v601
    %v2333 = vunpack.c.h.b16 %v601
    %v2334 = vunpack.c.l.b16 %v602
    %v2335 = vunpack.c.h.b16 %v602
    %v2336 = vunpack.c.l.b16 %v603
    %v2337 = vunpack.c.h.b16 %v603
    %v2338 = vunpack.c.l.b16 %v604
    %v2339 = vunpack.c.h.b16 %v604
    %v2340 = vunpack.c.l.b16 %v605
    %v2341 = vunpack.c.h.b16 %v605
    %v2342 = vunpack.c.l.b16 %v606
    %v2343 = vunpack.c.h.b16 %v606
    %v2344 = vunpack.c.l.b16 %v607
    %v2345 = vunpack.c.h.b16 %v607
    %v2346 = vunpack.c.l.b16 %v608
    %v2347 = vunpack.c.h.b16 %v608
    %v2348 = vunpack.c.l.b16 %v609
    %v2349 = vunpack.c.h.b16 %v609
    %v2350 = vunpack.c.l.b16 %v610
    %v2351 = vunpack.c.h.b16 %v610
    %v2352 = vunpack.c.l.b16 %v611
    %v2353 = vunpack.c.h.b16 %v611
    %v2354 = vunpack.c.l.b16 %v612
    %v2355 = vunpack.c.h.b16 %v612
    %v2356 = vunpack.c.l.b16 %v613
    %v2357 = vunpack.c.h.b16 %v613
    %v2358 = vunpack.c.l.b16 %v614
    %v2359 = vunpack.c.h.b16 %v614
    %v2360 = vunpack.c.l.b16 %v615
    %v2361 = vunpack.c.h.b16 %v615
    %v2362 = vunpack.c.l.b16 %v616
    %v2363 = vunpack.c.h.b16 %v616
    %v2364 = vunpack.c.l.b16 %v617
    %v2365 = vunpack.c.h.b16 %v617
    %v2366 = vunpack.c.l.b16 %v618
    %v2367 = vunpack.c.h.b16 %v618
    %v2368 = vunpack.c.l.b16 %v619
    %v2369 = vunpack.c.h.b16 %v619
    %v2370 = vunpack.c.l.b16 %v620
    %v2371 = vunpack.c.h.b16 %v620
    %v2372 = vunpack.c.l.b16 %v621
    %v2373 = vunpack.c.h.b16 %v621
    %v2374 = vunpack.c.l.b16 %v622
    %v2375 = vunpack.c.h.b16 %v622
    %v2376 = vunpack.c.l.b16 %v623
    %v2377 = vunpack.c.h.b16 %v623
    %v2378 = vunpack.c.l.b16 %v624
    %v2379 = vunpack.c.h.b16 %v624
    %v2380 = vunpack.c.l.b16 %v625
    %v2381 = vunpack.c.h.b16 %v625
    %v2382 = vunpack.c.l.b16 %v626
    %v2383 = vunpack.c.h.b16 %v626
    %v2384 = vunpack.c.l.b16 %v627
    %v2385 = vunpack.c.h.b16 %v627
    %v2386 = vunpack.c.l.b16 %v628
    %v2387 = vunpack.c.h.b16 %v628
    %v2388 = vunpack.c.l.b16 %v629
    %v2389 = vunpack.c.h.b16 %v629
    %v2390 = vunpack.c.l.b16 %v630
    %v2391 = vunpack.c.h.b16 %v630
    %v2392 = vunpack.c.l.b16 %v631
    %v2393 = vunpack.c.h.b16 %v631
    %v2394 = vunpack.c.l.b16 %v632
    %v2395 = vunpack.c.h.b16 %v632
    %v2396 = vunpack.c.l.b16 %v633
    %v2397 = vunpack.c.h.b16 %v633
    %v2398 = vunpack.c.l.b16 %v634
    %v2399 = vunpack.c.h.b16 %v634
    %v2400 = vunpack.c.l.b16 %v635
    %v2401 = vunpack.c.h.b16 %v635
    %v2402 = vunpack.c.l.b16 %v636
    %v2403 = vunpack.c.h.b16 %v636
    %v2404 = vunpack.c.l.b16 %v637
    %v2405 = vunpack.c.h.b16 %v637
    %v2406 = vunpack.c.l.b16 %v638
    %v2407 = vunpack.c.h.b16 %v638
    %v2408 = vunpack.c.l.b16 %v639
    %v2409 = vunpack.c.h.b16 %v639
    %v2410 = vunpack.c.l.b16 %v640
    %v2411 = vunpack.c.h.b16 %v640
    %v2412 = vunpack.c.l.b16 %v641
    %v2413 = vunpack.c.h.b16 %v641
    %v2414 = vunpack.c.l.b16 %v642
    %v2415 = vunpack.c.h.b16 %v642
    %v2416 = vunpack.c.l.b16 %v643
    %v2417 = vunpack.c.h.b16 %v643
    %v2418 = vunpack.c.l.b16 %v644
    %v2419 = vunpack.c.h.b16 %v644
    %v2420 = vunpack.c.l.b16 %v645
    %v2421 = vunpack.c.h.b16 %v645
    %v2422 = vunpack.c.l.b16 %v646
    %v2423 = vunpack.c.h.b16 %v646
    %v2424 = vunpack.c.l.b16 %v647
    %v2425 = vunpack.c.h.b16 %v647
    %v2426 = vunpack.c.l.b16 %v648
    %v2427 = vunpack.c.h.b16 %v648
    %v2428 = vunpack.c.l.b16 %v649
    %v2429 = vunpack.c.h.b16 %v649
    %v2430 = vpack.c.b16 %v1408, %v1406
    %v2431 = vpack.c.b16 %v1409, %v1407
    %v2432 = vpack.c.b16 %v1412, %v1410
    %v2433 = vpack.c.b16 %v1413, %v1411
    %v2434 = vpack.c.b16 %v1416, %v1414
    %v2435 = vpack.c.b16 %v1417, %v1415
    %v2436 = vpack.c.b16 %v1420, %v1418
    %v2437 = vpack.c.b16 %v1421, %v1419
    %v2438 = vpack.c.b16 %v1424, %v1422
    %v2439 = vpack.c.b16 %v1425, %v1423
    %v2440 = vpack.c.b16 %v1428, %v1426
    %v2441 = vpack.c.b16 %v1429, %v1427
    %v2442 = vpack.c.b16 %v1432, %v1430
    %v2443 = vpack.c.b16 %v1433, %v1431
    %v2444 = vpack.c.b16 %v1436, %v1434
    %v2445 = vpack.c.b16 %v1437, %v1435
    %v2446 = vpack.c.b16 %v1440, %v1438
    %v2447 = vpack.c.b16 %v1441, %v1439
    %v2448 = vpack.c.b16 %v1444, %v1442
    %v2449 = vpack.c.b16 %v1445, %v1443
    %v2450 = vpack.c.b16 %v1448, %v1446
    %v2451 = vpack.c.b16 %v1449, %v1447
    %v2452 = vpack.c.b16 %v1452, %v1450
    %v2453 = vpack.c.b16 %v1453, %v1451
    %v2454 = vpack.c.b16 %v1456, %v1454
    %v2455 = vpack.c.b16 %v1457, %v1455
    %v2456 = vpack.c.b16 %v1460, %v1458
    %v2457 = vpack.c.b16 %v1461, %v1459
    %v2458 = vpack.c.b16 %v1464, %v1462
    %v2459 = vpack.c.b16 %v1465, %v1463
    %v2460 = vpack.c.b16 %v1468, %v1466
    %v2461 = vpack.c.b16 %v1469, %v1467
    %v2462 = vpack.c.b16 %v1472, %v1470
    %v2463 = vpack.c.b16 %v1473, %v1471
    %v2464 = vpack.c.b16 %v1476, %v1474
    %v2465 = vpack.c.b16 %v1477, %v1475
    %v2466 = vpack.c.b16 %v1480, %v1478
    %v2467 = vpack.c.b16 %v1481, %v1479
    %v2468 = vpack.c.b16 %v1484, %v1482
    %v2469 = vpack.c.b16 %v1485, %v1483
    %v2470 = vpack.c.b16 %v1488, %v1486
    %v2471 = vpack.c.b16 %v1489, %v1487
    %v2472 = vpack.c.b16 %v1492, %v1490
    %v2473 = vpack.c.b16 %v1493, %v1491
    %v2474 = vpack.c.b16 %v1496, %v1494
    %v2475 = vpack.c.b16 %v1497, %v1495
    %v2476 = vpack.c.b16 %v1500, %v1498
    %v2477 = vpack.c.b16 %v1501, %v1499
    %v2478 = vpack.c.b16 %v1504, %v1502
    %v2479 = vpack.c.b16 %v1505, %v1503
    %v2480 = vpack.c.b16 %v1508, %v1506
    %v2481 = vpack.c.b16 %v1509, %v1507
    %v2482 = vpack.c.b16 %v1512, %v1510
    %v2483 = vpack.c.b16 %v1513, %v1511
    %v2484 = vpack.c.b16 %v1516, %v1514
    %v2485 = vpack.c.b16 %v1517, %v1515
    %v2486 = vpack.c.b16 %v1520, %v1518
    %v2487 = vpack.c.b16 %v1521, %v1519
    %v2488 = vpack.c.b16 %v1524, %v1522
    %v2489 = vpack.c.b16 %v1525, %v1523
    %v2490 = vpack.c.b16 %v1528, %v1526
    %v2491 = vpack.c.b16 %v1529, %v1527
    %v2492 = vpack.c.b16 %v1532, %v1530
    %v2493 = vpack.c.b16 %v1533, %v1531
    %v2494 = vpack.c.b16 %v1536, %v1534
    %v2495 = vpack.c.b16 %v1537, %v1535
    %v2496 = vpack.c.b16 %v1540, %v1538
    %v2497 = vpack.c.b16 %v1541, %v1539
    %v2498 = vpack.c.b16 %v1544, %v1542
    %v2499 = vpack.c.b16 %v1545, %v1543
    %v2500 = vpack.c.b16 %v1548, %v1546
    %v2501 = vpack.c.b16 %v1549, %v1547
    %v2502 = vpack.c.b16 %v1552, %v1550
    %v2503 = vpack.c.b16 %v1553, %v1551
    %v2504 = vpack.c.b16 %v1556, %v1554
    %v2505 = vpack.c.b16 %v1557, %v1555
    %v2506 = vpack.c.b16 %v1560, %v1558
    %v2507 = vpack.c.b16 %v1561, %v1559
    %v2508 = vpack.c.b16 %v1564, %v1562
    %v2509 = vpack.c.b16 %v1565, %v1563
    %v2510 = vpack.c.b16 %v1568, %v1566
    %v2511 = vpack.c.b16 %v1569, %v1567
    %v2512 = vpack.c.b16 %v1572, %v1570
    %v2513 = vpack.c.b16 %v1573, %v1571
    %v2514 = vpack.c.b16 %v1576, %v1574
    %v2515 = vpack.c.b16 %v1577, %v1575
    %v2516 = vpack.c.b16 %v1580, %v1578
    %v2517 = vpack.c.b16 %v1581, %v1579
    %v2518 = vpack.c.b16 %v1584, %v1582
    %v2519 = vpack.c.b16 %v1585, %v1583
    %v2520 = vpack.c.b16 %v1588, %v1586
    %v2521 = vpack.c.b16 %v1589, %v1587
    %v2522 = vpack.c.b16 %v1592, %v1590
    %v2523 = vpack.c.b16 %v1593, %v1591
    %v2524 = vpack.c.b16 %v1596, %v1594
    %v2525 = vpack.c.b16 %v1597, %v1595
    %v2526 = vpack.c.b16 %v1600, %v1598
    %v2527 = vpack.c.b16 %v1601, %v1599
    %v2528 = vpack.c.b16 %v1604, %v1602
    %v2529 = vpack.c.b16 %v1605, %v1603
    %v2530 = vpack.c.b16 %v1608, %v1606
    %v2531 = vpack.c.b16 %v1609, %v1607
    %v2532 = vpack.c.b16 %v1612, %v1610
    %v2533 = vpack.c.b16 %v1613, %v1611
    %v2534 = vpack.c.b16 %v1616, %v1614
    %v2535 = vpack.c.b16 %v1617, %v1615
    %v2536 = vpack.c.b16 %v1620, %v1618
    %v2537 = vpack.c.b16 %v1621, %v1619
    %v2538 = vpack.c.b16 %v1624, %v1622
    %v2539 = vpack.c.b16 %v1625, %v1623
    %v2540 = vpack.c.b16 %v1628, %v1626
    %v2541 = vpack.c.b16 %v1629, %v1627
    %v2542 = vpack.c.b16 %v1632, %v1630
    %v2543 = vpack.c.b16 %v1633, %v1631
    %v2544 = vpack.c.b16 %v1636, %v1634
    %v2545 = vpack.c.b16 %v1637, %v1635
    %v2546 = vpack.c.b16 %v1640, %v1638
    %v2547 = vpack.c.b16 %v1641, %v1639
    %v2548 = vpack.c.b16 %v1644, %v1642
    %v2549 = vpack.c.b16 %v1645, %v1643
    %v2550 = vpack.c.b16 %v1648, %v1646
    %v2551 = vpack.c.b16 %v1649, %v1647
    %v2552 = vpack.c.b16 %v1652, %v1650
    %v2553 = vpack.c.b16 %v1653, %v1651
    %v2554 = vpack.c.b16 %v1656, %v1654
    %v2555 = vpack.c.b16 %v1657, %v1655
    %v2556 = vpack.c.b16 %v1660, %v1658
    %v2557 = vpack.c.b16 %v1661, %v1659
    %v2558 = vpack.c.b16 %v1664, %v1662
    %v2559 = vpack.c.b16 %v1665, %v1663
    %v2560 = vpack.c.b16 %v1668, %v1666
    %v2561 = vpack.c.b16 %v1669, %v1667
    %v2562 = vpack.c.b16 %v1672, %v1670
    %v2563 = vpack.c.b16 %v1673, %v1671
    %v2564 = vpack.c.b16 %v1676, %v1674
    %v2565 = vpack.c.b16 %v1677, %v1675
    %v2566 = vpack.c.b16 %v1680, %v1678
    %v2567 = vpack.c.b16 %v1681, %v1679
    %v2568 = vpack.c.b16 %v1684, %v1682
    %v2569 = vpack.c.b16 %v1685, %v1683
    %v2570 = vpack.c.b16 %v1688, %v1686
    %v2571 = vpack.c.b16 %v1689, %v1687
    %v2572 = vpack.c.b16 %v1692, %v1690
    %v2573 = vpack.c.b16 %v1693, %v1691
    %v2574 = vpack.c.b16 %v1696, %v1694
    %v2575 = vpack.c.b16 %v1697, %v1695
    %v2576 = vpack.c.b16 %v1700, %v1698
    %v2577 = vpack.c.b16 %v1701, %v1699
    %v2578 = vpack.c.b16 %v1704, %v1702
    %v2579 = vpack.c.b16 %v1705, %v1703
    %v2580 = vpack.c.b16 %v1708, %v1706
    %v2581 = vpack.c.b16 %v1709, %v1707
    %v2582 = vpack.c.b16 %v1712, %v1710
    %v2583 = vpack.c.b16 %v1713, %v1711
    %v2584 = vpack.c.b16 %v1716, %v1714
    %v2585 = vpack.c.b16 %v1717, %v1715
    %v2586 = vpack.c.b16 %v1720, %v1718
    %v2587 = vpack.c.b16 %v1721, %v1719
    %v2588 = vpack.c.b16 %v1724, %v1722
    %v2589 = vpack.c.b16 %v1725, %v1723
    %v2590 = vpack.c.b16 %v1728, %v1726
    %v2591 = vpack.c.b16 %v1729, %v1727
    %v2592 = vpack.c.b16 %v1732, %v1730
    %v2593 = vpack.c.b16 %v1733, %v1731
    %v2594 = vpack.c.b16 %v1736, %v1734
    %v2595 = vpack.c.b16 %v1737, %v1735
    %v2596 = vpack.c.b16 %v1740, %v1738
    %v2597 = vpack.c.b16 %v1741, %v1739
    %v2598 = vpack.c.b16 %v1744, %v1742
    %v2599 = vpack.c.b16 %v1745, %v1743
    %v2600 = vpack.c.b16 %v1748, %v1746
    %v2601 = vpack.c.b16 %v1749, %v1747
    %v2602 = vpack.c.b16 %v1752, %v1750
    %v2603 = vpack.c.b16 %v1753, %v1751
    %v2604 = vpack.c.b16 %v1756, %v1754
    %v2605 = vpack.c.b16 %v1757, %v1755
    %v2606 = vpack.c.b16 %v1760, %v1758
    %v2607 = vpack.c.b16 %v1761, %v1759
    %v2608 = vpack.c.b16 %v1764, %v1762
    %v2609 = vpack.c.b16 %v1765, %v1763
    %v2610 = vpack.c.b16 %v1768, %v1766
    %v2611 = vpack.c.b16 %v1769, %v1767
    %v2612 = vpack.c.b16 %v1772, %v1770
    %v2613 = vpack.c.b16 %v1773, %v1771
    %v2614 = vpack.c.b16 %v1776, %v1774
    %v2615 = vpack.c.b16 %v1777, %v1775
    %v2616 = vpack.c.b16 %v1780, %v1778
    %v2617 = vpack.c.b16 %v1781, %v1779
    %v2618 = vpack.c.b16 %v1784, %v1782
    %v2619 = vpack.c.b16 %v1785, %v1783
    %v2620 = vpack.c.b16 %v1788, %v1786
    %v2621 = vpack.c.b16 %v1789, %v1787
    %v2622 = vpack.c.b16 %v1792, %v1790
    %v2623 = vpack.c.b16 %v1793, %v1791
    %v2624 = vpack.c.b16 %v1796, %v1794
    %v2625 = vpack.c.b16 %v1797, %v1795
    %v2626 = vpack.c.b16 %v1800, %v1798
    %v2627 = vpack.c.b16 %v1801, %v1799
    %v2628 = vpack.c.b16 %v1804, %v1802
    %v2629 = vpack.c.b16 %v1805, %v1803
    %v2630 = vpack.c.b16 %v1808, %v1806
    %v2631 = vpack.c.b16 %v1809, %v1807
    %v2632 = vpack.c.b16 %v1812, %v1810
    %v2633 = vpack.c.b16 %v1813, %v1811
    %v2634 = vpack.c.b16 %v1816, %v1814
    %v2635 = vpack.c.b16 %v1817, %v1815
    %v2636 = vpack.c.b16 %v1820, %v1818
    %v2637 = vpack.c.b16 %v1821, %v1819
    %v2638 = vpack.c.b16 %v1824, %v1822
    %v2639 = vpack.c.b16 %v1825, %v1823
    %v2640 = vpack.c.b16 %v1828, %v1826
    %v2641 = vpack.c.b16 %v1829, %v1827
    %v2642 = vpack.c.b16 %v1832, %v1830
    %v2643 = vpack.c.b16 %v1833, %v1831
    %v2644 = vpack.c.b16 %v1836, %v1834
    %v2645 = vpack.c.b16 %v1837, %v1835
    %v2646 = vpack.c.b16 %v1840, %v1838
    %v2647 = vpack.c.b16 %v1841, %v1839
    %v2648 = vpack.c.b16 %v1844, %v1842
    %v2649 = vpack.c.b16 %v1845, %v1843
    %v2650 = vpack.c.b16 %v1848, %v1846
    %v2651 = vpack.c.b16 %v1849, %v1847
    %v2652 = vpack.c.b16 %v1852, %v1850
    %v2653 = vpack.c.b16 %v1853, %v1851
    %v2654 = vpack.c.b16 %v1856, %v1854
    %v2655 = vpack.c.b16 %v1857, %v1855
    %v2656 = vpack.c.b16 %v1860, %v1858
    %v2657 = vpack.c.b16 %v1861, %v1859
    %v2658 = vpack.c.b16 %v1864, %v1862
    %v2659 = vpack.c.b16 %v1865, %v1863
    %v2660 = vpack.c.b16 %v1868, %v1866
    %v2661 = vpack.c.b16 %v1869, %v1867
    %v2662 = vpack.c.b16 %v1872, %v1870
    %v2663 = vpack.c.b16 %v1873, %v1871
    %v2664 = vpack.c.b16 %v1876, %v1874
    %v2665 = vpack.c.b16 %v1877, %v1875
    %v2666 = vpack.c.b16 %v1880, %v1878
    %v2667 = vpack.c.b16 %v1881, %v1879
    %v2668 = vpack.c.b16 %v1884, %v1882
    %v2669 = vpack.c.b16 %v1885, %v1883
    %v2670 = vpack.c.b16 %v1888, %v1886
    %v2671 = vpack.c.b16 %v1889, %v1887
    %v2672 = vpack.c.b16 %v1892, %v1890
    %v2673 = vpack.c.b16 %v1893, %v1891
    %v2674 = vpack.c.b16 %v1896, %v1894
    %v2675 = vpack.c.b16 %v1897, %v1895
    %v2676 = vpack.c.b16 %v1900, %v1898
    %v2677 = vpack.c.b16 %v1901, %v1899
    %v2678 = vpack.c.b16 %v1904, %v1902
    %v2679 = vpack.c.b16 %v1905, %v1903
    %v2680 = vpack.c.b16 %v1908, %v1906
    %v2681 = vpack.c.b16 %v1909, %v1907
    %v2682 = vpack.c.b16 %v1912, %v1910
    %v2683 = vpack.c.b16 %v1913, %v1911
    %v2684 = vpack.c.b16 %v1916, %v1914
    %v2685 = vpack.c.b16 %v1917, %v1915
    %v2686 = vpack.c.b16 %v1920, %v1918
    %v2687 = vpack.c.b16 %v1921, %v1919
    %v2688 = vpack.c.b16 %v1924, %v1922
    %v2689 = vpack.c.b16 %v1925, %v1923
    %v2690 = vpack.c.b16 %v1928, %v1926
    %v2691 = vpack.c.b16 %v1929, %v1927
    %v2692 = vpack.c.b16 %v1932, %v1930
    %v2693 = vpack.c.b16 %v1933, %v1931
    %v2694 = vpack.c.b16 %v1936, %v1934
    %v2695 = vpack.c.b16 %v1937, %v1935
    %v2696 = vpack.c.b16 %v1940, %v1938
    %v2697 = vpack.c.b16 %v1941, %v1939
    %v2698 = vpack.c.b16 %v1944, %v1942
    %v2699 = vpack.c.b16 %v1945, %v1943
    %v2700 = vpack.c.b16 %v1948, %v1946
    %v2701 = vpack.c.b16 %v1949, %v1947
    %v2702 = vpack.c.b16 %v1952, %v1950
    %v2703 = vpack.c.b16 %v1953, %v1951
    %v2704 = vpack.c.b16 %v1956, %v1954
    %v2705 = vpack.c.b16 %v1957, %v1955
    %v2706 = vpack.c.b16 %v1960, %v1958
    %v2707 = vpack.c.b16 %v1961, %v1959
    %v2708 = vpack.c.b16 %v1964, %v1962
    %v2709 = vpack.c.b16 %v1965, %v1963
    %v2710 = vpack.c.b16 %v1968, %v1966
    %v2711 = vpack.c.b16 %v1969, %v1967
    %v2712 = vpack.c.b16 %v1972, %v1970
    %v2713 = vpack.c.b16 %v1973, %v1971
    %v2714 = vpack.c.b16 %v1976, %v1974
    %v2715 = vpack.c.b16 %v1977, %v1975
    %v2716 = vpack.c.b16 %v1980, %v1978
    %v2717 = vpack.c.b16 %v1981, %v1979
    %v2718 = vpack.c.b16 %v1984, %v1982
    %v2719 = vpack.c.b16 %v1985, %v1983
    %v2720 = vpack.c.b16 %v1988, %v1986
    %v2721 = vpack.c.b16 %v1989, %v1987
    %v2722 = vpack.c.b16 %v1992, %v1990
    %v2723 = vpack.c.b16 %v1993, %v1991
    %v2724 = vpack.c.b16 %v1996, %v1994
    %v2725 = vpack.c.b16 %v1997, %v1995
    %v2726 = vpack.c.b16 %v2000, %v1998
    %v2727 = vpack.c.b16 %v2001, %v1999
    %v2728 = vpack.c.b16 %v2004, %v2002
    %v2729 = vpack.c.b16 %v2005, %v2003
    %v2730 = vpack.c.b16 %v2008, %v2006
    %v2731 = vpack.c.b16 %v2009, %v2007
    %v2732 = vpack.c.b16 %v2012, %v2010
    %v2733 = vpack.c.b16 %v2013, %v2011
    %v2734 = vpack.c.b16 %v2016, %v2014
    %v2735 = vpack.c.b16 %v2017, %v2015
    %v2736 = vpack.c.b16 %v2020, %v2018
    %v2737 = vpack.c.b16 %v2021, %v2019
    %v2738 = vpack.c.b16 %v2024, %v2022
    %v2739 = vpack.c.b16 %v2025, %v2023
    %v2740 = vpack.c.b16 %v2028, %v2026
    %v2741 = vpack.c.b16 %v2029, %v2027
    %v2742 = vpack.c.b16 %v2032, %v2030
    %v2743 = vpack.c.b16 %v2033, %v2031
    %v2744 = vpack.c.b16 %v2036, %v2034
    %v2745 = vpack.c.b16 %v2037, %v2035
    %v2746 = vpack.c.b16 %v2040, %v2038
    %v2747 = vpack.c.b16 %v2041, %v2039
    %v2748 = vpack.c.b16 %v2044, %v2042
    %v2749 = vpack.c.b16 %v2045, %v2043
    %v2750 = vpack.c.b16 %v2048, %v2046
    %v2751 = vpack.c.b16 %v2049, %v2047
    %v2752 = vpack.c.b16 %v2052, %v2050
    %v2753 = vpack.c.b16 %v2053, %v2051
    %v2754 = vpack.c.b16 %v2056, %v2054
    %v2755 = vpack.c.b16 %v2057, %v2055
    %v2756 = vpack.c.b16 %v2060, %v2058
    %v2757 = vpack.c.b16 %v2061, %v2059
    %v2758 = vpack.c.b16 %v2064, %v2062
    %v2759 = vpack.c.b16 %v2065, %v2063
    %v2760 = vpack.c.b16 %v2068, %v2066
    %v2761 = vpack.c.b16 %v2069, %v2067
    %v2762 = vpack.c.b16 %v2072, %v2070
    %v2763 = vpack.c.b16 %v2073, %v2071
    %v2764 = vpack.c.b16 %v2076, %v2074
    %v2765 = vpack.c.b16 %v2077, %v2075
    %v2766 = vpack.c.b16 %v2080, %v2078
    %v2767 = vpack.c.b16 %v2081, %v2079
    %v2768 = vpack.c.b16 %v2084, %v2082
    %v2769 = vpack.c.b16 %v2085, %v2083
    %v2770 = vpack.c.b16 %v2088, %v2086
    %v2771 = vpack.c.b16 %v2089, %v2087
    %v2772 = vpack.c.b16 %v2092, %v2090
    %v2773 = vpack.c.b16 %v2093, %v2091
    %v2774 = vpack.c.b16 %v2096, %v2094
    %v2775 = vpack.c.b16 %v2097, %v2095
    %v2776 = vpack.c.b16 %v2100, %v2098
    %v2777 = vpack.c.b16 %v2101, %v2099
    %v2778 = vpack.c.b16 %v2104, %v2102
    %v2779 = vpack.c.b16 %v2105, %v2103
    %v2780 = vpack.c.b16 %v2108, %v2106
    %v2781 = vpack.c.b16 %v2109, %v2107
    %v2782 = vpack.c.b16 %v2112, %v2110
    %v2783 = vpack.c.b16 %v2113, %v2111
    %v2784 = vpack.c.b16 %v2116, %v2114
    %v2785 = vpack.c.b16 %v2117, %v2115
    %v2786 = vpack.c.b16 %v2120, %v2118
    %v2787 = vpack.c.b16 %v2121, %v2119
    %v2788 = vpack.c.b16 %v2124, %v2122
    %v2789 = vpack.c.b16 %v2125, %v2123
    %v2790 = vpack.c.b16 %v2128, %v2126
    %v2791 = vpack.c.b16 %v2129, %v2127
    %v2792 = vpack.c.b16 %v2132, %v2130
    %v2793 = vpack.c.b16 %v2133, %v2131
    %v2794 = vpack.c.b16 %v2136, %v2134
    %v2795 = vpack.c.b16 %v2137, %v2135
    %v2796 = vpack.c.b16 %v2140, %v2138
    %v2797 = vpack.c.b16 %v2141, %v2139
    %v2798 = vpack.c.b16 %v2144, %v2142
    %v2799 = vpack.c.b16 %v2145, %v2143
    %v2800 = vpack.c.b16 %v2148, %v2146
    %v2801 = vpack.c.b16 %v2149, %v2147
    %v2802 = vpack.c.b16 %v2152, %v2150
    %v2803 = vpack.c.b16 %v2153, %v2151
    %v2804 = vpack.c.b16 %v2156, %v2154
    %v2805 = vpack.c.b16 %v2157, %v2155
    %v2806 = vpack.c.b16 %v2160, %v2158
    %v2807 = vpack.c.b16 %v2161, %v2159
    %v2808 = vpack.c.b16 %v2164, %v2162
    %v2809 = vpack.c.b16 %v2165, %v2163
    %v2810 = vpack.c.b16 %v2168, %v2166
    %v2811 = vpack.c.b16 %v2169, %v2167
    %v2812 = vpack.c.b16 %v2172, %v2170
    %v2813 = vpack.c.b16 %v2173, %v2171
    %v2814 = vpack.c.b16 %v2176, %v2174
    %v2815 = vpack.c.b16 %v2177, %v2175
    %v2816 = vpack.c.b16 %v2180, %v2178
    %v2817 = vpack.c.b16 %v2181, %v2179
    %v2818 = vpack.c.b16 %v2184, %v2182
    %v2819 = vpack.c.b16 %v2185, %v2183
    %v2820 = vpack.c.b16 %v2188, %v2186
    %v2821 = vpack.c.b16 %v2189, %v2187
    %v2822 = vpack.c.b16 %v2192, %v2190
    %v2823 = vpack.c.b16 %v2193, %v2191
    %v2824 = vpack.c.b16 %v2196, %v2194
    %v2825 = vpack.c.b16 %v2197, %v2195
    %v2826 = vpack.c.b16 %v2200, %v2198
    %v2827 = vpack.c.b16 %v2201, %v2199
    %v2828 = vpack.c.b16 %v2204, %v2202
    %v2829 = vpack.c.b16 %v2205, %v2203
    %v2830 = vpack.c.b16 %v2208, %v2206
    %v2831 = vpack.c.b16 %v2209, %v2207
    %v2832 = vpack.c.b16 %v2212, %v2210
    %v2833 = vpack.c.b16 %v2213, %v2211
    %v2834 = vpack.c.b16 %v2216, %v2214
    %v2835 = vpack.c.b16 %v2217, %v2215
    %v2836 = vpack.c.b16 %v2220, %v2218
    %v2837 = vpack.c.b16 %v2221, %v2219
    %v2838 = vpack.c.b16 %v2224, %v2222
    %v2839 = vpack.c.b16 %v2225, %v2223
    %v2840 = vpack.c.b16 %v2228, %v2226
    %v2841 = vpack.c.b16 %v2229, %v2227
    %v2842 = vpack.c.b16 %v2232, %v2230
    %v2843 = vpack.c.b16 %v2233, %v2231
    %v2844 = vpack.c.b16 %v2236, %v2234
    %v2845 = vpack.c.b16 %v2237, %v2235
    %v2846 = vpack.c.b16 %v2240, %v2238
    %v2847 = vpack.c.b16 %v2241, %v2239
    %v2848 = vpack.c.b16 %v2244, %v2242
    %v2849 = vpack.c.b16 %v2245, %v2243
    %v2850 = vpack.c.b16 %v2248, %v2246
    %v2851 = vpack.c.b16 %v2249, %v2247
    %v2852 = vpack.c.b16 %v2252, %v2250
    %v2853 = vpack.c.b16 %v2253, %v2251
    %v2854 = vpack.c.b16 %v2256, %v2254
    %v2855 = vpack.c.b16 %v2257, %v2255
    %v2856 = vpack.c.b16 %v2260, %v2258
    %v2857 = vpack.c.b16 %v2261, %v2259
    %v2858 = vpack.c.b16 %v2264, %v2262
    %v2859 = vpack.c.b16 %v2265, %v2263
    %v2860 = vpack.c.b16 %v2268, %v2266
    %v2861 = vpack.c.b16 %v2269, %v2267
    %v2862 = vpack.c.b16 %v2272, %v2270
    %v2863 = vpack.c.b16 %v2273, %v2271
    %v2864 = vpack.c.b16 %v2276, %v2274
    %v2865 = vpack.c.b16 %v2277, %v2275
    %v2866 = vpack.c.b16 %v2280, %v2278
    %v2867 = vpack.c.b16 %v2281, %v2279
    %v2868 = vpack.c.b16 %v2284, %v2282
    %v2869 = vpack.c.b16 %v2285, %v2283
    %v2870 = vpack.c.b16 %v2288, %v2286
    %v2871 = vpack.c.b16 %v2289, %v2287
    %v2872 = vpack.c.b16 %v2292, %v2290
    %v2873 = vpack.c.b16 %v2293, %v2291
    %v2874 = vpack.c.b16 %v2296, %v2294
    %v2875 = vpack.c.b16 %v2297, %v2295
    %v2876 = vpack.c.b16 %v2300, %v2298
    %v2877 = vpack.c.b16 %v2301, %v2299
    %v2878 = vpack.c.b16 %v2304, %v2302
    %v2879 = vpack.c.b16 %v2305, %v2303
    %v2880 = vpack.c.b16 %v2308, %v2306
    %v2881 = vpack.c.b16 %v2309, %v2307
    %v2882 = vpack.c.b16 %v2312, %v2310
    %v2883 = vpack.c.b16 %v2313, %v2311
    %v2884 = vpack.c.b16 %v2316, %v2314
    %v2885 = vpack.c.b16 %v2317, %v2315
    %v2886 = vpack.c.b16 %v2320, %v2318
    %v2887 = vpack.c.b16 %v2321, %v2319
    %v2888 = vpack.c.b16 %v2324, %v2322
    %v2889 = vpack.c.b16 %v2325, %v2323
    %v2890 = vpack.c.b16 %v2328, %v2326
    %v2891 = vpack.c.b16 %v2329, %v2327
    %v2892 = vpack.c.b16 %v2332, %v2330
    %v2893 = vpack.c.b16 %v2333, %v2331
    %v2894 = vpack.c.b16 %v2336, %v2334
    %v2895 = vpack.c.b16 %v2337, %v2335
    %v2896 = vpack.c.b16 %v2340, %v2338
    %v2897 = vpack.c.b16 %v2341, %v2339
    %v2898 = vpack.c.b16 %v2344, %v2342
    %v2899 = vpack.c.b16 %v2345, %v2343
    %v2900 = vpack.c.b16 %v2348, %v2346
    %v2901 = vpack.c.b16 %v2349, %v2347
    %v2902 = vpack.c.b16 %v2352, %v2350
    %v2903 = vpack.c.b16 %v2353, %v2351
    %v2904 = vpack.c.b16 %v2356, %v2354
    %v2905 = vpack.c.b16 %v2357, %v2355
    %v2906 = vpack.c.b16 %v2360, %v2358
    %v2907 = vpack.c.b16 %v2361, %v2359
    %v2908 = vpack.c.b16 %v2364, %v2362
    %v2909 = vpack.c.b16 %v2365, %v2363
    %v2910 = vpack.c.b16 %v2368, %v2366
    %v2911 = vpack.c.b16 %v2369, %v2367
    %v2912 = vpack.c.b16 %v2372, %v2370
    %v2913 = vpack.c.b16 %v2373, %v2371
    %v2914 = vpack.c.b16 %v2376, %v2374
    %v2915 = vpack.c.b16 %v2377, %v2375
    %v2916 = vpack.c.b16 %v2380, %v2378
    %v2917 = vpack.c.b16 %v2381, %v2379
    %v2918 = vpack.c.b16 %v2384, %v2382
    %v2919 = vpack.c.b16 %v2385, %v2383
    %v2920 = vpack.c.b16 %v2388, %v2386
    %v2921 = vpack.c.b16 %v2389, %v2387
    %v2922 = vpack.c.b16 %v2392, %v2390
    %v2923 = vpack.c.b16 %v2393, %v2391
    %v2924 = vpack.c.b16 %v2396, %v2394
    %v2925 = vpack.c.b16 %v2397, %v2395
    %v2926 = vpack.c.b16 %v2400, %v2398
    %v2927 = vpack.c.b16 %v2401, %v2399
    %v2928 = vpack.c.b16 %v2404, %v2402
    %v2929 = vpack.c.b16 %v2405, %v2403
    %v2930 = vpack.c.b16 %v2408, %v2406
    %v2931 = vpack.c.b16 %v2409, %v2407
    %v2932 = vpack.c.b16 %v2412, %v2410
    %v2933 = vpack.c.b16 %v2413, %v2411
    %v2934 = vpack.c.b16 %v2416, %v2414
    %v2935 = vpack.c.b16 %v2417, %v2415
    %v2936 = vpack.c.b16 %v2420, %v2418
    %v2937 = vpack.c.b16 %v2421, %v2419
    %v2938 = vpack.c.b16 %v2424, %v2422
    %v2939 = vpack.c.b16 %v2425, %v2423
    %v2940 = vpack.c.b16 %v2428, %v2426
    %v2941 = vpack.c.b16 %v2429, %v2427
    %3454 = vmatprep.subr.bf16.mxu0 %v2431
    %3455 = vmatpush1.bf16.msra.mxu0 %v2430
    %3456 = vmatprep.subr.bf16.mxu0 %v2433
    %3457 = vmatpush1.bf16.msra.mxu0 %v2432
    %3458 = vmatprep.subr.bf16.mxu0 %v2435
    %3459 = vmatpush1.bf16.msra.mxu0 %v2434
    %3460 = vmatprep.subr.bf16.mxu0 %v2437
    %3461 = vmatpush1.bf16.msra.mxu0 %v2436
    %3462 = vmatprep.subr.bf16.mxu0 %v2439
    %3463 = vmatpush1.bf16.msra.mxu0 %v2438
    %3464 = vmatprep.subr.bf16.mxu0 %v2441
    %3465 = vmatpush1.bf16.msra.mxu0 %v2440
    %3466 = vmatprep.subr.bf16.mxu0 %v2443
    %3467 = vmatpush1.bf16.msra.mxu0 %v2442
    %3468 = vmatprep.subr.bf16.mxu0 %v2445
    %3469 = vmatpush1.bf16.msra.mxu0 %v2444
    %3470 = vmatprep.subr.bf16.mxu0 %v2447
    %3471 = vmatpush1.bf16.msra.mxu0 %v2446
    %3472 = vmatprep.subr.bf16.mxu0 %v2449
    %3473 = vmatpush1.bf16.msra.mxu0 %v2448
    %3474 = vmatprep.subr.bf16.mxu0 %v2451
    %3475 = vmatpush1.bf16.msra.mxu0 %v2450
    %3476 = vmatprep.subr.bf16.mxu0 %v2453
    %3477 = vmatpush1.bf16.msra.mxu0 %v2452
    %3478 = vmatprep.subr.bf16.mxu0 %v2455
    %3479 = vmatpush1.bf16.msra.mxu0 %v2454
    %3480 = vmatprep.subr.bf16.mxu0 %v2457
    %3481 = vmatpush1.bf16.msra.mxu0 %v2456
    %3482 = vmatprep.subr.bf16.mxu0 %v2459
    %3483 = vmatpush1.bf16.msra.mxu0 %v2458
    %3484 = vmatprep.subr.bf16.mxu0 %v2461
    %3485 = vmatpush1.bf16.msra.mxu0 %v2460
    %3486 = vmatprep.mubr.bf16.mxu0 %v703
    %3487 = vmatmul.mubr.bf16.gmra.mrb[0].mxu0 %v689
    %v3488 = vpop.f32.mrb[0].mxu0
    %v3489 = vadd.f32 %v655, %v3488
    %v3490 = vpop.f32.mrb[0].mxu0
    %v3491 = vadd.f32 %v659, %v3490
    %v3492 = vpop.f32.mrb[0].mxu0
    %v3493 = vpop.f32.mrb[0].mxu0
    %3494 = vdwg.mxu0
    %3495 = vmatprep.subr.bf16.mxu0 %v2463
    %3496 = vmatpush1.bf16.msra.mxu0 %v2462
    %3497 = vmatprep.subr.bf16.mxu0 %v2465
    %3498 = vmatpush1.bf16.msra.mxu0 %v2464
    %3499 = vmatprep.subr.bf16.mxu0 %v2467
    %3500 = vmatpush1.bf16.msra.mxu0 %v2466
    %3501 = vmatprep.subr.bf16.mxu0 %v2469
    %3502 = vmatpush1.bf16.msra.mxu0 %v2468
    %3503 = vmatprep.subr.bf16.mxu0 %v2471
    %3504 = vmatpush1.bf16.msra.mxu0 %v2470
    %3505 = vmatprep.subr.bf16.mxu0 %v2473
    %3506 = vmatpush1.bf16.msra.mxu0 %v2472
    %3507 = vmatprep.subr.bf16.mxu0 %v2475
    %3508 = vmatpush1.bf16.msra.mxu0 %v2474
    %3509 = vmatprep.subr.bf16.mxu0 %v2477
    %3510 = vmatpush1.bf16.msra.mxu0 %v2476
    %3511 = vmatprep.subr.bf16.mxu0 %v2479
    %3512 = vmatpush1.bf16.msra.mxu0 %v2478
    %3513 = vmatprep.subr.bf16.mxu0 %v2481
    %3514 = vmatpush1.bf16.msra.mxu0 %v2480
    %3515 = vmatprep.subr.bf16.mxu0 %v2483
    %3516 = vmatpush1.bf16.msra.mxu0 %v2482
    %3517 = vmatprep.subr.bf16.mxu0 %v2485
    %3518 = vmatpush1.bf16.msra.mxu0 %v2484
    %3519 = vmatprep.subr.bf16.mxu0 %v2487
    %3520 = vmatpush1.bf16.msra.mxu0 %v2486
    %3521 = vmatprep.subr.bf16.mxu0 %v2489
    %3522 = vmatpush1.bf16.msra.mxu0 %v2488
    %3523 = vmatprep.subr.bf16.mxu0 %v2491
    %3524 = vmatpush1.bf16.msra.mxu0 %v2490
    %3525 = vmatprep.subr.bf16.mxu0 %v2493
    %3526 = vmatpush1.bf16.msra.mxu0 %v2492
    %3527 = vmatprep.mubr.bf16.mxu0 %v713
    %3528 = vmatmul.mubr.bf16.gmra.mrb[0].mxu0 %v711
    %v3529 = vpop.f32.mrb[0].mxu0
    %v3530 = vadd.f32 %v3489, %v3529
    %v3531 = vpop.f32.mrb[0].mxu0
    %v3532 = vadd.f32 %v3491, %v3531
    %v3533 = vpop.f32.mrb[0].mxu0
    %v3534 = vpop.f32.mrb[0].mxu0
    %3535 = vdwg.mxu0
    %3536 = vmatprep.subr.bf16.mxu0 %v2495
    %3537 = vmatpush1.bf16.msra.mxu0 %v2494
    %3538 = vmatprep.subr.bf16.mxu0 %v2497
    %3539 = vmatpush1.bf16.msra.mxu0 %v2496
    %3540 = vmatprep.subr.bf16.mxu0 %v2499
    %3541 = vmatpush1.bf16.msra.mxu0 %v2498
    %3542 = vmatprep.subr.bf16.mxu0 %v2501
    %3543 = vmatpush1.bf16.msra.mxu0 %v2500
    %3544 = vmatprep.subr.bf16.mxu0 %v2503
    %3545 = vmatpush1.bf16.msra.mxu0 %v2502
    %3546 = vmatprep.subr.bf16.mxu0 %v2505
    %3547 = vmatpush1.bf16.msra.mxu0 %v2504
    %3548 = vmatprep.subr.bf16.mxu0 %v2507
    %3549 = vmatpush1.bf16.msra.mxu0 %v2506
    %3550 = vmatprep.subr.bf16.mxu0 %v2509
    %3551 = vmatpush1.bf16.msra.mxu0 %v2508
    %3552 = vmatprep.subr.bf16.mxu0 %v2511
    %3553 = vmatpush1.bf16.msra.mxu0 %v2510
    %3554 = vmatprep.subr.bf16.mxu0 %v2513
    %3555 = vmatpush1.bf16.msra.mxu0 %v2512
    %3556 = vmatprep.subr.bf16.mxu0 %v2515
    %3557 = vmatpush1.bf16.msra.mxu0 %v2514
    %3558 = vmatprep.subr.bf16.mxu0 %v2517
    %3559 = vmatpush1.bf16.msra.mxu0 %v2516
    %3560 = vmatprep.subr.bf16.mxu0 %v2519
    %3561 = vmatpush1.bf16.msra.mxu0 %v2518
    %3562 = vmatprep.subr.bf16.mxu0 %v2521
    %3563 = vmatpush1.bf16.msra.mxu0 %v2520
    %3564 = vmatprep.subr.bf16.mxu0 %v2523
    %3565 = vmatpush1.bf16.msra.mxu0 %v2522
    %3566 = vmatprep.subr.bf16.mxu0 %v2525
    %3567 = vmatpush1.bf16.msra.mxu0 %v2524
    %3568 = vmatprep.mubr.bf16.mxu0 %v710
    %3569 = vmatmul.mubr.bf16.gmra.mrb[0].mxu0 %v696
    %v3570 = vpop.f32.mrb[0].mxu0
    %v3571 = vadd.f32 %v3530, %v3570
    %v3572 = vpop.f32.mrb[0].mxu0
    %v3573 = vadd.f32 %v3532, %v3572
    %v3574 = vpop.f32.mrb[0].mxu0
    %v3575 = vpop.f32.mrb[0].mxu0
    %3576 = vdwg.mxu0
    %3577 = vmatprep.subr.bf16.mxu0 %v2527
    %3578 = vmatpush1.bf16.msra.mxu0 %v2526
    %3579 = vmatprep.subr.bf16.mxu0 %v2529
    %3580 = vmatpush1.bf16.msra.mxu0 %v2528
    %3581 = vmatprep.subr.bf16.mxu0 %v2531
    %3582 = vmatpush1.bf16.msra.mxu0 %v2530
    %3583 = vmatprep.subr.bf16.mxu0 %v2533
    %3584 = vmatpush1.bf16.msra.mxu0 %v2532
    %3585 = vmatprep.subr.bf16.mxu0 %v2535
    %3586 = vmatpush1.bf16.msra.mxu0 %v2534
    %3587 = vmatprep.subr.bf16.mxu0 %v2537
    %3588 = vmatpush1.bf16.msra.mxu0 %v2536
    %3589 = vmatprep.subr.bf16.mxu0 %v2539
    %3590 = vmatpush1.bf16.msra.mxu0 %v2538
    %3591 = vmatprep.subr.bf16.mxu0 %v2541
    %3592 = vmatpush1.bf16.msra.mxu0 %v2540
    %3593 = vmatprep.subr.bf16.mxu0 %v2543
    %3594 = vmatpush1.bf16.msra.mxu0 %v2542
    %3595 = vmatprep.subr.bf16.mxu0 %v2545
    %3596 = vmatpush1.bf16.msra.mxu0 %v2544
    %3597 = vmatprep.subr.bf16.mxu0 %v2547
    %3598 = vmatpush1.bf16.msra.mxu0 %v2546
    %3599 = vmatprep.subr.bf16.mxu0 %v2549
    %3600 = vmatpush1.bf16.msra.mxu0 %v2548
    %3601 = vmatprep.subr.bf16.mxu0 %v2551
    %3602 = vmatpush1.bf16.msra.mxu0 %v2550
    %3603 = vmatprep.subr.bf16.mxu0 %v2553
    %3604 = vmatpush1.bf16.msra.mxu0 %v2552
    %3605 = vmatprep.subr.bf16.mxu0 %v2555
    %3606 = vmatpush1.bf16.msra.mxu0 %v2554
    %3607 = vmatprep.subr.bf16.mxu0 %v2557
    %3608 = vmatpush1.bf16.msra.mxu0 %v2556
    %3609 = vmatprep.mubr.bf16.mxu0 %v714
    %3610 = vmatmul.mubr.bf16.gmra.mrb[0].mxu0 %v712
    %v3611 = vpop.f32.mrb[0].mxu0
    %v3612 = vadd.f32 %v3571, %v3611
    %v3613 = vpop.f32.mrb[0].mxu0
    %v3614 = vadd.f32 %v3573, %v3613
    %v3615 = vpop.f32.mrb[0].mxu0
    %v3616 = vpop.f32.mrb[0].mxu0
    %3617 = vdwg.mxu0
    %3618 = vmatprep.subr.bf16.mxu0 %v2559
    %3619 = vmatpush1.bf16.msra.mxu0 %v2558
    %3620 = vmatprep.subr.bf16.mxu0 %v2561
    %3621 = vmatpush1.bf16.msra.mxu0 %v2560
    %3622 = vmatprep.subr.bf16.mxu0 %v2563
    %3623 = vmatpush1.bf16.msra.mxu0 %v2562
    %3624 = vmatprep.subr.bf16.mxu0 %v2565
    %3625 = vmatpush1.bf16.msra.mxu0 %v2564
    %3626 = vmatprep.subr.bf16.mxu0 %v2567
    %3627 = vmatpush1.bf16.msra.mxu0 %v2566
    %3628 = vmatprep.subr.bf16.mxu0 %v2569
    %3629 = vmatpush1.bf16.msra.mxu0 %v2568
    %3630 = vmatprep.subr.bf16.mxu0 %v2571
    %3631 = vmatpush1.bf16.msra.mxu0 %v2570
    %3632 = vmatprep.subr.bf16.mxu0 %v2573
    %3633 = vmatpush1.bf16.msra.mxu0 %v2572
    %3634 = vmatprep.subr.bf16.mxu0 %v2575
    %3635 = vmatpush1.bf16.msra.mxu0 %v2574
    %3636 = vmatprep.subr.bf16.mxu0 %v2577
    %3637 = vmatpush1.bf16.msra.mxu0 %v2576
    %3638 = vmatprep.subr.bf16.mxu0 %v2579
    %3639 = vmatpush1.bf16.msra.mxu0 %v2578
    %3640 = vmatprep.subr.bf16.mxu0 %v2581
    %3641 = vmatpush1.bf16.msra.mxu0 %v2580
    %3642 = vmatprep.subr.bf16.mxu0 %v2583
    %3643 = vmatpush1.bf16.msra.mxu0 %v2582
    %3644 = vmatprep.subr.bf16.mxu0 %v2585
    %3645 = vmatpush1.bf16.msra.mxu0 %v2584
    %3646 = vmatprep.subr.bf16.mxu0 %v2587
    %3647 = vmatpush1.bf16.msra.mxu0 %v2586
    %3648 = vmatprep.subr.bf16.mxu0 %v2589
    %3649 = vmatpush1.bf16.msra.mxu0 %v2588
    %3650 = vmatprep.mubr.bf16.mxu0 %v752
    %3651 = vmatmul.mubr.bf16.gmra.mrb[0].mxu0 %v738
    %v3652 = vpop.f32.mrb[0].mxu0
    %v3653 = vadd.f32 %v3612, %v3652
    %v3654 = vpop.f32.mrb[0].mxu0
    %v3655 = vadd.f32 %v3614, %v3654
    %v3656 = vpop.f32.mrb[0].mxu0
    %v3657 = vpop.f32.mrb[0].mxu0
    %3658 = vdwg.mxu0
    %3659 = vmatprep.subr.bf16.mxu0 %v2591
    %3660 = vmatpush1.bf16.msra.mxu0 %v2590
    %3661 = vmatprep.subr.bf16.mxu0 %v2593
    %3662 = vmatpush1.bf16.msra.mxu0 %v2592
    %3663 = vmatprep.subr.bf16.mxu0 %v2595
    %3664 = vmatpush1.bf16.msra.mxu0 %v2594
    %3665 = vmatprep.subr.bf16.mxu0 %v2597
    %3666 = vmatpush1.bf16.msra.mxu0 %v2596
    %3667 = vmatprep.subr.bf16.mxu0 %v2599
    %3668 = vmatpush1.bf16.msra.mxu0 %v2598
    %3669 = vmatprep.subr.bf16.mxu0 %v2601
    %3670 = vmatpush1.bf16.msra.mxu0 %v2600
    %3671 = vmatprep.subr.bf16.mxu0 %v2603
    %3672 = vmatpush1.bf16.msra.mxu0 %v2602
    %3673 = vmatprep.subr.bf16.mxu0 %v2605
    %3674 = vmatpush1.bf16.msra.mxu0 %v2604
    %3675 = vmatprep.subr.bf16.mxu0 %v2607
    %3676 = vmatpush1.bf16.msra.mxu0 %v2606
    %3677 = vmatprep.subr.bf16.mxu0 %v2609
    %3678 = vmatpush1.bf16.msra.mxu0 %v2608
    %3679 = vmatprep.subr.bf16.mxu0 %v2611
    %3680 = vmatpush1.bf16.msra.mxu0 %v2610
    %3681 = vmatprep.subr.bf16.mxu0 %v2613
    %3682 = vmatpush1.bf16.msra.mxu0 %v2612
    %3683 = vmatprep.subr.bf16.mxu0 %v2615
    %3684 = vmatpush1.bf16.msra.mxu0 %v2614
    %3685 = vmatprep.subr.bf16.mxu0 %v2617
    %3686 = vmatpush1.bf16.msra.mxu0 %v2616
    %3687 = vmatprep.subr.bf16.mxu0 %v2619
    %3688 = vmatpush1.bf16.msra.mxu0 %v2618
    %3689 = vmatprep.subr.bf16.mxu0 %v2621
    %3690 = vmatpush1.bf16.msra.mxu0 %v2620
    %3691 = vmatprep.mubr.bf16.mxu0 %v762
    %3692 = vmatmul.mubr.bf16.gmra.mrb[0].mxu0 %v760
    %v3693 = vpop.f32.mrb[0].mxu0
    %v3694 = vadd.f32 %v3653, %v3693
    %v3695 = vpop.f32.mrb[0].mxu0
    %v3696 = vadd.f32 %v3655, %v3695
    %v3697 = vpop.f32.mrb[0].mxu0
    %v3698 = vpop.f32.mrb[0].mxu0
    %3699 = vdwg.mxu0
    %3700 = vmatprep.subr.bf16.mxu0 %v2623
    %3701 = vmatpush1.bf16.msra.mxu0 %v2622
    %3702 = vmatprep.subr.bf16.mxu0 %v2625
    %3703 = vmatpush1.bf16.msra.mxu0 %v2624
    %3704 = vmatprep.subr.bf16.mxu0 %v2627
    %3705 = vmatpush1.bf16.msra.mxu0 %v2626
    %3706 = vmatprep.subr.bf16.mxu0 %v2629
    %3707 = vmatpush1.bf16.msra.mxu0 %v2628
    %3708 = vmatprep.subr.bf16.mxu0 %v2631
    %3709 = vmatpush1.bf16.msra.mxu0 %v2630
    %3710 = vmatprep.subr.bf16.mxu0 %v2633
    %3711 = vmatpush1.bf16.msra.mxu0 %v2632
    %3712 = vmatprep.subr.bf16.mxu0 %v2635
    %3713 = vmatpush1.bf16.msra.mxu0 %v2634
    %3714 = vmatprep.subr.bf16.mxu0 %v2637
    %3715 = vmatpush1.bf16.msra.mxu0 %v2636
    %3716 = vmatprep.subr.bf16.mxu0 %v2639
    %3717 = vmatpush1.bf16.msra.mxu0 %v2638
    %3718 = vmatprep.subr.bf16.mxu0 %v2641
    %3719 = vmatpush1.bf16.msra.mxu0 %v2640
    %3720 = vmatprep.subr.bf16.mxu0 %v2643
    %3721 = vmatpush1.bf16.msra.mxu0 %v2642
    %3722 = vmatprep.subr.bf16.mxu0 %v2645
    %3723 = vmatpush1.bf16.msra.mxu0 %v2644
    %3724 = vmatprep.subr.bf16.mxu0 %v2647
    %3725 = vmatpush1.bf16.msra.mxu0 %v2646
    %3726 = vmatprep.subr.bf16.mxu0 %v2649
    %3727 = vmatpush1.bf16.msra.mxu0 %v2648
    %3728 = vmatprep.subr.bf16.mxu0 %v2651
    %3729 = vmatpush1.bf16.msra.mxu0 %v2650
    %3730 = vmatprep.subr.bf16.mxu0 %v2653
    %3731 = vmatpush1.bf16.msra.mxu0 %v2652
    %3732 = vmatprep.mubr.bf16.mxu0 %v759
    %3733 = vmatmul.mubr.bf16.gmra.mrb[0].mxu0 %v745
    %v3734 = vpop.f32.mrb[0].mxu0
    %v3735 = vadd.f32 %v3694, %v3734
    %v3736 = vpop.f32.mrb[0].mxu0
    %v3737 = vadd.f32 %v3696, %v3736
    %v3738 = vpop.f32.mrb[0].mxu0
    %v3739 = vpop.f32.mrb[0].mxu0
    %3740 = vdwg.mxu0
    %3741 = vmatprep.subr.bf16.mxu0 %v2655
    %3742 = vmatpush1.bf16.msra.mxu0 %v2654
    %3743 = vmatprep.subr.bf16.mxu0 %v2657
    %3744 = vmatpush1.bf16.msra.mxu0 %v2656
    %3745 = vmatprep.subr.bf16.mxu0 %v2659
    %3746 = vmatpush1.bf16.msra.mxu0 %v2658
    %3747 = vmatprep.subr.bf16.mxu0 %v2661
    %3748 = vmatpush1.bf16.msra.mxu0 %v2660
    %3749 = vmatprep.subr.bf16.mxu0 %v2663
    %3750 = vmatpush1.bf16.msra.mxu0 %v2662
    %3751 = vmatprep.subr.bf16.mxu0 %v2665
    %3752 = vmatpush1.bf16.msra.mxu0 %v2664
    %3753 = vmatprep.subr.bf16.mxu0 %v2667
    %3754 = vmatpush1.bf16.msra.mxu0 %v2666
    %3755 = vmatprep.subr.bf16.mxu0 %v2669
    %3756 = vmatpush1.bf16.msra.mxu0 %v2668
    %3757 = vmatprep.subr.bf16.mxu0 %v2671
    %3758 = vmatpush1.bf16.msra.mxu0 %v2670
    %3759 = vmatprep.subr.bf16.mxu0 %v2673
    %3760 = vmatpush1.bf16.msra.mxu0 %v2672
    %3761 = vmatprep.subr.bf16.mxu0 %v2675
    %3762 = vmatpush1.bf16.msra.mxu0 %v2674
    %3763 = vmatprep.subr.bf16.mxu0 %v2677
    %3764 = vmatpush1.bf16.msra.mxu0 %v2676
    %3765 = vmatprep.subr.bf16.mxu0 %v2679
    %3766 = vmatpush1.bf16.msra.mxu0 %v2678
    %3767 = vmatprep.subr.bf16.mxu0 %v2681
    %3768 = vmatpush1.bf16.msra.mxu0 %v2680
    %3769 = vmatprep.subr.bf16.mxu0 %v2683
    %3770 = vmatpush1.bf16.msra.mxu0 %v2682
    %3771 = vmatprep.subr.bf16.mxu0 %v2685
    %3772 = vmatpush1.bf16.msra.mxu0 %v2684
    %3773 = vmatprep.mubr.bf16.mxu0 %v763
    %3774 = vmatmul.mubr.bf16.gmra.mrb[0].mxu0 %v761
    %v3775 = vpop.f32.mrb[0].mxu0
    %v3776 = vadd.f32 %v3735, %v3775
    %v3777 = vpop.f32.mrb[0].mxu0
    %v3778 = vadd.f32 %v3737, %v3777
    %v3779 = vpop.f32.mrb[0].mxu0
    %v3780 = vpop.f32.mrb[0].mxu0
    %3781 = vdwg.mxu0
    %3782 = vmatprep.subr.bf16.mxu0 %v2687
    %3783 = vmatpush1.bf16.msra.mxu0 %v2686
    %3784 = vmatprep.subr.bf16.mxu0 %v2689
    %3785 = vmatpush1.bf16.msra.mxu0 %v2688
    %3786 = vmatprep.subr.bf16.mxu0 %v2691
    %3787 = vmatpush1.bf16.msra.mxu0 %v2690
    %3788 = vmatprep.subr.bf16.mxu0 %v2693
    %3789 = vmatpush1.bf16.msra.mxu0 %v2692
    %3790 = vmatprep.subr.bf16.mxu0 %v2695
    %3791 = vmatpush1.bf16.msra.mxu0 %v2694
    %3792 = vmatprep.subr.bf16.mxu0 %v2697
    %3793 = vmatpush1.bf16.msra.mxu0 %v2696
    %3794 = vmatprep.subr.bf16.mxu0 %v2699
    %3795 = vmatpush1.bf16.msra.mxu0 %v2698
    %3796 = vmatprep.subr.bf16.mxu0 %v2701
    %3797 = vmatpush1.bf16.msra.mxu0 %v2700
    %3798 = vmatprep.subr.bf16.mxu0 %v2703
    %3799 = vmatpush1.bf16.msra.mxu0 %v2702
    %3800 = vmatprep.subr.bf16.mxu0 %v2705
    %3801 = vmatpush1.bf16.msra.mxu0 %v2704
    %3802 = vmatprep.subr.bf16.mxu0 %v2707
    %3803 = vmatpush1.bf16.msra.mxu0 %v2706
    %3804 = vmatprep.subr.bf16.mxu0 %v2709
    %3805 = vmatpush1.bf16.msra.mxu0 %v2708
    %3806 = vmatprep.subr.bf16.mxu0 %v2711
    %3807 = vmatpush1.bf16.msra.mxu0 %v2710
    %3808 = vmatprep.subr.bf16.mxu0 %v2713
    %3809 = vmatpush1.bf16.msra.mxu0 %v2712
    %3810 = vmatprep.subr.bf16.mxu0 %v2715
    %3811 = vmatpush1.bf16.msra.mxu0 %v2714
    %3812 = vmatprep.subr.bf16.mxu0 %v2717
    %3813 = vmatpush1.bf16.msra.mxu0 %v2716
    %3814 = vmatprep.mubr.bf16.mxu0 %v801
    %3815 = vmatmul.mubr.bf16.gmra.mrb[0].mxu0 %v787
    %v3816 = vpop.f32.mrb[0].mxu0
    %v3817 = vadd.f32 %v3776, %v3816
    %v3818 = vpop.f32.mrb[0].mxu0
    %v3819 = vadd.f32 %v3778, %v3818
    %v3820 = vpop.f32.mrb[0].mxu0
    %v3821 = vpop.f32.mrb[0].mxu0
    %3822 = vdwg.mxu0
    %3823 = vmatprep.subr.bf16.mxu0 %v2719
    %3824 = vmatpush1.bf16.msra.mxu0 %v2718
    %3825 = vmatprep.subr.bf16.mxu0 %v2721
    %3826 = vmatpush1.bf16.msra.mxu0 %v2720
    %3827 = vmatprep.subr.bf16.mxu0 %v2723
    %3828 = vmatpush1.bf16.msra.mxu0 %v2722
    %3829 = vmatprep.subr.bf16.mxu0 %v2725
    %3830 = vmatpush1.bf16.msra.mxu0 %v2724
    %3831 = vmatprep.subr.bf16.mxu0 %v2727
    %3832 = vmatpush1.bf16.msra.mxu0 %v2726
    %3833 = vmatprep.subr.bf16.mxu0 %v2729
    %3834 = vmatpush1.bf16.msra.mxu0 %v2728
    %3835 = vmatprep.subr.bf16.mxu0 %v2731
    %3836 = vmatpush1.bf16.msra.mxu0 %v2730
    %3837 = vmatprep.subr.bf16.mxu0 %v2733
    %3838 = vmatpush1.bf16.msra.mxu0 %v2732
    %3839 = vmatprep.subr.bf16.mxu0 %v2735
    %3840 = vmatpush1.bf16.msra.mxu0 %v2734
    %3841 = vmatprep.subr.bf16.mxu0 %v2737
    %3842 = vmatpush1.bf16.msra.mxu0 %v2736
    %3843 = vmatprep.subr.bf16.mxu0 %v2739
    %3844 = vmatpush1.bf16.msra.mxu0 %v2738
    %3845 = vmatprep.subr.bf16.mxu0 %v2741
    %3846 = vmatpush1.bf16.msra.mxu0 %v2740
    %3847 = vmatprep.subr.bf16.mxu0 %v2743
    %3848 = vmatpush1.bf16.msra.mxu0 %v2742
    %3849 = vmatprep.subr.bf16.mxu0 %v2745
    %3850 = vmatpush1.bf16.msra.mxu0 %v2744
    %3851 = vmatprep.subr.bf16.mxu0 %v2747
    %3852 = vmatpush1.bf16.msra.mxu0 %v2746
    %3853 = vmatprep.subr.bf16.mxu0 %v2749
    %3854 = vmatpush1.bf16.msra.mxu0 %v2748
    %3855 = vmatprep.mubr.bf16.mxu0 %v811
    %3856 = vmatmul.mubr.bf16.gmra.mrb[0].mxu0 %v809
    %v3857 = vpop.f32.mrb[0].mxu0
    %v3858 = vadd.f32 %v3817, %v3857
    %v3859 = vpop.f32.mrb[0].mxu0
    %v3860 = vadd.f32 %v3819, %v3859
    %v3861 = vpop.f32.mrb[0].mxu0
    %v3862 = vpop.f32.mrb[0].mxu0
    %3863 = vdwg.mxu0
    %3864 = vmatprep.subr.bf16.mxu0 %v2751
    %3865 = vmatpush1.bf16.msra.mxu0 %v2750
    %3866 = vmatprep.subr.bf16.mxu0 %v2753
    %3867 = vmatpush1.bf16.msra.mxu0 %v2752
    %3868 = vmatprep.subr.bf16.mxu0 %v2755
    %3869 = vmatpush1.bf16.msra.mxu0 %v2754
    %3870 = vmatprep.subr.bf16.mxu0 %v2757
    %3871 = vmatpush1.bf16.msra.mxu0 %v2756
    %3872 = vmatprep.subr.bf16.mxu0 %v2759
    %3873 = vmatpush1.bf16.msra.mxu0 %v2758
    %3874 = vmatprep.subr.bf16.mxu0 %v2761
    %3875 = vmatpush1.bf16.msra.mxu0 %v2760
    %3876 = vmatprep.subr.bf16.mxu0 %v2763
    %3877 = vmatpush1.bf16.msra.mxu0 %v2762
    %3878 = vmatprep.subr.bf16.mxu0 %v2765
    %3879 = vmatpush1.bf16.msra.mxu0 %v2764
    %3880 = vmatprep.subr.bf16.mxu0 %v2767
    %3881 = vmatpush1.bf16.msra.mxu0 %v2766
    %3882 = vmatprep.subr.bf16.mxu0 %v2769
    %3883 = vmatpush1.bf16.msra.mxu0 %v2768
    %3884 = vmatprep.subr.bf16.mxu0 %v2771
    %3885 = vmatpush1.bf16.msra.mxu0 %v2770
    %3886 = vmatprep.subr.bf16.mxu0 %v2773
    %3887 = vmatpush1.bf16.msra.mxu0 %v2772
    %3888 = vmatprep.subr.bf16.mxu0 %v2775
    %3889 = vmatpush1.bf16.msra.mxu0 %v2774
    %3890 = vmatprep.subr.bf16.mxu0 %v2777
    %3891 = vmatpush1.bf16.msra.mxu0 %v2776
    %3892 = vmatprep.subr.bf16.mxu0 %v2779
    %3893 = vmatpush1.bf16.msra.mxu0 %v2778
    %3894 = vmatprep.subr.bf16.mxu0 %v2781
    %3895 = vmatpush1.bf16.msra.mxu0 %v2780
    %3896 = vmatprep.mubr.bf16.mxu0 %v808
    %3897 = vmatmul.mubr.bf16.gmra.mrb[0].mxu0 %v794
    %v3898 = vpop.f32.mrb[0].mxu0
    %v3899 = vadd.f32 %v3858, %v3898
    %v3900 = vpop.f32.mrb[0].mxu0
    %v3901 = vadd.f32 %v3860, %v3900
    %v3902 = vpop.f32.mrb[0].mxu0
    %v3903 = vpop.f32.mrb[0].mxu0
    %3904 = vdwg.mxu0
    %3905 = vmatprep.subr.bf16.mxu0 %v2783
    %3906 = vmatpush1.bf16.msra.mxu0 %v2782
    %3907 = vmatprep.subr.bf16.mxu0 %v2785
    %3908 = vmatpush1.bf16.msra.mxu0 %v2784
    %3909 = vmatprep.subr.bf16.mxu0 %v2787
    %3910 = vmatpush1.bf16.msra.mxu0 %v2786
    %3911 = vmatprep.subr.bf16.mxu0 %v2789
    %3912 = vmatpush1.bf16.msra.mxu0 %v2788
    %3913 = vmatprep.subr.bf16.mxu0 %v2791
    %3914 = vmatpush1.bf16.msra.mxu0 %v2790
    %3915 = vmatprep.subr.bf16.mxu0 %v2793
    %3916 = vmatpush1.bf16.msra.mxu0 %v2792
    %3917 = vmatprep.subr.bf16.mxu0 %v2795
    %3918 = vmatpush1.bf16.msra.mxu0 %v2794
    %3919 = vmatprep.subr.bf16.mxu0 %v2797
    %3920 = vmatpush1.bf16.msra.mxu0 %v2796
    %3921 = vmatprep.subr.bf16.mxu0 %v2799
    %3922 = vmatpush1.bf16.msra.mxu0 %v2798
    %3923 = vmatprep.subr.bf16.mxu0 %v2801
    %3924 = vmatpush1.bf16.msra.mxu0 %v2800
    %3925 = vmatprep.subr.bf16.mxu0 %v2803
    %3926 = vmatpush1.bf16.msra.mxu0 %v2802
    %3927 = vmatprep.subr.bf16.mxu0 %v2805
    %3928 = vmatpush1.bf16.msra.mxu0 %v2804
    %3929 = vmatprep.subr.bf16.mxu0 %v2807
    %3930 = vmatpush1.bf16.msra.mxu0 %v2806
    %3931 = vmatprep.subr.bf16.mxu0 %v2809
    %3932 = vmatpush1.bf16.msra.mxu0 %v2808
    %3933 = vmatprep.subr.bf16.mxu0 %v2811
    %3934 = vmatpush1.bf16.msra.mxu0 %v2810
    %3935 = vmatprep.subr.bf16.mxu0 %v2813
    %3936 = vmatpush1.bf16.msra.mxu0 %v2812
    %3937 = vmatprep.mubr.bf16.mxu0 %v812
    %3938 = vmatmul.mubr.bf16.gmra.mrb[0].mxu0 %v810
    %v3939 = vpop.f32.mrb[0].mxu0
    %v3940 = vadd.f32 %v3899, %v3939
    %v3941 = vpop.f32.mrb[0].mxu0
    %v3942 = vadd.f32 %v3901, %v3941
    %v3943 = vpop.f32.mrb[0].mxu0
    %v3944 = vpop.f32.mrb[0].mxu0
    %3945 = vdwg.mxu0
    %3946 = vmatprep.subr.bf16.mxu0 %v2815
    %3947 = vmatpush1.bf16.msra.mxu0 %v2814
    %3948 = vmatprep.subr.bf16.mxu0 %v2817
    %3949 = vmatpush1.bf16.msra.mxu0 %v2816
    %3950 = vmatprep.subr.bf16.mxu0 %v2819
    %3951 = vmatpush1.bf16.msra.mxu0 %v2818
    %3952 = vmatprep.subr.bf16.mxu0 %v2821
    %3953 = vmatpush1.bf16.msra.mxu0 %v2820
    %3954 = vmatprep.subr.bf16.mxu0 %v2823
    %3955 = vmatpush1.bf16.msra.mxu0 %v2822
    %3956 = vmatprep.subr.bf16.mxu0 %v2825
    %3957 = vmatpush1.bf16.msra.mxu0 %v2824
    %3958 = vmatprep.subr.bf16.mxu0 %v2827
    %3959 = vmatpush1.bf16.msra.mxu0 %v2826
    %3960 = vmatprep.subr.bf16.mxu0 %v2829
    %3961 = vmatpush1.bf16.msra.mxu0 %v2828
    %3962 = vmatprep.subr.bf16.mxu0 %v2831
    %3963 = vmatpush1.bf16.msra.mxu0 %v2830
    %3964 = vmatprep.subr.bf16.mxu0 %v2833
    %3965 = vmatpush1.bf16.msra.mxu0 %v2832
    %3966 = vmatprep.subr.bf16.mxu0 %v2835
    %3967 = vmatpush1.bf16.msra.mxu0 %v2834
    %3968 = vmatprep.subr.bf16.mxu0 %v2837
    %3969 = vmatpush1.bf16.msra.mxu0 %v2836
    %3970 = vmatprep.subr.bf16.mxu0 %v2839
    %3971 = vmatpush1.bf16.msra.mxu0 %v2838
    %3972 = vmatprep.subr.bf16.mxu0 %v2841
    %3973 = vmatpush1.bf16.msra.mxu0 %v2840
    %3974 = vmatprep.subr.bf16.mxu0 %v2843
    %3975 = vmatpush1.bf16.msra.mxu0 %v2842
    %3976 = vmatprep.subr.bf16.mxu0 %v2845
    %3977 = vmatpush1.bf16.msra.mxu0 %v2844
    %3978 = vmatprep.mubr.bf16.mxu0 %v850
    %3979 = vmatmul.mubr.bf16.gmra.mrb[0].mxu0 %v836
    %v3980 = vpop.f32.mrb[0].mxu0
    %v3981 = vadd.f32 %v3940, %v3980
    %v3982 = vpop.f32.mrb[0].mxu0
    %v3983 = vadd.f32 %v3942, %v3982
    %v3984 = vpop.f32.mrb[0].mxu0
    %v3985 = vpop.f32.mrb[0].mxu0
    %3986 = vdwg.mxu0
    %3987 = vmatprep.subr.bf16.mxu0 %v2847
    %3988 = vmatpush1.bf16.msra.mxu0 %v2846
    %3989 = vmatprep.subr.bf16.mxu0 %v2849
    %3990 = vmatpush1.bf16.msra.mxu0 %v2848
    %3991 = vmatprep.subr.bf16.mxu0 %v2851
    %3992 = vmatpush1.bf16.msra.mxu0 %v2850
    %3993 = vmatprep.subr.bf16.mxu0 %v2853
    %3994 = vmatpush1.bf16.msra.mxu0 %v2852
    %3995 = vmatprep.subr.bf16.mxu0 %v2855
    %3996 = vmatpush1.bf16.msra.mxu0 %v2854
    %3997 = vmatprep.subr.bf16.mxu0 %v2857
    %3998 = vmatpush1.bf16.msra.mxu0 %v2856
    %3999 = vmatprep.subr.bf16.mxu0 %v2859
    %4000 = vmatpush1.bf16.msra.mxu0 %v2858
    %4001 = vmatprep.subr.bf16.mxu0 %v2861
    %4002 = vmatpush1.bf16.msra.mxu0 %v2860
    %4003 = vmatprep.subr.bf16.mxu0 %v2863
    %4004 = vmatpush1.bf16.msra.mxu0 %v2862
    %4005 = vmatprep.subr.bf16.mxu0 %v2865
    %4006 = vmatpush1.bf16.msra.mxu0 %v2864
    %4007 = vmatprep.subr.bf16.mxu0 %v2867
    %4008 = vmatpush1.bf16.msra.mxu0 %v2866
    %4009 = vmatprep.subr.bf16.mxu0 %v2869
    %4010 = vmatpush1.bf16.msra.mxu0 %v2868
    %4011 = vmatprep.subr.bf16.mxu0 %v2871
    %4012 = vmatpush1.bf16.msra.mxu0 %v2870
    %4013 = vmatprep.subr.bf16.mxu0 %v2873
    %4014 = vmatpush1.bf16.msra.mxu0 %v2872
    %4015 = vmatprep.subr.bf16.mxu0 %v2875
    %4016 = vmatpush1.bf16.msra.mxu0 %v2874
    %4017 = vmatprep.subr.bf16.mxu0 %v2877
    %4018 = vmatpush1.bf16.msra.mxu0 %v2876
    %4019 = vmatprep.mubr.bf16.mxu0 %v860
    %4020 = vmatmul.mubr.bf16.gmra.mrb[0].mxu0 %v858
    %v4021 = vpop.f32.mrb[0].mxu0
    %v4022 = vadd.f32 %v3981, %v4021
    %v4023 = vpop.f32.mrb[0].mxu0
    %v4024 = vadd.f32 %v3983, %v4023
    %v4025 = vpop.f32.mrb[0].mxu0
    %v4026 = vpop.f32.mrb[0].mxu0
    %4027 = vdwg.mxu0
    %4028 = vmatprep.subr.bf16.mxu0 %v2879
    %4029 = vmatpush1.bf16.msra.mxu0 %v2878
    %4030 = vmatprep.subr.bf16.mxu0 %v2881
    %4031 = vmatpush1.bf16.msra.mxu0 %v2880
    %4032 = vmatprep.subr.bf16.mxu0 %v2883
    %4033 = vmatpush1.bf16.msra.mxu0 %v2882
    %4034 = vmatprep.subr.bf16.mxu0 %v2885
    %4035 = vmatpush1.bf16.msra.mxu0 %v2884
    %4036 = vmatprep.subr.bf16.mxu0 %v2887
    %4037 = vmatpush1.bf16.msra.mxu0 %v2886
    %4038 = vmatprep.subr.bf16.mxu0 %v2889
    %4039 = vmatpush1.bf16.msra.mxu0 %v2888
    %4040 = vmatprep.subr.bf16.mxu0 %v2891
    %4041 = vmatpush1.bf16.msra.mxu0 %v2890
    %4042 = vmatprep.subr.bf16.mxu0 %v2893
    %4043 = vmatpush1.bf16.msra.mxu0 %v2892
    %4044 = vmatprep.subr.bf16.mxu0 %v2895
    %4045 = vmatpush1.bf16.msra.mxu0 %v2894
    %4046 = vmatprep.subr.bf16.mxu0 %v2897
    %4047 = vmatpush1.bf16.msra.mxu0 %v2896
    %4048 = vmatprep.subr.bf16.mxu0 %v2899
    %4049 = vmatpush1.bf16.msra.mxu0 %v2898
    %4050 = vmatprep.subr.bf16.mxu0 %v2901
    %4051 = vmatpush1.bf16.msra.mxu0 %v2900
    %4052 = vmatprep.subr.bf16.mxu0 %v2903
    %4053 = vmatpush1.bf16.msra.mxu0 %v2902
    %4054 = vmatprep.subr.bf16.mxu0 %v2905
    %4055 = vmatpush1.bf16.msra.mxu0 %v2904
    %4056 = vmatprep.subr.bf16.mxu0 %v2907
    %4057 = vmatpush1.bf16.msra.mxu0 %v2906
    %4058 = vmatprep.subr.bf16.mxu0 %v2909
    %4059 = vmatpush1.bf16.msra.mxu0 %v2908
    %4060 = vmatprep.mubr.bf16.mxu0 %v857
    %4061 = vmatmul.mubr.bf16.gmra.mrb[0].mxu0 %v843
    %v4062 = vpop.f32.mrb[0].mxu0
    %v4063 = vadd.f32 %v4022, %v4062
    %v4064 = vpop.f32.mrb[0].mxu0
    %v4065 = vadd.f32 %v4024, %v4064
    %v4066 = vpop.f32.mrb[0].mxu0
    %v4067 = vpop.f32.mrb[0].mxu0
    %4068 = vdwg.mxu0
    %4069 = vmatprep.subr.bf16.mxu0 %v2911
    %4070 = vmatpush1.bf16.msra.mxu0 %v2910
    %4071 = vmatprep.subr.bf16.mxu0 %v2913
    %4072 = vmatpush1.bf16.msra.mxu0 %v2912
    %4073 = vmatprep.subr.bf16.mxu0 %v2915
    %4074 = vmatpush1.bf16.msra.mxu0 %v2914
    %4075 = vmatprep.subr.bf16.mxu0 %v2917
    %4076 = vmatpush1.bf16.msra.mxu0 %v2916
    %4077 = vmatprep.subr.bf16.mxu0 %v2919
    %4078 = vmatpush1.bf16.msra.mxu0 %v2918
    %4079 = vmatprep.subr.bf16.mxu0 %v2921
    %4080 = vmatpush1.bf16.msra.mxu0 %v2920
    %4081 = vmatprep.subr.bf16.mxu0 %v2923
    %4082 = vmatpush1.bf16.msra.mxu0 %v2922
    %4083 = vmatprep.subr.bf16.mxu0 %v2925
    %4084 = vmatpush1.bf16.msra.mxu0 %v2924
    %4085 = vmatprep.subr.bf16.mxu0 %v2927
    %4086 = vmatpush1.bf16.msra.mxu0 %v2926
    %4087 = vmatprep.subr.bf16.mxu0 %v2929
    %4088 = vmatpush1.bf16.msra.mxu0 %v2928
    %4089 = vmatprep.subr.bf16.mxu0 %v2931
    %4090 = vmatpush1.bf16.msra.mxu0 %v2930
    %4091 = vmatprep.subr.bf16.mxu0 %v2933
    %4092 = vmatpush1.bf16.msra.mxu0 %v2932
    %4093 = vmatprep.subr.bf16.mxu0 %v2935
    %4094 = vmatpush1.bf16.msra.mxu0 %v2934
    %4095 = vmatprep.subr.bf16.mxu0 %v2937
    %4096 = vmatpush1.bf16.msra.mxu0 %v2936
    %4097 = vmatprep.subr.bf16.mxu0 %v2939
    %4098 = vmatpush1.bf16.msra.mxu0 %v2938
    %4099 = vmatprep.subr.bf16.mxu0 %v2941
    %4100 = vmatpush1.bf16.msra.mxu0 %v2940
    %4101 = vmatprep.mubr.bf16.mxu0 %v861
    %4102 = vmatmul.mubr.bf16.gmra.mrb[0].mxu0 %v859
    %v4103 = vpop.f32.mrb[0].mxu0
    %v4104 = vadd.f32 %v4063, %v4103
    %v4105 = vpop.f32.mrb[0].mxu0
    %v4106 = vadd.f32 %v4065, %v4105
    %v4107 = vpop.f32.mrb[0].mxu0
    %v4108 = vpop.f32.mrb[0].mxu0
    %4109 = vdwg.mxu0
    %v4110 = vmax.f32 %v4104, 0.0
    %v4111 = vmax.f32 %v4106, 0.0
    %v4112 = vpack.c.bf16 %v4110, %v4110
    %v4113 = vpack.c.bf16 %v4111, %v4111
    %v4114 = vld [vmem:[#allocation7] sm:$0xff]
    %v4115 = vld [vmem:[#allocation7 + $0x8] sm:$0xff]
    %v4116 = vld [vmem:[#allocation7 + $0x10] sm:$0xff]
    %v4117 = vld [vmem:[#allocation7 + $0x18] sm:$0xff]
    %v4118 = vld [vmem:[#allocation7 + $0x20] sm:$0xff]
    %v4119 = vld [vmem:[#allocation7 + $0x28] sm:$0xff]
    %v4120 = vld [vmem:[#allocation7 + $0x30] sm:$0xff]
    %v4121 = vld [vmem:[#allocation7 + $0x38] sm:$0xff]
    %v4122 = vld [vmem:[#allocation7 + $0x40] sm:$0xff]
    %v4123 = vld [vmem:[#allocation7 + $0x48] sm:$0xff]
    %v4124 = vld [vmem:[#allocation7 + $0x50] sm:$0xff]
    %v4125 = vld [vmem:[#allocation7 + $0x58] sm:$0xff]
    %v4126 = vld [vmem:[#allocation7 + $0x60] sm:$0xff]
    %v4127 = vld [vmem:[#allocation7 + $0x68] sm:$0xff]
    %v4128 = vld [vmem:[#allocation7 + $0x70] sm:$0xff]
    %v4129 = vld [vmem:[#allocation7 + $0x78] sm:$0xff]
    %v4130 = vld [vmem:[#allocation7 + $0x80] sm:$0xff]
    %v4131 = vld [vmem:[#allocation7 + $0x88] sm:$0xff]
    %v4132 = vld [vmem:[#allocation7 + $0x90] sm:$0xff]
    %v4133 = vld [vmem:[#allocation7 + $0x98] sm:$0xff]
    %v4134 = vld [vmem:[#allocation7 + $0xa0] sm:$0xff]
    %v4135 = vld [vmem:[#allocation7 + $0xa8] sm:$0xff]
    %v4136 = vld [vmem:[#allocation7 + $0xb0] sm:$0xff]
    %v4137 = vld [vmem:[#allocation7 + $0xb8] sm:$0xff]
    %v4138 = vld [vmem:[#allocation7 + $0xc0] sm:$0xff]
    %v4139 = vld [vmem:[#allocation7 + $0xc8] sm:$0xff]
    %v4140 = vld [vmem:[#allocation7 + $0xd0] sm:$0xff]
    %v4141 = vld [vmem:[#allocation7 + $0xd8] sm:$0xff]
    %v4142 = vld [vmem:[#allocation7 + $0xe0] sm:$0xff]
    %v4143 = vld [vmem:[#allocation7 + $0xe8] sm:$0xff]
    %v4144 = vld [vmem:[#allocation7 + $0xf0] sm:$0xff]
    %v4145 = vld [vmem:[#allocation7 + $0xf8] sm:$0xff]
    %v4146 = vld [vmem:[#allocation8] sm:$0x3]
    %v4148 = vlaneseq
    %v4149 = vshrl.u32 %v4148, 7
    %v4150 = vsub.s32 0, %v4149
    %v4151 = vrot.slane %v4146, %v4150
    %v4152 = vlaneseq
    %v4153 = vshrl.u32 %v4152, 7
    %v4154 = vsub.s32 1, %v4153
    %v4155 = vrot.slane %v4146, %v4154
    %v4190 = vunpack.c.l.b16 %v4114
    %v4191 = vunpack.c.h.b16 %v4114
    %v4192 = vunpack.c.l.b16 %v4115
    %v4193 = vunpack.c.h.b16 %v4115
    %v4194 = vunpack.c.l.b16 %v4116
    %v4195 = vunpack.c.h.b16 %v4116
    %v4196 = vunpack.c.l.b16 %v4117
    %v4197 = vunpack.c.h.b16 %v4117
    %v4198 = vunpack.c.l.b16 %v4118
    %v4199 = vunpack.c.h.b16 %v4118
    %v4200 = vunpack.c.l.b16 %v4119
    %v4201 = vunpack.c.h.b16 %v4119
    %v4202 = vunpack.c.l.b16 %v4120
    %v4203 = vunpack.c.h.b16 %v4120
    %v4204 = vunpack.c.l.b16 %v4121
    %v4205 = vunpack.c.h.b16 %v4121
    %v4206 = vunpack.c.l.b16 %v4122
    %v4207 = vunpack.c.h.b16 %v4122
    %v4208 = vunpack.c.l.b16 %v4123
    %v4209 = vunpack.c.h.b16 %v4123
    %v4210 = vunpack.c.l.b16 %v4124
    %v4211 = vunpack.c.h.b16 %v4124
    %v4212 = vunpack.c.l.b16 %v4125
    %v4213 = vunpack.c.h.b16 %v4125
    %v4214 = vunpack.c.l.b16 %v4126
    %v4215 = vunpack.c.h.b16 %v4126
    %v4216 = vunpack.c.l.b16 %v4127
    %v4217 = vunpack.c.h.b16 %v4127
    %v4218 = vunpack.c.l.b16 %v4128
    %v4219 = vunpack.c.h.b16 %v4128
    %v4220 = vunpack.c.l.b16 %v4129
    %v4221 = vunpack.c.h.b16 %v4129
    %v4222 = vunpack.c.l.b16 %v4130
    %v4223 = vunpack.c.h.b16 %v4130
    %v4224 = vunpack.c.l.b16 %v4131
    %v4225 = vunpack.c.h.b16 %v4131
    %v4226 = vunpack.c.l.b16 %v4132
    %v4227 = vunpack.c.h.b16 %v4132
    %v4228 = vunpack.c.l.b16 %v4133
    %v4229 = vunpack.c.h.b16 %v4133
    %v4230 = vunpack.c.l.b16 %v4134
    %v4231 = vunpack.c.h.b16 %v4134
    %v4232 = vunpack.c.l.b16 %v4135
    %v4233 = vunpack.c.h.b16 %v4135
    %v4234 = vunpack.c.l.b16 %v4136
    %v4235 = vunpack.c.h.b16 %v4136
    %v4236 = vunpack.c.l.b16 %v4137
    %v4237 = vunpack.c.h.b16 %v4137
    %v4238 = vunpack.c.l.b16 %v4138
    %v4239 = vunpack.c.h.b16 %v4138
    %v4240 = vunpack.c.l.b16 %v4139
    %v4241 = vunpack.c.h.b16 %v4139
    %v4242 = vunpack.c.l.b16 %v4140
    %v4243 = vunpack.c.h.b16 %v4140
    %v4244 = vunpack.c.l.b16 %v4141
    %v4245 = vunpack.c.h.b16 %v4141
    %v4246 = vunpack.c.l.b16 %v4142
    %v4247 = vunpack.c.h.b16 %v4142
    %v4248 = vunpack.c.l.b16 %v4143
    %v4249 = vunpack.c.h.b16 %v4143
    %v4250 = vunpack.c.l.b16 %v4144
    %v4251 = vunpack.c.h.b16 %v4144
    %v4252 = vunpack.c.l.b16 %v4145
    %v4253 = vunpack.c.h.b16 %v4145
    %v4254 = vpack.c.b16 %v4192, %v4190
    %v4255 = vpack.c.b16 %v4193, %v4191
    %v4256 = vpack.c.b16 %v4196, %v4194
    %v4257 = vpack.c.b16 %v4197, %v4195
    %v4258 = vpack.c.b16 %v4200, %v4198
    %v4259 = vpack.c.b16 %v4201, %v4199
    %v4260 = vpack.c.b16 %v4204, %v4202
    %v4261 = vpack.c.b16 %v4205, %v4203
    %v4262 = vpack.c.b16 %v4208, %v4206
    %v4263 = vpack.c.b16 %v4209, %v4207
    %v4264 = vpack.c.b16 %v4212, %v4210
    %v4265 = vpack.c.b16 %v4213, %v4211
    %v4266 = vpack.c.b16 %v4216, %v4214
    %v4267 = vpack.c.b16 %v4217, %v4215
    %v4268 = vpack.c.b16 %v4220, %v4218
    %v4269 = vpack.c.b16 %v4221, %v4219
    %v4270 = vpack.c.b16 %v4224, %v4222
    %v4271 = vpack.c.b16 %v4225, %v4223
    %v4272 = vpack.c.b16 %v4228, %v4226
    %v4273 = vpack.c.b16 %v4229, %v4227
    %v4274 = vpack.c.b16 %v4232, %v4230
    %v4275 = vpack.c.b16 %v4233, %v4231
    %v4276 = vpack.c.b16 %v4236, %v4234
    %v4277 = vpack.c.b16 %v4237, %v4235
    %v4278 = vpack.c.b16 %v4240, %v4238
    %v4279 = vpack.c.b16 %v4241, %v4239
    %v4280 = vpack.c.b16 %v4244, %v4242
    %v4281 = vpack.c.b16 %v4245, %v4243
    %v4282 = vpack.c.b16 %v4248, %v4246
    %v4283 = vpack.c.b16 %v4249, %v4247
    %v4284 = vpack.c.b16 %v4252, %v4250
    %v4285 = vpack.c.b16 %v4253, %v4251
    %4318 = vmatprep.subr.bf16.mxu0 %v4255
    %4319 = vmatpush1.bf16.msra.mxu0 %v4254
    %4320 = vmatprep.subr.bf16.mxu0 %v4257
    %4321 = vmatpush1.bf16.msra.mxu0 %v4256
    %4322 = vmatprep.subr.bf16.mxu0 %v4259
    %4323 = vmatpush1.bf16.msra.mxu0 %v4258
    %4324 = vmatprep.subr.bf16.mxu0 %v4261
    %4325 = vmatpush1.bf16.msra.mxu0 %v4260
    %4326 = vmatprep.subr.bf16.mxu0 %v4263
    %4327 = vmatpush1.bf16.msra.mxu0 %v4262
    %4328 = vmatprep.subr.bf16.mxu0 %v4265
    %4329 = vmatpush1.bf16.msra.mxu0 %v4264
    %4330 = vmatprep.subr.bf16.mxu0 %v4267
    %4331 = vmatpush1.bf16.msra.mxu0 %v4266
    %4332 = vmatprep.subr.bf16.mxu0 %v4269
    %4333 = vmatpush1.bf16.msra.mxu0 %v4268
    %4334 = vmatprep.subr.bf16.mxu0 %v4271
    %4335 = vmatpush1.bf16.msra.mxu0 %v4270
    %4336 = vmatprep.subr.bf16.mxu0 %v4273
    %4337 = vmatpush1.bf16.msra.mxu0 %v4272
    %4338 = vmatprep.subr.bf16.mxu0 %v4275
    %4339 = vmatpush1.bf16.msra.mxu0 %v4274
    %4340 = vmatprep.subr.bf16.mxu0 %v4277
    %4341 = vmatpush1.bf16.msra.mxu0 %v4276
    %4342 = vmatprep.subr.bf16.mxu0 %v4279
    %4343 = vmatpush1.bf16.msra.mxu0 %v4278
    %4344 = vmatprep.subr.bf16.mxu0 %v4281
    %4345 = vmatpush1.bf16.msra.mxu0 %v4280
    %4346 = vmatprep.subr.bf16.mxu0 %v4283
    %4347 = vmatpush1.bf16.msra.mxu0 %v4282
    %4348 = vmatprep.subr.bf16.mxu0 %v4285
    %4349 = vmatpush1.bf16.msra.mxu0 %v4284
    %4350 = vmatprep.mubr.bf16.mxu0 %v4113
    %4351 = vmatmul.mubr.bf16.gmra.mrb[0].mxu0 %v4112
    %v4352 = vpop.f32.mrb[0].mxu0
    %v4353 = vadd.f32 %v4151, %v4352
    %v4354 = vpop.f32.mrb[0].mxu0
    %v4355 = vadd.f32 %v4155, %v4354
    %v4356 = vpop.f32.mrb[0].mxu0
    %v4357 = vpop.f32.mrb[0].mxu0
    %4358 = vdwg.mxu0
    %v4359 = vmax.f32 %v4353, 0.0
    %v4360 = vmax.f32 %v4355, 0.0
    %v4361 = vpack.c.bf16 %v4359, %v4359
    %v4362 = vpack.c.bf16 %v4360, %v4360
    %v4363 = vld [vmem:[#allocation10] sm:$0xff]
    %v4364 = vld [vmem:[#allocation10 + $0x8] sm:$0xff]
    %v4365 = vld [vmem:[#allocation10 + $0x10] sm:$0xff]
    %v4366 = vld [vmem:[#allocation10 + $0x18] sm:$0xff]
    %v4367 = vld [vmem:[#allocation10 + $0x20] sm:$0xff]
    %v4368 = vld [vmem:[#allocation10 + $0x28] sm:$0xff]
    %v4369 = vld [vmem:[#allocation10 + $0x30] sm:$0xff]
    %v4370 = vld [vmem:[#allocation10 + $0x38] sm:$0xff]
    %v4371 = vld [vmem:[#allocation10 + $0x40] sm:$0xff]
    %v4372 = vld [vmem:[#allocation10 + $0x48] sm:$0xff]
    %v4373 = vld [vmem:[#allocation10 + $0x50] sm:$0xff]
    %v4374 = vld [vmem:[#allocation10 + $0x58] sm:$0xff]
    %v4375 = vld [vmem:[#allocation10 + $0x60] sm:$0xff]
    %v4376 = vld [vmem:[#allocation10 + $0x68] sm:$0xff]
    %v4377 = vld [vmem:[#allocation10 + $0x70] sm:$0xff]
    %v4378 = vld [vmem:[#allocation10 + $0x78] sm:$0xff]
    %v4379 = vld [vmem:[#allocation10 + $0x80] sm:$0xff]
    %v4380 = vld [vmem:[#allocation10 + $0x88] sm:$0xff]
    %v4381 = vld [vmem:[#allocation10 + $0x90] sm:$0xff]
    %v4382 = vld [vmem:[#allocation10 + $0x98] sm:$0xff]
    %v4383 = vld [vmem:[#allocation10 + $0xa0] sm:$0xff]
    %v4384 = vld [vmem:[#allocation10 + $0xa8] sm:$0xff]
    %v4385 = vld [vmem:[#allocation10 + $0xb0] sm:$0xff]
    %v4386 = vld [vmem:[#allocation10 + $0xb8] sm:$0xff]
    %v4387 = vld [vmem:[#allocation10 + $0xc0] sm:$0xff]
    %v4388 = vld [vmem:[#allocation10 + $0xc8] sm:$0xff]
    %v4389 = vld [vmem:[#allocation10 + $0xd0] sm:$0xff]
    %v4390 = vld [vmem:[#allocation10 + $0xd8] sm:$0xff]
    %v4391 = vld [vmem:[#allocation10 + $0xe0] sm:$0xff]
    %v4392 = vld [vmem:[#allocation10 + $0xe8] sm:$0xff]
    %v4393 = vld [vmem:[#allocation10 + $0xf0] sm:$0xff]
    %v4394 = vld [vmem:[#allocation10 + $0xf8] sm:$0xff]
    %v4395 = vld [vmem:[#allocation11] sm:$0x3]
    %v4397 = vlaneseq
    %v4398 = vshrl.u32 %v4397, 7
    %v4399 = vsub.s32 0, %v4398
    %v4400 = vrot.slane %v4395, %v4399
    %v4401 = vlaneseq
    %v4402 = vshrl.u32 %v4401, 7
    %v4403 = vsub.s32 1, %v4402
    %v4404 = vrot.slane %v4395, %v4403
    %v4439 = vunpack.c.l.b16 %v4363
    %v4440 = vunpack.c.h.b16 %v4363
    %v4441 = vunpack.c.l.b16 %v4364
    %v4442 = vunpack.c.h.b16 %v4364
    %v4443 = vunpack.c.l.b16 %v4365
    %v4444 = vunpack.c.h.b16 %v4365
    %v4445 = vunpack.c.l.b16 %v4366
    %v4446 = vunpack.c.h.b16 %v4366
    %v4447 = vunpack.c.l.b16 %v4367
    %v4448 = vunpack.c.h.b16 %v4367
    %v4449 = vunpack.c.l.b16 %v4368
    %v4450 = vunpack.c.h.b16 %v4368
    %v4451 = vunpack.c.l.b16 %v4369
    %v4452 = vunpack.c.h.b16 %v4369
    %v4453 = vunpack.c.l.b16 %v4370
    %v4454 = vunpack.c.h.b16 %v4370
    %v4455 = vunpack.c.l.b16 %v4371
    %v4456 = vunpack.c.h.b16 %v4371
    %v4457 = vunpack.c.l.b16 %v4372
    %v4458 = vunpack.c.h.b16 %v4372
    %v4459 = vunpack.c.l.b16 %v4373
    %v4460 = vunpack.c.h.b16 %v4373
    %v4461 = vunpack.c.l.b16 %v4374
    %v4462 = vunpack.c.h.b16 %v4374
    %v4463 = vunpack.c.l.b16 %v4375
    %v4464 = vunpack.c.h.b16 %v4375
    %v4465 = vunpack.c.l.b16 %v4376
    %v4466 = vunpack.c.h.b16 %v4376
    %v4467 = vunpack.c.l.b16 %v4377
    %v4468 = vunpack.c.h.b16 %v4377
    %v4469 = vunpack.c.l.b16 %v4378
    %v4470 = vunpack.c.h.b16 %v4378
    %v4471 = vunpack.c.l.b16 %v4379
    %v4472 = vunpack.c.h.b16 %v4379
    %v4473 = vunpack.c.l.b16 %v4380
    %v4474 = vunpack.c.h.b16 %v4380
    %v4475 = vunpack.c.l.b16 %v4381
    %v4476 = vunpack.c.h.b16 %v4381
    %v4477 = vunpack.c.l.b16 %v4382
    %v4478 = vunpack.c.h.b16 %v4382
    %v4479 = vunpack.c.l.b16 %v4383
    %v4480 = vunpack.c.h.b16 %v4383
    %v4481 = vunpack.c.l.b16 %v4384
    %v4482 = vunpack.c.h.b16 %v4384
    %v4483 = vunpack.c.l.b16 %v4385
    %v4484 = vunpack.c.h.b16 %v4385
    %v4485 = vunpack.c.l.b16 %v4386
    %v4486 = vunpack.c.h.b16 %v4386
    %v4487 = vunpack.c.l.b16 %v4387
    %v4488 = vunpack.c.h.b16 %v4387
    %v4489 = vunpack.c.l.b16 %v4388
    %v4490 = vunpack.c.h.b16 %v4388
    %v4491 = vunpack.c.l.b16 %v4389
    %v4492 = vunpack.c.h.b16 %v4389
    %v4493 = vunpack.c.l.b16 %v4390
    %v4494 = vunpack.c.h.b16 %v4390
    %v4495 = vunpack.c.l.b16 %v4391
    %v4496 = vunpack.c.h.b16 %v4391
    %v4497 = vunpack.c.l.b16 %v4392
    %v4498 = vunpack.c.h.b16 %v4392
    %v4499 = vunpack.c.l.b16 %v4393
    %v4500 = vunpack.c.h.b16 %v4393
    %v4501 = vunpack.c.l.b16 %v4394
    %v4502 = vunpack.c.h.b16 %v4394
    %v4503 = vpack.c.b16 %v4441, %v4439
    %v4504 = vpack.c.b16 %v4442, %v4440
    %v4505 = vpack.c.b16 %v4445, %v4443
    %v4506 = vpack.c.b16 %v4446, %v4444
    %v4507 = vpack.c.b16 %v4449, %v4447
    %v4508 = vpack.c.b16 %v4450, %v4448
    %v4509 = vpack.c.b16 %v4453, %v4451
    %v4510 = vpack.c.b16 %v4454, %v4452
    %v4511 = vpack.c.b16 %v4457, %v4455
    %v4512 = vpack.c.b16 %v4458, %v4456
    %v4513 = vpack.c.b16 %v4461, %v4459
    %v4514 = vpack.c.b16 %v4462, %v4460
    %v4515 = vpack.c.b16 %v4465, %v4463
    %v4516 = vpack.c.b16 %v4466, %v4464
    %v4517 = vpack.c.b16 %v4469, %v4467
    %v4518 = vpack.c.b16 %v4470, %v4468
    %v4519 = vpack.c.b16 %v4473, %v4471
    %v4520 = vpack.c.b16 %v4474, %v4472
    %v4521 = vpack.c.b16 %v4477, %v4475
    %v4522 = vpack.c.b16 %v4478, %v4476
    %v4523 = vpack.c.b16 %v4481, %v4479
    %v4524 = vpack.c.b16 %v4482, %v4480
    %v4525 = vpack.c.b16 %v4485, %v4483
    %v4526 = vpack.c.b16 %v4486, %v4484
    %v4527 = vpack.c.b16 %v4489, %v4487
    %v4528 = vpack.c.b16 %v4490, %v4488
    %v4529 = vpack.c.b16 %v4493, %v4491
    %v4530 = vpack.c.b16 %v4494, %v4492
    %v4531 = vpack.c.b16 %v4497, %v4495
    %v4532 = vpack.c.b16 %v4498, %v4496
    %v4533 = vpack.c.b16 %v4501, %v4499
    %v4534 = vpack.c.b16 %v4502, %v4500
    %4567 = vmatprep.subr.bf16.mxu0 %v4504
    %4568 = vmatpush1.bf16.msra.mxu0 %v4503
    %4569 = vmatprep.subr.bf16.mxu0 %v4506
    %4570 = vmatpush1.bf16.msra.mxu0 %v4505
    %4571 = vmatprep.subr.bf16.mxu0 %v4508
    %4572 = vmatpush1.bf16.msra.mxu0 %v4507
    %4573 = vmatprep.subr.bf16.mxu0 %v4510
    %4574 = vmatpush1.bf16.msra.mxu0 %v4509
    %4575 = vmatprep.subr.bf16.mxu0 %v4512
    %4576 = vmatpush1.bf16.msra.mxu0 %v4511
    %4577 = vmatprep.subr.bf16.mxu0 %v4514
    %4578 = vmatpush1.bf16.msra.mxu0 %v4513
    %4579 = vmatprep.subr.bf16.mxu0 %v4516
    %4580 = vmatpush1.bf16.msra.mxu0 %v4515
    %4581 = vmatprep.subr.bf16.mxu0 %v4518
    %4582 = vmatpush1.bf16.msra.mxu0 %v4517
    %4583 = vmatprep.subr.bf16.mxu0 %v4520
    %4584 = vmatpush1.bf16.msra.mxu0 %v4519
    %4585 = vmatprep.subr.bf16.mxu0 %v4522
    %4586 = vmatpush1.bf16.msra.mxu0 %v4521
    %4587 = vmatprep.subr.bf16.mxu0 %v4524
    %4588 = vmatpush1.bf16.msra.mxu0 %v4523
    %4589 = vmatprep.subr.bf16.mxu0 %v4526
    %4590 = vmatpush1.bf16.msra.mxu0 %v4525
    %4591 = vmatprep.subr.bf16.mxu0 %v4528
    %4592 = vmatpush1.bf16.msra.mxu0 %v4527
    %4593 = vmatprep.subr.bf16.mxu0 %v4530
    %4594 = vmatpush1.bf16.msra.mxu0 %v4529
    %4595 = vmatprep.subr.bf16.mxu0 %v4532
    %4596 = vmatpush1.bf16.msra.mxu0 %v4531
    %4597 = vmatprep.subr.bf16.mxu0 %v4534
    %4598 = vmatpush1.bf16.msra.mxu0 %v4533
    %4599 = vmatprep.mubr.bf16.mxu0 %v4362
    %4600 = vmatmul.mubr.bf16.gmra.mrb[0].mxu0 %v4361
    %v4601 = vpop.f32.mrb[0].mxu0
    %v4602 = vadd.f32 %v4400, %v4601
    %v4603 = vpop.f32.mrb[0].mxu0
    %v4604 = vadd.f32 %v4404, %v4603
    %v4605 = vpop.f32.mrb[0].mxu0
    %v4606 = vpop.f32.mrb[0].mxu0
    %4607 = vdwg.mxu0
    %v4608 = vmax.f32 %v4602, 0.0
    %v4609 = vmax.f32 %v4604, 0.0
    %v4610 = vpack.c.bf16 %v4608, %v4608
    %v4611 = vpack.c.bf16 %v4609, %v4609
    %v4612 = vld [vmem:[#allocation13] sm:$0xff]
    %v4613 = vld [vmem:[#allocation13 + $0x8] sm:$0xff]
    %v4614 = vld [vmem:[#allocation13 + $0x10] sm:$0xff]
    %v4615 = vld [vmem:[#allocation13 + $0x18] sm:$0xff]
    %v4616 = vld [vmem:[#allocation13 + $0x20] sm:$0xff]
    %v4617 = vld [vmem:[#allocation13 + $0x28] sm:$0xff]
    %v4618 = vld [vmem:[#allocation13 + $0x30] sm:$0xff]
    %v4619 = vld [vmem:[#allocation13 + $0x38] sm:$0xff]
    %v4620 = vld [vmem:[#allocation13 + $0x40] sm:$0xff]
    %v4621 = vld [vmem:[#allocation13 + $0x48] sm:$0xff]
    %v4622 = vld [vmem:[#allocation13 + $0x50] sm:$0xff]
    %v4623 = vld [vmem:[#allocation13 + $0x58] sm:$0xff]
    %v4624 = vld [vmem:[#allocation13 + $0x60] sm:$0xff]
    %v4625 = vld [vmem:[#allocation13 + $0x68] sm:$0xff]
    %v4626 = vld [vmem:[#allocation13 + $0x70] sm:$0xff]
    %v4627 = vld [vmem:[#allocation13 + $0x78] sm:$0xff]
    %v4628 = vld [vmem:[#allocation13 + $0x80] sm:$0xff]
    %v4629 = vld [vmem:[#allocation13 + $0x88] sm:$0xff]
    %v4630 = vld [vmem:[#allocation13 + $0x90] sm:$0xff]
    %v4631 = vld [vmem:[#allocation13 + $0x98] sm:$0xff]
    %v4632 = vld [vmem:[#allocation13 + $0xa0] sm:$0xff]
    %v4633 = vld [vmem:[#allocation13 + $0xa8] sm:$0xff]
    %v4634 = vld [vmem:[#allocation13 + $0xb0] sm:$0xff]
    %v4635 = vld [vmem:[#allocation13 + $0xb8] sm:$0xff]
    %v4636 = vld [vmem:[#allocation13 + $0xc0] sm:$0xff]
    %v4637 = vld [vmem:[#allocation13 + $0xc8] sm:$0xff]
    %v4638 = vld [vmem:[#allocation13 + $0xd0] sm:$0xff]
    %v4639 = vld [vmem:[#allocation13 + $0xd8] sm:$0xff]
    %v4640 = vld [vmem:[#allocation13 + $0xe0] sm:$0xff]
    %v4641 = vld [vmem:[#allocation13 + $0xe8] sm:$0xff]
    %v4642 = vld [vmem:[#allocation13 + $0xf0] sm:$0xff]
    %v4643 = vld [vmem:[#allocation13 + $0xf8] sm:$0xff]
    %v4644 = vld [vmem:[#allocation14] sm:$0x3]
    %v4646 = vlaneseq
    %v4647 = vshrl.u32 %v4646, 7
    %v4648 = vsub.s32 0, %v4647
    %v4649 = vrot.slane %v4644, %v4648
    %v4650 = vlaneseq
    %v4651 = vshrl.u32 %v4650, 7
    %v4652 = vsub.s32 1, %v4651
    %v4653 = vrot.slane %v4644, %v4652
    %v4688 = vunpack.c.l.b16 %v4612
    %v4689 = vunpack.c.h.b16 %v4612
    %v4690 = vunpack.c.l.b16 %v4613
    %v4691 = vunpack.c.h.b16 %v4613
    %v4692 = vunpack.c.l.b16 %v4614
    %v4693 = vunpack.c.h.b16 %v4614
    %v4694 = vunpack.c.l.b16 %v4615
    %v4695 = vunpack.c.h.b16 %v4615
    %v4696 = vunpack.c.l.b16 %v4616
    %v4697 = vunpack.c.h.b16 %v4616
    %v4698 = vunpack.c.l.b16 %v4617
    %v4699 = vunpack.c.h.b16 %v4617
    %v4700 = vunpack.c.l.b16 %v4618
    %v4701 = vunpack.c.h.b16 %v4618
    %v4702 = vunpack.c.l.b16 %v4619
    %v4703 = vunpack.c.h.b16 %v4619
    %v4704 = vunpack.c.l.b16 %v4620
    %v4705 = vunpack.c.h.b16 %v4620
    %v4706 = vunpack.c.l.b16 %v4621
    %v4707 = vunpack.c.h.b16 %v4621
    %v4708 = vunpack.c.l.b16 %v4622
    %v4709 = vunpack.c.h.b16 %v4622
    %v4710 = vunpack.c.l.b16 %v4623
    %v4711 = vunpack.c.h.b16 %v4623
    %v4712 = vunpack.c.l.b16 %v4624
    %v4713 = vunpack.c.h.b16 %v4624
    %v4714 = vunpack.c.l.b16 %v4625
    %v4715 = vunpack.c.h.b16 %v4625
    %v4716 = vunpack.c.l.b16 %v4626
    %v4717 = vunpack.c.h.b16 %v4626
    %v4718 = vunpack.c.l.b16 %v4627
    %v4719 = vunpack.c.h.b16 %v4627
    %v4720 = vunpack.c.l.b16 %v4628
    %v4721 = vunpack.c.h.b16 %v4628
    %v4722 = vunpack.c.l.b16 %v4629
    %v4723 = vunpack.c.h.b16 %v4629
    %v4724 = vunpack.c.l.b16 %v4630
    %v4725 = vunpack.c.h.b16 %v4630
    %v4726 = vunpack.c.l.b16 %v4631
    %v4727 = vunpack.c.h.b16 %v4631
    %v4728 = vunpack.c.l.b16 %v4632
    %v4729 = vunpack.c.h.b16 %v4632
    %v4730 = vunpack.c.l.b16 %v4633
    %v4731 = vunpack.c.h.b16 %v4633
    %v4732 = vunpack.c.l.b16 %v4634
    %v4733 = vunpack.c.h.b16 %v4634
    %v4734 = vunpack.c.l.b16 %v4635
    %v4735 = vunpack.c.h.b16 %v4635
    %v4736 = vunpack.c.l.b16 %v4636
    %v4737 = vunpack.c.h.b16 %v4636
    %v4738 = vunpack.c.l.b16 %v4637
    %v4739 = vunpack.c.h.b16 %v4637
    %v4740 = vunpack.c.l.b16 %v4638
    %v4741 = vunpack.c.h.b16 %v4638
    %v4742 = vunpack.c.l.b16 %v4639
    %v4743 = vunpack.c.h.b16 %v4639
    %v4744 = vunpack.c.l.b16 %v4640
    %v4745 = vunpack.c.h.b16 %v4640
    %v4746 = vunpack.c.l.b16 %v4641
    %v4747 = vunpack.c.h.b16 %v4641
    %v4748 = vunpack.c.l.b16 %v4642
    %v4749 = vunpack.c.h.b16 %v4642
    %v4750 = vunpack.c.l.b16 %v4643
    %v4751 = vunpack.c.h.b16 %v4643
    %v4752 = vpack.c.b16 %v4690, %v4688
    %v4753 = vpack.c.b16 %v4691, %v4689
    %v4754 = vpack.c.b16 %v4694, %v4692
    %v4755 = vpack.c.b16 %v4695, %v4693
    %v4756 = vpack.c.b16 %v4698, %v4696
    %v4757 = vpack.c.b16 %v4699, %v4697
    %v4758 = vpack.c.b16 %v4702, %v4700
    %v4759 = vpack.c.b16 %v4703, %v4701
    %v4760 = vpack.c.b16 %v4706, %v4704
    %v4761 = vpack.c.b16 %v4707, %v4705
    %v4762 = vpack.c.b16 %v4710, %v4708
    %v4763 = vpack.c.b16 %v4711, %v4709
    %v4764 = vpack.c.b16 %v4714, %v4712
    %v4765 = vpack.c.b16 %v4715, %v4713
    %v4766 = vpack.c.b16 %v4718, %v4716
    %v4767 = vpack.c.b16 %v4719, %v4717
    %v4768 = vpack.c.b16 %v4722, %v4720
    %v4769 = vpack.c.b16 %v4723, %v4721
    %v4770 = vpack.c.b16 %v4726, %v4724
    %v4771 = vpack.c.b16 %v4727, %v4725
    %v4772 = vpack.c.b16 %v4730, %v4728
    %v4773 = vpack.c.b16 %v4731, %v4729
    %v4774 = vpack.c.b16 %v4734, %v4732
    %v4775 = vpack.c.b16 %v4735, %v4733
    %v4776 = vpack.c.b16 %v4738, %v4736
    %v4777 = vpack.c.b16 %v4739, %v4737
    %v4778 = vpack.c.b16 %v4742, %v4740
    %v4779 = vpack.c.b16 %v4743, %v4741
    %v4780 = vpack.c.b16 %v4746, %v4744
    %v4781 = vpack.c.b16 %v4747, %v4745
    %v4782 = vpack.c.b16 %v4750, %v4748
    %v4783 = vpack.c.b16 %v4751, %v4749
    %4816 = vmatprep.subr.bf16.mxu0 %v4753
    %4817 = vmatpush1.bf16.msra.mxu0 %v4752
    %4818 = vmatprep.subr.bf16.mxu0 %v4755
    %4819 = vmatpush1.bf16.msra.mxu0 %v4754
    %4820 = vmatprep.subr.bf16.mxu0 %v4757
    %4821 = vmatpush1.bf16.msra.mxu0 %v4756
    %4822 = vmatprep.subr.bf16.mxu0 %v4759
    %4823 = vmatpush1.bf16.msra.mxu0 %v4758
    %4824 = vmatprep.subr.bf16.mxu0 %v4761
    %4825 = vmatpush1.bf16.msra.mxu0 %v4760
    %4826 = vmatprep.subr.bf16.mxu0 %v4763
    %4827 = vmatpush1.bf16.msra.mxu0 %v4762
    %4828 = vmatprep.subr.bf16.mxu0 %v4765
    %4829 = vmatpush1.bf16.msra.mxu0 %v4764
    %4830 = vmatprep.subr.bf16.mxu0 %v4767
    %4831 = vmatpush1.bf16.msra.mxu0 %v4766
    %4832 = vmatprep.subr.bf16.mxu0 %v4769
    %4833 = vmatpush1.bf16.msra.mxu0 %v4768
    %4834 = vmatprep.subr.bf16.mxu0 %v4771
    %4835 = vmatpush1.bf16.msra.mxu0 %v4770
    %4836 = vmatprep.subr.bf16.mxu0 %v4773
    %4837 = vmatpush1.bf16.msra.mxu0 %v4772
    %4838 = vmatprep.subr.bf16.mxu0 %v4775
    %4839 = vmatpush1.bf16.msra.mxu0 %v4774
    %4840 = vmatprep.subr.bf16.mxu0 %v4777
    %4841 = vmatpush1.bf16.msra.mxu0 %v4776
    %4842 = vmatprep.subr.bf16.mxu0 %v4779
    %4843 = vmatpush1.bf16.msra.mxu0 %v4778
    %4844 = vmatprep.subr.bf16.mxu0 %v4781
    %4845 = vmatpush1.bf16.msra.mxu0 %v4780
    %4846 = vmatprep.subr.bf16.mxu0 %v4783
    %4847 = vmatpush1.bf16.msra.mxu0 %v4782
    %4848 = vmatprep.mubr.bf16.mxu0 %v4611
    %4849 = vmatmul.mubr.bf16.gmra.mrb[0].mxu0 %v4610
    %v4850 = vpop.f32.mrb[0].mxu0
    %v4851 = vadd.f32 %v4649, %v4850
    %v4852 = vpop.f32.mrb[0].mxu0
    %v4853 = vadd.f32 %v4653, %v4852
    %v4854 = vpop.f32.mrb[0].mxu0
    %v4855 = vpop.f32.mrb[0].mxu0
    %4856 = vdwg.mxu0
    %v4857 = vmax.f32 %v4851, 0.0
    %v4858 = vmax.f32 %v4853, 0.0
    %v4861 = vcombine.low %v4857, %v4858
    %v4863 = vunpack.c.l.s4 1983009808
    %v4864 = vunpack.c.0.s8 %v4863
    %v4865 = vlaneseq
    %v4866 = vshrl.u32 %v4865, 7
    %v4867 = vsub.s32 %v4864, %v4866
    %v4868 = vrot.slane %v4861, %v4867
    %4870 = vst [vmem:[#allocation16] sm:$0xf] %v4868
    // Predicated region
    $region70: #{trunk_forward.1} parent=1 // pred_check
      _
    $region71: #{trunk_forward.1} parent=1 // pred_check_branch
      %4872 = sbr.rel (0) target = $region73
    $region72: #{trunk_forward.1} parent=1 // pred_region
      %s4874 = ssub.s32 64, 64
      %4875 = vsyncadd [#allocation4], %s4874
      %s4877 = sshll.u32 [#allocation16], 4
      %s4878 = int_to_ptr.vmem [resolvable:$true] %s4877
      %4880 = dma.vmem_to_hbm [thread:$0]  %s4878, 64, %s9, [#allocation4]
    $region73: #{trunk_forward.1} parent=1 // pred_fallthru
      _
    // Predicated region
    $region74: #{trunk_forward.1} parent=1 // pred_check
      _
    $region75: #{trunk_forward.1} parent=1 // pred_check_branch
      %4882 = sbr.rel (0) target = $region77
    $region76: #{trunk_forward.1} parent=1 // pred_region
      %4883 = dma.done [#allocation4], 64
    $region77: #{trunk_forward.1} parent=1 // pred_fallthru
      _
    %4884 = vsyncpa [#allocation3], 1
    %4885 = vsyncpa [#allocation6], 1
    %4886 = vsyncpa [#allocation9], 1
    %4887 = vsyncpa [#allocation12], 1
    %4888 = vsyncpa [#allocation15], 1
    %4889 = vsyncpa [#allocation4], 1

</llo_original>
